<compile_context>
chip_gen: v6e
topology: v6e:2x2x1
jax: 0.10.0
libtpu: 0.0.40
codegen_flags: <defaults>
</compile_context>

<pallas_src>
import jax
import jax.numpy as jnp
from jax.experimental import pallas as pl
from jax.experimental.pallas import tpu as pltpu

EPS = 1e-5  # nn.LayerNorm default


# ---------------------------------------------------------------------------
# In-kernel helpers
# ---------------------------------------------------------------------------
def _erf(x):
    # Abramowitz & Stegun 7.1.26 polynomial erf (|err| <= 1.5e-7, f32-accurate).
    a1, a2, a3, a4, a5 = (0.254829592, -0.284496736, 1.421413741,
                          -1.453152027, 1.061405429)
    p = 0.3275911
    ax = jnp.abs(x)
    t = 1.0 / (1.0 + p * ax)
    poly = ((((a5 * t + a4) * t + a3) * t + a2) * t + a1) * t
    y = 1.0 - poly * jnp.exp(-ax * ax)
    return jnp.where(x < 0, -y, y)


def _gelu_exact(x):
    # torch.nn.GELU(approximate='none'): 0.5 * x * (1 + erf(x/sqrt(2)))
    return 0.5 * x * (1.0 + _erf(x * 0.7071067811865476))


def _layernorm(x, w, b):
    mean = jnp.mean(x, axis=-1, keepdims=True)
    var = jnp.mean(jnp.square(x - mean), axis=-1, keepdims=True)
    return (x - mean) * jax.lax.rsqrt(var + EPS) * w + b


# ---------------------------------------------------------------------------
# Tile-size helpers
# ---------------------------------------------------------------------------
def _pick_tile_m(M, pref=512):
    """Largest multiple-of-8 divisor of M that is <= pref."""
    assert M % 8 == 0, f"M={M} must be a multiple of 8"
    best, d = 8, 8
    lim = min(M, pref)
    while d <= lim:
        if M % d == 0:
            best = d
        d += 8
    return best


def _pick_tile_h(H2, W2, hidden, pad, budget_bytes=6 << 20):
    """Largest divisor of H2 (>= pad rows unless it's the whole image) whose
    f32 hidden activation (tile_h*W2 x hidden) stays under budget."""
    divs = [d for d in range(H2, 0, -1)
            if H2 % d == 0 and (d >= pad or d == H2)]
    for d in divs:
        if d * W2 * hidden * 4 <= budget_bytes:
            return d
    return divs[-1]


# ---------------------------------------------------------------------------
# Kernel 1: fused downsample = per-pixel LayerNorm2d + 2x2 stride-2 conv + bias
#   patches: (4, M, Cin)   -- k = kh*2 + kw sub-pixel of each 2x2 patch
#   weight : (4, Cin, Cout) -- w[k, ci, co] == torch_w[co, ci, kh, kw]
# ---------------------------------------------------------------------------
def _ds_kernel(p_ref, w_ref, b_ref, lnw_ref, lnb_ref, o_ref):
    x = p_ref[...].astype(jnp.float32)                       # (4, tm, Cin)
    xn = _layernorm(x, lnw_ref[...], lnb_ref[...])
    w = w_ref[...].astype(jnp.float32)                        # (4, Cin, Cout)
    acc = jnp.dot(xn[0], w[0], preferred_element_type=jnp.float32)
    for k in range(1, 4):
        acc = acc + jnp.dot(xn[k], w[k], preferred_element_type=jnp.float32)
    o_ref[...] = (acc + b_ref[...]).astype(o_ref.dtype)


def downsample(patches, w, b, lnw, lnb, pref_tile_m=512):
    _, M, Cin = patches.shape
    Cout = w.shape[-1]
    tm = _pick_tile_m(M, pref_tile_m)
    return pl.pallas_call(
        _ds_kernel,
        out_shape=jax.ShapeDtypeStruct((M, Cout), patches.dtype),
        grid=(M // tm,),
        in_specs=[
            pl.BlockSpec((4, tm, Cin), lambda i: (0, i, 0)),
            pl.BlockSpec((4, Cin, Cout), lambda i: (0, 0, 0)),
            pl.BlockSpec((1, Cout), lambda i: (0, 0)),
            pl.BlockSpec((1, Cin), lambda i: (0, 0)),
            pl.BlockSpec((1, Cin), lambda i: (0, 0)),
        ],
        out_specs=pl.BlockSpec((tm, Cout), lambda i: (i, 0)),
        compiler_params=pltpu.CompilerParams(
            dimension_semantics=("parallel",),
            vmem_limit_bytes=32 * 1024 * 1024),
    )(patches, w, b.reshape(1, Cout), lnw.reshape(1, Cin), lnb.reshape(1, Cin))


# ---------------------------------------------------------------------------
# Kernel 2: fused ConvNeXt block
#   7x7 depthwise conv (zero-halo built in a VMEM scratch from neighbor row
#   tiles) -> LayerNorm -> Linear -> GELU -> Linear -> gamma -> + shortcut
# ---------------------------------------------------------------------------
def _make_block_kernel(tile_h, W2, C, K, P):
    def kernel(xp_ref, xc_ref, xn_ref, dww_ref, dwb_ref, lnw_ref, lnb_ref,
               w1_ref, b1_ref, w2_ref, b2_ref, g_ref, o_ref, pad_ref):
        t = pl.program_id(1)
        T = pl.num_programs(1)

        # --- build zero-padded tile (halo) in VMEM scratch ------------------
        pad_ref[...] = jnp.zeros_like(pad_ref)
        xc = xc_ref[0].astype(jnp.float32)                    # (tile_h, W2, C)
        pad_ref[P:P + tile_h, P:P + W2, :] = xc

        @pl.when(t > 0)
        def _():
            pad_ref[0:P, P:P + W2, :] = (
                xp_ref[0, tile_h - P:tile_h, :, :].astype(jnp.float32))

        @pl.when(t < T - 1)
        def _():
            pad_ref[P + tile_h:2 * P + tile_h, P:P + W2, :] = (
                xn_ref[0, 0:P, :, :].astype(jnp.float32))

        # --- 7x7 depthwise conv: one W (sublane) shift per kw, reused -------
        xpad = pad_ref[...]                                   # (tile_h+2P, W2+2P, C)
        wv = dww_ref[...].astype(jnp.float32)                 # (K, K, C)
        acc = jnp.zeros((tile_h, W2, C), jnp.float32)
        for kw in range(K):
            xw = xpad[:, kw:kw + W2, :]                       # hoisted W shift
            for kh in range(K):
                acc = acc + xw[kh:kh + tile_h, :, :] * wv[kh:kh + 1, kw:kw + 1, :]
        dw = acc + dwb_ref[...]

        # --- MLP tail on rows (dwconv output never leaves VMEM) -------------
        rows = dw.reshape(tile_h * W2, C)
        xnorm = _layernorm(rows, lnw_ref[...], lnb_ref[...])
        h = jnp.dot(xnorm, w1_ref[...],
                    preferred_element_type=jnp.float32) + b1_ref[...]
        h = _gelu_exact(h)
        y = jnp.dot(h, w2_ref[...],
                    preferred_element_type=jnp.float32) + b2_ref[...]
        y = y * g_ref[...] + xc.reshape(tile_h * W2, C)
        o_ref[0] = y.reshape(tile_h, W2, C).astype(o_ref.dtype)

    return kernel


def convnext_block(x, blk):
    N, H2, W2, C = x.shape
    K = blk["dw_w"].shape[0]
    P = (K - 1) // 2
    hidden = blk["fc1_w"].shape[1]
    tile_h = _pick_tile_h(H2, W2, hidden, P)
    T = H2 // tile_h
    kernel = _make_block_kernel(tile_h, W2, C, K, P)

    x_spec = lambda n, t: (n, t, 0, 0)
    x_prev = lambda n, t: (n, jnp.maximum(t - 1, 0), 0, 0)
    x_next = lambda n, t: (n, jnp.minimum(t + 1, T - 1), 0, 0)
    c2 = lambda n, t: (0, 0)
    c3 = lambda n, t: (0, 0, 0)

    return pl.pallas_call(
        kernel,
        out_shape=jax.ShapeDtypeStruct((N, H2, W2, C), x.dtype),
        grid=(N, T),
        in_specs=[
            pl.BlockSpec((1, tile_h, W2, C), x_prev),   # halo above
            pl.BlockSpec((1, tile_h, W2, C), x_spec),   # center (also shortcut)
            pl.BlockSpec((1, tile_h, W2, C), x_next),   # halo below
            pl.BlockSpec((K, K, C), c3),
            pl.BlockSpec((1, 1, C), c3),
            pl.BlockSpec((1, C), c2),
            pl.BlockSpec((1, C), c2),
            pl.BlockSpec((C, hidden), c2),
            pl.BlockSpec((1, hidden), c2),
            pl.BlockSpec((hidden, C), c2),
            pl.BlockSpec((1, C), c2),
            pl.BlockSpec((1, C), c2),
        ],
        out_specs=pl.BlockSpec((1, tile_h, W2, C), x_spec),
        scratch_shapes=[pltpu.VMEM((tile_h + 2 * P, W2 + 2 * P, C), jnp.float32)],
        compiler_params=pltpu.CompilerParams(
            dimension_semantics=("parallel", "parallel"),
            vmem_limit_bytes=32 * 1024 * 1024),
    )(x, x, x,
      blk["dw_w"], blk["dw_b"].reshape(1, 1, C),
      blk["ln_w"].reshape(1, C), blk["ln_b"].reshape(1, C),
      blk["fc1_w"], blk["fc1_b"].reshape(1, hidden),
      blk["fc2_w"], blk["fc2_b"].reshape(1, C),
      blk["gamma"].reshape(1, C))


# ---------------------------------------------------------------------------
# Stage forward (glue in plain JAX: boundary transposes + 2x2 patch gather)
# ---------------------------------------------------------------------------
def convnext_stage_forward(x_nchw, params):
    x = jnp.transpose(x_nchw, (0, 2, 3, 1))          # NCHW -> NHWC
    N, H, W, Cin = x.shape
    assert H % 2 == 0 and W % 2 == 0
    Cout = params["ds_conv_w"].shape[-1]
    H2, W2 = H // 2, W // 2

    # --- downsample: gather 2x2/stride-2 patches, fused LN + conv kernel ----
    patches = (x.reshape(N, H2, 2, W2, 2, Cin)
                 .transpose(2, 4, 0, 1, 3, 5)
                 .reshape(4, N * H2 * W2, Cin))       # k = kh*2 + kw
    rows = downsample(patches, params["ds_conv_w"], params["ds_conv_b"],
                      params["ds_ln_w"], params["ds_ln_b"])
    x = rows.reshape(N, H2, W2, Cout)

    # --- ConvNeXt blocks (fully fused per row tile) --------------------------
    for blk in params["blocks"]:
        x = convnext_block(x, blk)
        # TODO(synk): drop_path=0.0 and grad_checkpointing are training-time
        # no-ops in this forward and are intentionally omitted.

    return jnp.transpose(x, (0, 3, 1, 2))             # NHWC -> NCHW


# ---------------------------------------------------------------------------
# Deterministic parameter init (shapes per the PyTorch __init__)
# ---------------------------------------------------------------------------
def init_params(key, in_chs, out_chs, depth=2, kernel_size=7, mlp_ratio=4):
    hidden = int(mlp_ratio * out_chs)
    keys = jax.random.split(key, 2 + depth * 6)
    ki = iter(keys)
    nrm = lambda shape: 0.05 * jax.random.normal(next(ki), shape, jnp.float32)

    params = {
        "ds_ln_w": jnp.ones((in_chs,), jnp.float32),
        "ds_ln_b": jnp.zeros((in_chs,), jnp.float32),
        # 2x2 stride-2 conv as (k=kh*2+kw, Cin, Cout)
        "ds_conv_w": nrm((4, in_chs, out_chs)),
        "ds_conv_b": nrm((out_chs,)),
        "blocks": [],
    }
    for _ in range(depth):
        params["blocks"].append({
            "dw_w": nrm((kernel_size, kernel_size, out_chs)),  # depthwise 7x7
            "dw_b": nrm((out_chs,)),
            "ln_w": jnp.ones((out_chs,), jnp.float32),
            "ln_b": jnp.zeros((out_chs,), jnp.float32),
            "fc1_w": nrm((out_chs, hidden)),
            "fc1_b": nrm((hidden,)),
            "fc2_w": nrm((hidden, out_chs)),
            "fc2_b": nrm((out_chs,)),
            "gamma": jnp.ones((out_chs,), jnp.float32),        # ls_init=1.0
        })
    return params


if __name__ == "__main__":
    key = jax.random.PRNGKey(0)
    k_x, k_p = jax.random.split(key)

    N, Cin, H, W = 2, 4, 16, 16
    Cout = 8
    x = jax.random.normal(k_x, (N, Cin, H, W), jnp.float32)
    params = init_params(k_p, Cin, Cout)

    y = jax.jit(convnext_stage_forward)(x, params)
    y = jax.block_until_ready(y)
    assert y.shape == (N, Cout, H // 2, W // 2), y.shape
    assert bool(jnp.all(jnp.isfinite(y)))
    print("KERNEL_OK")
</pallas_src>

<mosaic_0001>
module attributes {stable_mosaic.version = 11 : i64} {
  func.func @_ds_kernel(%arg0: i32, %arg1: memref<4x128x4xf32, #tpu.memory_space<vmem>>, %arg2: memref<4x4x8xf32, #tpu.memory_space<vmem>>, %arg3: memref<1x8xf32, #tpu.memory_space<vmem>>, %arg4: memref<1x4xf32, #tpu.memory_space<vmem>>, %arg5: memref<1x4xf32, #tpu.memory_space<vmem>>, %arg6: memref<128x8xf32, #tpu.memory_space<vmem>>) attributes {dimension_semantics = [#tpu.dimension_semantics<parallel>], iteration_bounds = array<i64: 1>, scalar_prefetch = 0 : i64, scratch_operands = 0 : i64, tpu.core_type = #tpu.core_type<tc>, window_params = [{transform_indices = @transform_0, window_bounds = array<i64: 4, 128, 4>}, {pipeline_mode = #tpu.pipeline_mode<synchronous>, transform_indices = @transform_1, window_bounds = array<i64: 4, 4, 8>}, {pipeline_mode = #tpu.pipeline_mode<synchronous>, transform_indices = @transform_2, window_bounds = array<i64: 1, 8>}, {pipeline_mode = #tpu.pipeline_mode<synchronous>, transform_indices = @transform_3, window_bounds = array<i64: 1, 4>}, {pipeline_mode = #tpu.pipeline_mode<synchronous>, transform_indices = @transform_4, window_bounds = array<i64: 1, 4>}, {transform_indices = @transform_5, window_bounds = array<i64: 128, 8>}]} {
    %c0 = arith.constant 0 : index
    %c0_0 = arith.constant 0 : index
    %c0_1 = arith.constant 0 : index
    %0 = vector.load %arg1[%c0, %c0_0, %c0_1] : memref<4x128x4xf32, #tpu.memory_space<vmem>>, vector<4x128x4xf32>
    %c0_2 = arith.constant 0 : index
    %c0_3 = arith.constant 0 : index
    %1 = vector.load %arg4[%c0_2, %c0_3] : memref<1x4xf32, #tpu.memory_space<vmem>>, vector<1x4xf32>
    %c0_4 = arith.constant 0 : index
    %c0_5 = arith.constant 0 : index
    %2 = vector.load %arg5[%c0_4, %c0_5] : memref<1x4xf32, #tpu.memory_space<vmem>>, vector<1x4xf32>
    %cst = arith.constant dense<0.000000e+00> : vector<4x128xf32>
    %3 = vector.multi_reduction <add>, %0, %cst [2] : vector<4x128x4xf32> to vector<4x128xf32>
    %4 = vector.shape_cast %3 : vector<4x128xf32> to vector<4x128x1xf32>
    %cst_6 = arith.constant 4.000000e+00 : f32
    %5 = vector.broadcast %cst_6 : f32 to vector<4x128x1xf32>
    %6 = arith.divf %4, %5 : vector<4x128x1xf32>
    %7 = vector.broadcast %6 : vector<4x128x1xf32> to vector<4x128x4xf32>
    %8 = arith.subf %0, %7 : vector<4x128x4xf32>
    %9 = arith.mulf %8, %8 : vector<4x128x4xf32>
    %cst_7 = arith.constant dense<0.000000e+00> : vector<4x128xf32>
    %10 = vector.multi_reduction <add>, %9, %cst_7 [2] : vector<4x128x4xf32> to vector<4x128xf32>
    %11 = vector.shape_cast %10 : vector<4x128xf32> to vector<4x128x1xf32>
    %cst_8 = arith.constant 4.000000e+00 : f32
    %12 = vector.broadcast %cst_8 : f32 to vector<4x128x1xf32>
    %13 = arith.divf %11, %12 : vector<4x128x1xf32>
    %14 = vector.broadcast %6 : vector<4x128x1xf32> to vector<4x128x4xf32>
    %15 = arith.subf %0, %14 : vector<4x128x4xf32>
    %cst_9 = arith.constant 9.99999974E-6 : f32
    %16 = vector.broadcast %cst_9 : f32 to vector<4x128x1xf32>
    %17 = arith.addf %13, %16 : vector<4x128x1xf32>
    %18 = math.rsqrt %17 : vector<4x128x1xf32>
    %19 = vector.broadcast %18 : vector<4x128x1xf32> to vector<4x128x4xf32>
    %20 = arith.mulf %15, %19 : vector<4x128x4xf32>
    %21 = vector.shape_cast %1 : vector<1x4xf32> to vector<1x1x4xf32>
    %22 = vector.broadcast %21 : vector<1x1x4xf32> to vector<4x128x4xf32>
    %23 = arith.mulf %20, %22 : vector<4x128x4xf32>
    %24 = vector.shape_cast %2 : vector<1x4xf32> to vector<1x1x4xf32>
    %25 = vector.broadcast %24 : vector<1x1x4xf32> to vector<4x128x4xf32>
    %26 = arith.addf %23, %25 : vector<4x128x4xf32>
    %c0_10 = arith.constant 0 : index
    %c0_11 = arith.constant 0 : index
    %c0_12 = arith.constant 0 : index
    %27 = vector.load %arg2[%c0_10, %c0_11, %c0_12] : memref<4x4x8xf32, #tpu.memory_space<vmem>>, vector<4x4x8xf32>
    %28 = vector.extract_strided_slice %26 {offsets = [0, 0, 0], sizes = [1, 128, 4], strides = [1, 1, 1]} : vector<4x128x4xf32> to vector<1x128x4xf32>
    %29 = vector.shape_cast %28 : vector<1x128x4xf32> to vector<128x4xf32>
    %30 = vector.extract_strided_slice %27 {offsets = [0, 0, 0], sizes = [1, 4, 8], strides = [1, 1, 1]} : vector<4x4x8xf32> to vector<1x4x8xf32>
    %31 = vector.shape_cast %30 : vector<1x4x8xf32> to vector<4x8xf32>
    %cst_13 = arith.constant dense<0.000000e+00> : vector<128x8xf32>
    %32 = tpu.matmul %29, %31, %cst_13 {dimension_numbers = #tpu.dot_dimension_numbers<[1], [0], [0], [1], [0, 0, 1, 1], [], []>} : vector<128x4xf32>, vector<4x8xf32>, vector<128x8xf32> -> vector<128x8xf32>
    %33 = vector.extract_strided_slice %26 {offsets = [1, 0, 0], sizes = [1, 128, 4], strides = [1, 1, 1]} : vector<4x128x4xf32> to vector<1x128x4xf32>
    %34 = vector.shape_cast %33 : vector<1x128x4xf32> to vector<128x4xf32>
    %35 = vector.extract_strided_slice %27 {offsets = [1, 0, 0], sizes = [1, 4, 8], strides = [1, 1, 1]} : vector<4x4x8xf32> to vector<1x4x8xf32>
    %36 = vector.shape_cast %35 : vector<1x4x8xf32> to vector<4x8xf32>
    %cst_14 = arith.constant dense<0.000000e+00> : vector<128x8xf32>
    %37 = tpu.matmul %34, %36, %cst_14 {dimension_numbers = #tpu.dot_dimension_numbers<[1], [0], [0], [1], [0, 0, 1, 1], [], []>} : vector<128x4xf32>, vector<4x8xf32>, vector<128x8xf32> -> vector<128x8xf32>
    %38 = arith.addf %32, %37 : vector<128x8xf32>
    %39 = vector.extract_strided_slice %26 {offsets = [2, 0, 0], sizes = [1, 128, 4], strides = [1, 1, 1]} : vector<4x128x4xf32> to vector<1x128x4xf32>
    %40 = vector.shape_cast %39 : vector<1x128x4xf32> to vector<128x4xf32>
    %41 = vector.extract_strided_slice %27 {offsets = [2, 0, 0], sizes = [1, 4, 8], strides = [1, 1, 1]} : vector<4x4x8xf32> to vector<1x4x8xf32>
    %42 = vector.shape_cast %41 : vector<1x4x8xf32> to vector<4x8xf32>
    %cst_15 = arith.constant dense<0.000000e+00> : vector<128x8xf32>
    %43 = tpu.matmul %40, %42, %cst_15 {dimension_numbers = #tpu.dot_dimension_numbers<[1], [0], [0], [1], [0, 0, 1, 1], [], []>} : vector<128x4xf32>, vector<4x8xf32>, vector<128x8xf32> -> vector<128x8xf32>
    %44 = arith.addf %38, %43 : vector<128x8xf32>
    %45 = vector.extract_strided_slice %26 {offsets = [3, 0, 0], sizes = [1, 128, 4], strides = [1, 1, 1]} : vector<4x128x4xf32> to vector<1x128x4xf32>
    %46 = vector.shape_cast %45 : vector<1x128x4xf32> to vector<128x4xf32>
    %47 = vector.extract_strided_slice %27 {offsets = [3, 0, 0], sizes = [1, 4, 8], strides = [1, 1, 1]} : vector<4x4x8xf32> to vector<1x4x8xf32>
    %48 = vector.shape_cast %47 : vector<1x4x8xf32> to vector<4x8xf32>
    %cst_16 = arith.constant dense<0.000000e+00> : vector<128x8xf32>
    %49 = tpu.matmul %46, %48, %cst_16 {dimension_numbers = #tpu.dot_dimension_numbers<[1], [0], [0], [1], [0, 0, 1, 1], [], []>} : vector<128x4xf32>, vector<4x8xf32>, vector<128x8xf32> -> vector<128x8xf32>
    %50 = arith.addf %44, %49 : vector<128x8xf32>
    %c0_17 = arith.constant 0 : index
    %c0_18 = arith.constant 0 : index
    %51 = vector.load %arg3[%c0_17, %c0_18] : memref<1x8xf32, #tpu.memory_space<vmem>>, vector<1x8xf32>
    %52 = vector.broadcast %51 : vector<1x8xf32> to vector<128x8xf32>
    %53 = arith.addf %50, %52 : vector<128x8xf32>
    %c0_19 = arith.constant 0 : index
    %c0_20 = arith.constant 0 : index
    %54 = vector.load %arg6[%c0_19, %c0_20] : memref<128x8xf32, #tpu.memory_space<vmem>>, vector<128x8xf32>
    tpu.vector_store %arg6[%c0_19, %c0_20], %53 {strides = array<i32>} : memref<128x8xf32, #tpu.memory_space<vmem>>, vector<128x8xf32>,
    return
  }
  func.func @transform_0(%arg0: i32) -> (i32, i32, i32) {
    %c0_i32 = arith.constant 0 : i32
    %c0_i32_0 = arith.constant 0 : i32
    %c0_i32_1 = arith.constant 0 : i32
    return %c0_i32, %arg0, %c0_i32_0 : i32, i32, i32
  }
  func.func @transform_1(%arg0: i32) -> (i32, i32, i32) {
    %c0_i32 = arith.constant 0 : i32
    %c0_i32_0 = arith.constant 0 : i32
    %c0_i32_1 = arith.constant 0 : i32
    %c0_i32_2 = arith.constant 0 : i32
    return %c0_i32, %c0_i32_0, %c0_i32_1 : i32, i32, i32
  }
  func.func @transform_2(%arg0: i32) -> (i32, i32) {
    %c0_i32 = arith.constant 0 : i32
    %c0_i32_0 = arith.constant 0 : i32
    %c0_i32_1 = arith.constant 0 : i32
    return %c0_i32, %c0_i32_0 : i32, i32
  }
  func.func @transform_3(%arg0: i32) -> (i32, i32) {
    %c0_i32 = arith.constant 0 : i32
    %c0_i32_0 = arith.constant 0 : i32
    %c0_i32_1 = arith.constant 0 : i32
    return %c0_i32, %c0_i32_0 : i32, i32
  }
  func.func @transform_4(%arg0: i32) -> (i32, i32) {
    %c0_i32 = arith.constant 0 : i32
    %c0_i32_0 = arith.constant 0 : i32
    %c0_i32_1 = arith.constant 0 : i32
    return %c0_i32, %c0_i32_0 : i32, i32
  }
  func.func @transform_5(%arg0: i32) -> (i32, i32) {
    %c0_i32 = arith.constant 0 : i32
    %c0_i32_0 = arith.constant 0 : i32
    return %arg0, %c0_i32 : i32, i32
  }
}

module attributes {stable_mosaic.version = 11 : i64} {
  func.func @kernel(%arg0: i32, %arg1: i32, %arg2: memref<1x8x8x8xf32, #tpu.memory_space<vmem>>, %arg3: memref<1x8x8x8xf32, #tpu.memory_space<vmem>>, %arg4: memref<1x8x8x8xf32, #tpu.memory_space<vmem>>, %arg5: memref<7x7x8xf32, #tpu.memory_space<vmem>>, %arg6: memref<1x1x8xf32, #tpu.memory_space<vmem>>, %arg7: memref<1x8xf32, #tpu.memory_space<vmem>>, %arg8: memref<1x8xf32, #tpu.memory_space<vmem>>, %arg9: memref<8x32xf32, #tpu.memory_space<vmem>>, %arg10: memref<1x32xf32, #tpu.memory_space<vmem>>, %arg11: memref<32x8xf32, #tpu.memory_space<vmem>>, %arg12: memref<1x8xf32, #tpu.memory_space<vmem>>, %arg13: memref<1x8xf32, #tpu.memory_space<vmem>>, %arg14: memref<1x8x8x8xf32, #tpu.memory_space<vmem>>, %arg15: memref<14x14x8xf32, #tpu.memory_space<vmem>>) attributes {dimension_semantics = [#tpu.dimension_semantics<parallel>, #tpu.dimension_semantics<parallel>], iteration_bounds = array<i64: 2, 1>, scalar_prefetch = 0 : i64, scratch_operands = 1 : i64, tpu.core_type = #tpu.core_type<tc>, window_params = [{transform_indices = @transform_0, window_bounds = array<i64: 1, 8, 8, 8>}, {transform_indices = @transform_1, window_bounds = array<i64: 1, 8, 8, 8>}, {transform_indices = @transform_2, window_bounds = array<i64: 1, 8, 8, 8>}, {pipeline_mode = #tpu.pipeline_mode<synchronous>, transform_indices = @transform_3, window_bounds = array<i64: 7, 7, 8>}, {pipeline_mode = #tpu.pipeline_mode<synchronous>, transform_indices = @transform_4, window_bounds = array<i64: 1, 1, 8>}, {pipeline_mode = #tpu.pipeline_mode<synchronous>, transform_indices = @transform_5, window_bounds = array<i64: 1, 8>}, {pipeline_mode = #tpu.pipeline_mode<synchronous>, transform_indices = @transform_6, window_bounds = array<i64: 1, 8>}, {pipeline_mode = #tpu.pipeline_mode<synchronous>, transform_indices = @transform_7, window_bounds = array<i64: 8, 32>}, {pipeline_mode = #tpu.pipeline_mode<synchronous>, transform_indices = @transform_8, window_bounds = array<i64: 1, 32>}, {pipeline_mode = #tpu.pipeline_mode<synchronous>, transform_indices = @transform_9, window_bounds = array<i64: 32, 8>}, {pipeline_mode = #tpu.pipeline_mode<synchronous>, transform_indices = @transform_10, window_bounds = array<i64: 1, 8>}, {pipeline_mode = #tpu.pipeline_mode<synchronous>, transform_indices = @transform_11, window_bounds = array<i64: 1, 8>}, {transform_indices = @transform_12, window_bounds = array<i64: 1, 8, 8, 8>}]} {
    %cst = arith.constant 0.000000e+00 : f32
    %0 = vector.broadcast %cst : f32 to vector<14x14x8xf32>
    %c0 = arith.constant 0 : index
    %c0_0 = arith.constant 0 : index
    %c0_1 = arith.constant 0 : index
    %1 = vector.load %arg15[%c0, %c0_0, %c0_1] : memref<14x14x8xf32, #tpu.memory_space<vmem>>, vector<14x14x8xf32>
    tpu.vector_store %arg15[%c0, %c0_0, %c0_1], %0 {strides = array<i32>} : memref<14x14x8xf32, #tpu.memory_space<vmem>>, vector<14x14x8xf32>,
    %c0_2 = arith.constant 0 : index
    %c0_3 = arith.constant 0 : index
    %c0_4 = arith.constant 0 : index
    %c0_5 = arith.constant 0 : index
    %2 = vector.load %arg3[%c0_2, %c0_3, %c0_4, %c0_5] : memref<1x8x8x8xf32, #tpu.memory_space<vmem>>, vector<1x8x8x8xf32>
    %3 = vector.shape_cast %2 : vector<1x8x8x8xf32> to vector<8x8x8xf32>
    %c3 = arith.constant 3 : index
    %c3_6 = arith.constant 3 : index
    %c0_7 = arith.constant 0 : index
    %4 = vector.load %arg15[%c3, %c3_6, %c0_7] : memref<14x14x8xf32, #tpu.memory_space<vmem>>, vector<8x8x8xf32>
    tpu.vector_store %arg15[%c3, %c3_6, %c0_7], %3 {strides = array<i32>} : memref<14x14x8xf32, #tpu.memory_space<vmem>>, vector<8x8x8xf32>,
    %c0_i32 = arith.constant 0 : i32
    %5 = arith.cmpi sgt, %arg1, %c0_i32 : i32
    %6 = arith.extui %5 : i1 to i32
    %c0_i32_8 = arith.constant 0 : i32
    %7 = arith.cmpi ne, %6, %c0_i32_8 : i32
    scf.if %7 {
      %c0_61 = arith.constant 0 : index
      %c5 = arith.constant 5 : index
      %c0_62 = arith.constant 0 : index
      %c0_63 = arith.constant 0 : index
      %353 = vector.load %arg2[%c0_61, %c5, %c0_62, %c0_63] : memref<1x8x8x8xf32, #tpu.memory_space<vmem>>, vector<1x3x8x8xf32>
      %354 = vector.shape_cast %353 : vector<1x3x8x8xf32> to vector<3x8x8xf32>
      %c0_64 = arith.constant 0 : index
      %c3_65 = arith.constant 3 : index
      %c0_66 = arith.constant 0 : index
      %355 = vector.load %arg15[%c0_64, %c3_65, %c0_66] : memref<14x14x8xf32, #tpu.memory_space<vmem>>, vector<3x8x8xf32>
      tpu.vector_store %arg15[%c0_64, %c3_65, %c0_66], %354 {strides = array<i32>} : memref<14x14x8xf32, #tpu.memory_space<vmem>>, vector<3x8x8xf32>,
    } else {
    }
    %c0_i32_9 = arith.constant 0 : i32
    %8 = arith.cmpi slt, %arg1, %c0_i32_9 : i32
    %9 = arith.extui %8 : i1 to i32
    %c0_i32_10 = arith.constant 0 : i32
    %10 = arith.cmpi ne, %9, %c0_i32_10 : i32
    scf.if %10 {
      %c0_61 = arith.constant 0 : index
      %c0_62 = arith.constant 0 : index
      %c0_63 = arith.constant 0 : index
      %c0_64 = arith.constant 0 : index
      %353 = vector.load %arg4[%c0_61, %c0_62, %c0_63, %c0_64] : memref<1x8x8x8xf32, #tpu.memory_space<vmem>>, vector<1x3x8x8xf32>
      %354 = vector.shape_cast %353 : vector<1x3x8x8xf32> to vector<3x8x8xf32>
      %c11 = arith.constant 11 : index
      %c3_65 = arith.constant 3 : index
      %c0_66 = arith.constant 0 : index
      %355 = vector.load %arg15[%c11, %c3_65, %c0_66] : memref<14x14x8xf32, #tpu.memory_space<vmem>>, vector<3x8x8xf32>
      tpu.vector_store %arg15[%c11, %c3_65, %c0_66], %354 {strides = array<i32>} : memref<14x14x8xf32, #tpu.memory_space<vmem>>, vector<3x8x8xf32>,
    } else {
    }
    %c0_11 = arith.constant 0 : index
    %c0_12 = arith.constant 0 : index
    %c0_13 = arith.constant 0 : index
    %11 = vector.load %arg15[%c0_11, %c0_12, %c0_13] : memref<14x14x8xf32, #tpu.memory_space<vmem>>, vector<14x14x8xf32>
    %c0_14 = arith.constant 0 : index
    %c0_15 = arith.constant 0 : index
    %c0_16 = arith.constant 0 : index
    %12 = vector.load %arg5[%c0_14, %c0_15, %c0_16] : memref<7x7x8xf32, #tpu.memory_space<vmem>>, vector<7x7x8xf32>
    %cst_17 = arith.constant 0.000000e+00 : f32
    %13 = vector.broadcast %cst_17 : f32 to vector<8x8x8xf32>
    %14 = vector.extract_strided_slice %11 {offsets = [0, 0, 0], sizes = [14, 8, 8], strides = [1, 1, 1]} : vector<14x14x8xf32> to vector<14x8x8xf32>
    %15 = vector.extract_strided_slice %14 {offsets = [0, 0, 0], sizes = [8, 8, 8], strides = [1, 1, 1]} : vector<14x8x8xf32> to vector<8x8x8xf32>
    %16 = vector.extract_strided_slice %12 {offsets = [0, 0, 0], sizes = [1, 1, 8], strides = [1, 1, 1]} : vector<7x7x8xf32> to vector<1x1x8xf32>
    %17 = vector.broadcast %16 : vector<1x1x8xf32> to vector<8x8x8xf32>
    %18 = arith.mulf %15, %17 : vector<8x8x8xf32>
    %19 = arith.addf %13, %18 : vector<8x8x8xf32>
    %20 = vector.extract_strided_slice %14 {offsets = [1, 0, 0], sizes = [8, 8, 8], strides = [1, 1, 1]} : vector<14x8x8xf32> to vector<8x8x8xf32>
    %21 = vector.extract_strided_slice %12 {offsets = [1, 0, 0], sizes = [1, 1, 8], strides = [1, 1, 1]} : vector<7x7x8xf32> to vector<1x1x8xf32>
    %22 = vector.broadcast %21 : vector<1x1x8xf32> to vector<8x8x8xf32>
    %23 = arith.mulf %20, %22 : vector<8x8x8xf32>
    %24 = arith.addf %19, %23 : vector<8x8x8xf32>
    %25 = vector.extract_strided_slice %14 {offsets = [2, 0, 0], sizes = [8, 8, 8], strides = [1, 1, 1]} : vector<14x8x8xf32> to vector<8x8x8xf32>
    %26 = vector.extract_strided_slice %12 {offsets = [2, 0, 0], sizes = [1, 1, 8], strides = [1, 1, 1]} : vector<7x7x8xf32> to vector<1x1x8xf32>
    %27 = vector.broadcast %26 : vector<1x1x8xf32> to vector<8x8x8xf32>
    %28 = arith.mulf %25, %27 : vector<8x8x8xf32>
    %29 = arith.addf %24, %28 : vector<8x8x8xf32>
    %30 = vector.extract_strided_slice %14 {offsets = [3, 0, 0], sizes = [8, 8, 8], strides = [1, 1, 1]} : vector<14x8x8xf32> to vector<8x8x8xf32>
    %31 = vector.extract_strided_slice %12 {offsets = [3, 0, 0], sizes = [1, 1, 8], strides = [1, 1, 1]} : vector<7x7x8xf32> to vector<1x1x8xf32>
    %32 = vector.broadcast %31 : vector<1x1x8xf32> to vector<8x8x8xf32>
    %33 = arith.mulf %30, %32 : vector<8x8x8xf32>
    %34 = arith.addf %29, %33 : vector<8x8x8xf32>
    %35 = vector.extract_strided_slice %14 {offsets = [4, 0, 0], sizes = [8, 8, 8], strides = [1, 1, 1]} : vector<14x8x8xf32> to vector<8x8x8xf32>
    %36 = vector.extract_strided_slice %12 {offsets = [4, 0, 0], sizes = [1, 1, 8], strides = [1, 1, 1]} : vector<7x7x8xf32> to vector<1x1x8xf32>
    %37 = vector.broadcast %36 : vector<1x1x8xf32> to vector<8x8x8xf32>
    %38 = arith.mulf %35, %37 : vector<8x8x8xf32>
    %39 = arith.addf %34, %38 : vector<8x8x8xf32>
    %40 = vector.extract_strided_slice %14 {offsets = [5, 0, 0], sizes = [8, 8, 8], strides = [1, 1, 1]} : vector<14x8x8xf32> to vector<8x8x8xf32>
    %41 = vector.extract_strided_slice %12 {offsets = [5, 0, 0], sizes = [1, 1, 8], strides = [1, 1, 1]} : vector<7x7x8xf32> to vector<1x1x8xf32>
    %42 = vector.broadcast %41 : vector<1x1x8xf32> to vector<8x8x8xf32>
    %43 = arith.mulf %40, %42 : vector<8x8x8xf32>
    %44 = arith.addf %39, %43 : vector<8x8x8xf32>
    %45 = vector.extract_strided_slice %14 {offsets = [6, 0, 0], sizes = [8, 8, 8], strides = [1, 1, 1]} : vector<14x8x8xf32> to vector<8x8x8xf32>
    %46 = vector.extract_strided_slice %12 {offsets = [6, 0, 0], sizes = [1, 1, 8], strides = [1, 1, 1]} : vector<7x7x8xf32> to vector<1x1x8xf32>
    %47 = vector.broadcast %46 : vector<1x1x8xf32> to vector<8x8x8xf32>
    %48 = arith.mulf %45, %47 : vector<8x8x8xf32>
    %49 = arith.addf %44, %48 : vector<8x8x8xf32>
    %50 = vector.extract_strided_slice %11 {offsets = [0, 1, 0], sizes = [14, 8, 8], strides = [1, 1, 1]} : vector<14x14x8xf32> to vector<14x8x8xf32>
    %51 = vector.extract_strided_slice %50 {offsets = [0, 0, 0], sizes = [8, 8, 8], strides = [1, 1, 1]} : vector<14x8x8xf32> to vector<8x8x8xf32>
    %52 = vector.extract_strided_slice %12 {offsets = [0, 1, 0], sizes = [1, 1, 8], strides = [1, 1, 1]} : vector<7x7x8xf32> to vector<1x1x8xf32>
    %53 = vector.broadcast %52 : vector<1x1x8xf32> to vector<8x8x8xf32>
    %54 = arith.mulf %51, %53 : vector<8x8x8xf32>
    %55 = arith.addf %49, %54 : vector<8x8x8xf32>
    %56 = vector.extract_strided_slice %50 {offsets = [1, 0, 0], sizes = [8, 8, 8], strides = [1, 1, 1]} : vector<14x8x8xf32> to vector<8x8x8xf32>
    %57 = vector.extract_strided_slice %12 {offsets = [1, 1, 0], sizes = [1, 1, 8], strides = [1, 1, 1]} : vector<7x7x8xf32> to vector<1x1x8xf32>
    %58 = vector.broadcast %57 : vector<1x1x8xf32> to vector<8x8x8xf32>
    %59 = arith.mulf %56, %58 : vector<8x8x8xf32>
    %60 = arith.addf %55, %59 : vector<8x8x8xf32>
    %61 = vector.extract_strided_slice %50 {offsets = [2, 0, 0], sizes = [8, 8, 8], strides = [1, 1, 1]} : vector<14x8x8xf32> to vector<8x8x8xf32>
    %62 = vector.extract_strided_slice %12 {offsets = [2, 1, 0], sizes = [1, 1, 8], strides = [1, 1, 1]} : vector<7x7x8xf32> to vector<1x1x8xf32>
    %63 = vector.broadcast %62 : vector<1x1x8xf32> to vector<8x8x8xf32>
    %64 = arith.mulf %61, %63 : vector<8x8x8xf32>
    %65 = arith.addf %60, %64 : vector<8x8x8xf32>
    %66 = vector.extract_strided_slice %50 {offsets = [3, 0, 0], sizes = [8, 8, 8], strides = [1, 1, 1]} : vector<14x8x8xf32> to vector<8x8x8xf32>
    %67 = vector.extract_strided_slice %12 {offsets = [3, 1, 0], sizes = [1, 1, 8], strides = [1, 1, 1]} : vector<7x7x8xf32> to vector<1x1x8xf32>
    %68 = vector.broadcast %67 : vector<1x1x8xf32> to vector<8x8x8xf32>
    %69 = arith.mulf %66, %68 : vector<8x8x8xf32>
    %70 = arith.addf %65, %69 : vector<8x8x8xf32>
    %71 = vector.extract_strided_slice %50 {offsets = [4, 0, 0], sizes = [8, 8, 8], strides = [1, 1, 1]} : vector<14x8x8xf32> to vector<8x8x8xf32>
    %72 = vector.extract_strided_slice %12 {offsets = [4, 1, 0], sizes = [1, 1, 8], strides = [1, 1, 1]} : vector<7x7x8xf32> to vector<1x1x8xf32>
    %73 = vector.broadcast %72 : vector<1x1x8xf32> to vector<8x8x8xf32>
    %74 = arith.mulf %71, %73 : vector<8x8x8xf32>
    %75 = arith.addf %70, %74 : vector<8x8x8xf32>
    %76 = vector.extract_strided_slice %50 {offsets = [5, 0, 0], sizes = [8, 8, 8], strides = [1, 1, 1]} : vector<14x8x8xf32> to vector<8x8x8xf32>
    %77 = vector.extract_strided_slice %12 {offsets = [5, 1, 0], sizes = [1, 1, 8], strides = [1, 1, 1]} : vector<7x7x8xf32> to vector<1x1x8xf32>
    %78 = vector.broadcast %77 : vector<1x1x8xf32> to vector<8x8x8xf32>
    %79 = arith.mulf %76, %78 : vector<8x8x8xf32>
    %80 = arith.addf %75, %79 : vector<8x8x8xf32>
    %81 = vector.extract_strided_slice %50 {offsets = [6, 0, 0], sizes = [8, 8, 8], strides = [1, 1, 1]} : vector<14x8x8xf32> to vector<8x8x8xf32>
    %82 = vector.extract_strided_slice %12 {offsets = [6, 1, 0], sizes = [1, 1, 8], strides = [1, 1, 1]} : vector<7x7x8xf32> to vector<1x1x8xf32>
    %83 = vector.broadcast %82 : vector<1x1x8xf32> to vector<8x8x8xf32>
    %84 = arith.mulf %81, %83 : vector<8x8x8xf32>
    %85 = arith.addf %80, %84 : vector<8x8x8xf32>
    %86 = vector.extract_strided_slice %11 {offsets = [0, 2, 0], sizes = [14, 8, 8], strides = [1, 1, 1]} : vector<14x14x8xf32> to vector<14x8x8xf32>
    %87 = vector.extract_strided_slice %86 {offsets = [0, 0, 0], sizes = [8, 8, 8], strides = [1, 1, 1]} : vector<14x8x8xf32> to vector<8x8x8xf32>
    %88 = vector.extract_strided_slice %12 {offsets = [0, 2, 0], sizes = [1, 1, 8], strides = [1, 1, 1]} : vector<7x7x8xf32> to vector<1x1x8xf32>
    %89 = vector.broadcast %88 : vector<1x1x8xf32> to vector<8x8x8xf32>
    %90 = arith.mulf %87, %89 : vector<8x8x8xf32>
    %91 = arith.addf %85, %90 : vector<8x8x8xf32>
    %92 = vector.extract_strided_slice %86 {offsets = [1, 0, 0], sizes = [8, 8, 8], strides = [1, 1, 1]} : vector<14x8x8xf32> to vector<8x8x8xf32>
    %93 = vector.extract_strided_slice %12 {offsets = [1, 2, 0], sizes = [1, 1, 8], strides = [1, 1, 1]} : vector<7x7x8xf32> to vector<1x1x8xf32>
    %94 = vector.broadcast %93 : vector<1x1x8xf32> to vector<8x8x8xf32>
    %95 = arith.mulf %92, %94 : vector<8x8x8xf32>
    %96 = arith.addf %91, %95 : vector<8x8x8xf32>
    %97 = vector.extract_strided_slice %86 {offsets = [2, 0, 0], sizes = [8, 8, 8], strides = [1, 1, 1]} : vector<14x8x8xf32> to vector<8x8x8xf32>
    %98 = vector.extract_strided_slice %12 {offsets = [2, 2, 0], sizes = [1, 1, 8], strides = [1, 1, 1]} : vector<7x7x8xf32> to vector<1x1x8xf32>
    %99 = vector.broadcast %98 : vector<1x1x8xf32> to vector<8x8x8xf32>
    %100 = arith.mulf %97, %99 : vector<8x8x8xf32>
    %101 = arith.addf %96, %100 : vector<8x8x8xf32>
    %102 = vector.extract_strided_slice %86 {offsets = [3, 0, 0], sizes = [8, 8, 8], strides = [1, 1, 1]} : vector<14x8x8xf32> to vector<8x8x8xf32>
    %103 = vector.extract_strided_slice %12 {offsets = [3, 2, 0], sizes = [1, 1, 8], strides = [1, 1, 1]} : vector<7x7x8xf32> to vector<1x1x8xf32>
    %104 = vector.broadcast %103 : vector<1x1x8xf32> to vector<8x8x8xf32>
    %105 = arith.mulf %102, %104 : vector<8x8x8xf32>
    %106 = arith.addf %101, %105 : vector<8x8x8xf32>
    %107 = vector.extract_strided_slice %86 {offsets = [4, 0, 0], sizes = [8, 8, 8], strides = [1, 1, 1]} : vector<14x8x8xf32> to vector<8x8x8xf32>
    %108 = vector.extract_strided_slice %12 {offsets = [4, 2, 0], sizes = [1, 1, 8], strides = [1, 1, 1]} : vector<7x7x8xf32> to vector<1x1x8xf32>
    %109 = vector.broadcast %108 : vector<1x1x8xf32> to vector<8x8x8xf32>
    %110 = arith.mulf %107, %109 : vector<8x8x8xf32>
    %111 = arith.addf %106, %110 : vector<8x8x8xf32>
    %112 = vector.extract_strided_slice %86 {offsets = [5, 0, 0], sizes = [8, 8, 8], strides = [1, 1, 1]} : vector<14x8x8xf32> to vector<8x8x8xf32>
    %113 = vector.extract_strided_slice %12 {offsets = [5, 2, 0], sizes = [1, 1, 8], strides = [1, 1, 1]} : vector<7x7x8xf32> to vector<1x1x8xf32>
    %114 = vector.broadcast %113 : vector<1x1x8xf32> to vector<8x8x8xf32>
    %115 = arith.mulf %112, %114 : vector<8x8x8xf32>
    %116 = arith.addf %111, %115 : vector<8x8x8xf32>
    %117 = vector.extract_strided_slice %86 {offsets = [6, 0, 0], sizes = [8, 8, 8], strides = [1, 1, 1]} : vector<14x8x8xf32> to vector<8x8x8xf32>
    %118 = vector.extract_strided_slice %12 {offsets = [6, 2, 0], sizes = [1, 1, 8], strides = [1, 1, 1]} : vector<7x7x8xf32> to vector<1x1x8xf32>
    %119 = vector.broadcast %118 : vector<1x1x8xf32> to vector<8x8x8xf32>
    %120 = arith.mulf %117, %119 : vector<8x8x8xf32>
    %121 = arith.addf %116, %120 : vector<8x8x8xf32>
    %122 = vector.extract_strided_slice %11 {offsets = [0, 3, 0], sizes = [14, 8, 8], strides = [1, 1, 1]} : vector<14x14x8xf32> to vector<14x8x8xf32>
    %123 = vector.extract_strided_slice %122 {offsets = [0, 0, 0], sizes = [8, 8, 8], strides = [1, 1, 1]} : vector<14x8x8xf32> to vector<8x8x8xf32>
    %124 = vector.extract_strided_slice %12 {offsets = [0, 3, 0], sizes = [1, 1, 8], strides = [1, 1, 1]} : vector<7x7x8xf32> to vector<1x1x8xf32>
    %125 = vector.broadcast %124 : vector<1x1x8xf32> to vector<8x8x8xf32>
    %126 = arith.mulf %123, %125 : vector<8x8x8xf32>
    %127 = arith.addf %121, %126 : vector<8x8x8xf32>
    %128 = vector.extract_strided_slice %122 {offsets = [1, 0, 0], sizes = [8, 8, 8], strides = [1, 1, 1]} : vector<14x8x8xf32> to vector<8x8x8xf32>
    %129 = vector.extract_strided_slice %12 {offsets = [1, 3, 0], sizes = [1, 1, 8], strides = [1, 1, 1]} : vector<7x7x8xf32> to vector<1x1x8xf32>
    %130 = vector.broadcast %129 : vector<1x1x8xf32> to vector<8x8x8xf32>
    %131 = arith.mulf %128, %130 : vector<8x8x8xf32>
    %132 = arith.addf %127, %131 : vector<8x8x8xf32>
    %133 = vector.extract_strided_slice %122 {offsets = [2, 0, 0], sizes = [8, 8, 8], strides = [1, 1, 1]} : vector<14x8x8xf32> to vector<8x8x8xf32>
    %134 = vector.extract_strided_slice %12 {offsets = [2, 3, 0], sizes = [1, 1, 8], strides = [1, 1, 1]} : vector<7x7x8xf32> to vector<1x1x8xf32>
    %135 = vector.broadcast %134 : vector<1x1x8xf32> to vector<8x8x8xf32>
    %136 = arith.mulf %133, %135 : vector<8x8x8xf32>
    %137 = arith.addf %132, %136 : vector<8x8x8xf32>
    %138 = vector.extract_strided_slice %122 {offsets = [3, 0, 0], sizes = [8, 8, 8], strides = [1, 1, 1]} : vector<14x8x8xf32> to vector<8x8x8xf32>
    %139 = vector.extract_strided_slice %12 {offsets = [3, 3, 0], sizes = [1, 1, 8], strides = [1, 1, 1]} : vector<7x7x8xf32> to vector<1x1x8xf32>
    %140 = vector.broadcast %139 : vector<1x1x8xf32> to vector<8x8x8xf32>
    %141 = arith.mulf %138, %140 : vector<8x8x8xf32>
    %142 = arith.addf %137, %141 : vector<8x8x8xf32>
    %143 = vector.extract_strided_slice %122 {offsets = [4, 0, 0], sizes = [8, 8, 8], strides = [1, 1, 1]} : vector<14x8x8xf32> to vector<8x8x8xf32>
    %144 = vector.extract_strided_slice %12 {offsets = [4, 3, 0], sizes = [1, 1, 8], strides = [1, 1, 1]} : vector<7x7x8xf32> to vector<1x1x8xf32>
    %145 = vector.broadcast %144 : vector<1x1x8xf32> to vector<8x8x8xf32>
    %146 = arith.mulf %143, %145 : vector<8x8x8xf32>
    %147 = arith.addf %142, %146 : vector<8x8x8xf32>
    %148 = vector.extract_strided_slice %122 {offsets = [5, 0, 0], sizes = [8, 8, 8], strides = [1, 1, 1]} : vector<14x8x8xf32> to vector<8x8x8xf32>
    %149 = vector.extract_strided_slice %12 {offsets = [5, 3, 0], sizes = [1, 1, 8], strides = [1, 1, 1]} : vector<7x7x8xf32> to vector<1x1x8xf32>
    %150 = vector.broadcast %149 : vector<1x1x8xf32> to vector<8x8x8xf32>
    %151 = arith.mulf %148, %150 : vector<8x8x8xf32>
    %152 = arith.addf %147, %151 : vector<8x8x8xf32>
    %153 = vector.extract_strided_slice %122 {offsets = [6, 0, 0], sizes = [8, 8, 8], strides = [1, 1, 1]} : vector<14x8x8xf32> to vector<8x8x8xf32>
    %154 = vector.extract_strided_slice %12 {offsets = [6, 3, 0], sizes = [1, 1, 8], strides = [1, 1, 1]} : vector<7x7x8xf32> to vector<1x1x8xf32>
    %155 = vector.broadcast %154 : vector<1x1x8xf32> to vector<8x8x8xf32>
    %156 = arith.mulf %153, %155 : vector<8x8x8xf32>
    %157 = arith.addf %152, %156 : vector<8x8x8xf32>
    %158 = vector.extract_strided_slice %11 {offsets = [0, 4, 0], sizes = [14, 8, 8], strides = [1, 1, 1]} : vector<14x14x8xf32> to vector<14x8x8xf32>
    %159 = vector.extract_strided_slice %158 {offsets = [0, 0, 0], sizes = [8, 8, 8], strides = [1, 1, 1]} : vector<14x8x8xf32> to vector<8x8x8xf32>
    %160 = vector.extract_strided_slice %12 {offsets = [0, 4, 0], sizes = [1, 1, 8], strides = [1, 1, 1]} : vector<7x7x8xf32> to vector<1x1x8xf32>
    %161 = vector.broadcast %160 : vector<1x1x8xf32> to vector<8x8x8xf32>
    %162 = arith.mulf %159, %161 : vector<8x8x8xf32>
    %163 = arith.addf %157, %162 : vector<8x8x8xf32>
    %164 = vector.extract_strided_slice %158 {offsets = [1, 0, 0], sizes = [8, 8, 8], strides = [1, 1, 1]} : vector<14x8x8xf32> to vector<8x8x8xf32>
    %165 = vector.extract_strided_slice %12 {offsets = [1, 4, 0], sizes = [1, 1, 8], strides = [1, 1, 1]} : vector<7x7x8xf32> to vector<1x1x8xf32>
    %166 = vector.broadcast %165 : vector<1x1x8xf32> to vector<8x8x8xf32>
    %167 = arith.mulf %164, %166 : vector<8x8x8xf32>
    %168 = arith.addf %163, %167 : vector<8x8x8xf32>
    %169 = vector.extract_strided_slice %158 {offsets = [2, 0, 0], sizes = [8, 8, 8], strides = [1, 1, 1]} : vector<14x8x8xf32> to vector<8x8x8xf32>
    %170 = vector.extract_strided_slice %12 {offsets = [2, 4, 0], sizes = [1, 1, 8], strides = [1, 1, 1]} : vector<7x7x8xf32> to vector<1x1x8xf32>
    %171 = vector.broadcast %170 : vector<1x1x8xf32> to vector<8x8x8xf32>
    %172 = arith.mulf %169, %171 : vector<8x8x8xf32>
    %173 = arith.addf %168, %172 : vector<8x8x8xf32>
    %174 = vector.extract_strided_slice %158 {offsets = [3, 0, 0], sizes = [8, 8, 8], strides = [1, 1, 1]} : vector<14x8x8xf32> to vector<8x8x8xf32>
    %175 = vector.extract_strided_slice %12 {offsets = [3, 4, 0], sizes = [1, 1, 8], strides = [1, 1, 1]} : vector<7x7x8xf32> to vector<1x1x8xf32>
    %176 = vector.broadcast %175 : vector<1x1x8xf32> to vector<8x8x8xf32>
    %177 = arith.mulf %174, %176 : vector<8x8x8xf32>
    %178 = arith.addf %173, %177 : vector<8x8x8xf32>
    %179 = vector.extract_strided_slice %158 {offsets = [4, 0, 0], sizes = [8, 8, 8], strides = [1, 1, 1]} : vector<14x8x8xf32> to vector<8x8x8xf32>
    %180 = vector.extract_strided_slice %12 {offsets = [4, 4, 0], sizes = [1, 1, 8], strides = [1, 1, 1]} : vector<7x7x8xf32> to vector<1x1x8xf32>
    %181 = vector.broadcast %180 : vector<1x1x8xf32> to vector<8x8x8xf32>
    %182 = arith.mulf %179, %181 : vector<8x8x8xf32>
    %183 = arith.addf %178, %182 : vector<8x8x8xf32>
    %184 = vector.extract_strided_slice %158 {offsets = [5, 0, 0], sizes = [8, 8, 8], strides = [1, 1, 1]} : vector<14x8x8xf32> to vector<8x8x8xf32>
    %185 = vector.extract_strided_slice %12 {offsets = [5, 4, 0], sizes = [1, 1, 8], strides = [1, 1, 1]} : vector<7x7x8xf32> to vector<1x1x8xf32>
    %186 = vector.broadcast %185 : vector<1x1x8xf32> to vector<8x8x8xf32>
    %187 = arith.mulf %184, %186 : vector<8x8x8xf32>
    %188 = arith.addf %183, %187 : vector<8x8x8xf32>
    %189 = vector.extract_strided_slice %158 {offsets = [6, 0, 0], sizes = [8, 8, 8], strides = [1, 1, 1]} : vector<14x8x8xf32> to vector<8x8x8xf32>
    %190 = vector.extract_strided_slice %12 {offsets = [6, 4, 0], sizes = [1, 1, 8], strides = [1, 1, 1]} : vector<7x7x8xf32> to vector<1x1x8xf32>
    %191 = vector.broadcast %190 : vector<1x1x8xf32> to vector<8x8x8xf32>
    %192 = arith.mulf %189, %191 : vector<8x8x8xf32>
    %193 = arith.addf %188, %192 : vector<8x8x8xf32>
    %194 = vector.extract_strided_slice %11 {offsets = [0, 5, 0], sizes = [14, 8, 8], strides = [1, 1, 1]} : vector<14x14x8xf32> to vector<14x8x8xf32>
    %195 = vector.extract_strided_slice %194 {offsets = [0, 0, 0], sizes = [8, 8, 8], strides = [1, 1, 1]} : vector<14x8x8xf32> to vector<8x8x8xf32>
    %196 = vector.extract_strided_slice %12 {offsets = [0, 5, 0], sizes = [1, 1, 8], strides = [1, 1, 1]} : vector<7x7x8xf32> to vector<1x1x8xf32>
    %197 = vector.broadcast %196 : vector<1x1x8xf32> to vector<8x8x8xf32>
    %198 = arith.mulf %195, %197 : vector<8x8x8xf32>
    %199 = arith.addf %193, %198 : vector<8x8x8xf32>
    %200 = vector.extract_strided_slice %194 {offsets = [1, 0, 0], sizes = [8, 8, 8], strides = [1, 1, 1]} : vector<14x8x8xf32> to vector<8x8x8xf32>
    %201 = vector.extract_strided_slice %12 {offsets = [1, 5, 0], sizes = [1, 1, 8], strides = [1, 1, 1]} : vector<7x7x8xf32> to vector<1x1x8xf32>
    %202 = vector.broadcast %201 : vector<1x1x8xf32> to vector<8x8x8xf32>
    %203 = arith.mulf %200, %202 : vector<8x8x8xf32>
    %204 = arith.addf %199, %203 : vector<8x8x8xf32>
    %205 = vector.extract_strided_slice %194 {offsets = [2, 0, 0], sizes = [8, 8, 8], strides = [1, 1, 1]} : vector<14x8x8xf32> to vector<8x8x8xf32>
    %206 = vector.extract_strided_slice %12 {offsets = [2, 5, 0], sizes = [1, 1, 8], strides = [1, 1, 1]} : vector<7x7x8xf32> to vector<1x1x8xf32>
    %207 = vector.broadcast %206 : vector<1x1x8xf32> to vector<8x8x8xf32>
    %208 = arith.mulf %205, %207 : vector<8x8x8xf32>
    %209 = arith.addf %204, %208 : vector<8x8x8xf32>
    %210 = vector.extract_strided_slice %194 {offsets = [3, 0, 0], sizes = [8, 8, 8], strides = [1, 1, 1]} : vector<14x8x8xf32> to vector<8x8x8xf32>
    %211 = vector.extract_strided_slice %12 {offsets = [3, 5, 0], sizes = [1, 1, 8], strides = [1, 1, 1]} : vector<7x7x8xf32> to vector<1x1x8xf32>
    %212 = vector.broadcast %211 : vector<1x1x8xf32> to vector<8x8x8xf32>
    %213 = arith.mulf %210, %212 : vector<8x8x8xf32>
    %214 = arith.addf %209, %213 : vector<8x8x8xf32>
    %215 = vector.extract_strided_slice %194 {offsets = [4, 0, 0], sizes = [8, 8, 8], strides = [1, 1, 1]} : vector<14x8x8xf32> to vector<8x8x8xf32>
    %216 = vector.extract_strided_slice %12 {offsets = [4, 5, 0], sizes = [1, 1, 8], strides = [1, 1, 1]} : vector<7x7x8xf32> to vector<1x1x8xf32>
    %217 = vector.broadcast %216 : vector<1x1x8xf32> to vector<8x8x8xf32>
    %218 = arith.mulf %215, %217 : vector<8x8x8xf32>
    %219 = arith.addf %214, %218 : vector<8x8x8xf32>
    %220 = vector.extract_strided_slice %194 {offsets = [5, 0, 0], sizes = [8, 8, 8], strides = [1, 1, 1]} : vector<14x8x8xf32> to vector<8x8x8xf32>
    %221 = vector.extract_strided_slice %12 {offsets = [5, 5, 0], sizes = [1, 1, 8], strides = [1, 1, 1]} : vector<7x7x8xf32> to vector<1x1x8xf32>
    %222 = vector.broadcast %221 : vector<1x1x8xf32> to vector<8x8x8xf32>
    %223 = arith.mulf %220, %222 : vector<8x8x8xf32>
    %224 = arith.addf %219, %223 : vector<8x8x8xf32>
    %225 = vector.extract_strided_slice %194 {offsets = [6, 0, 0], sizes = [8, 8, 8], strides = [1, 1, 1]} : vector<14x8x8xf32> to vector<8x8x8xf32>
    %226 = vector.extract_strided_slice %12 {offsets = [6, 5, 0], sizes = [1, 1, 8], strides = [1, 1, 1]} : vector<7x7x8xf32> to vector<1x1x8xf32>
    %227 = vector.broadcast %226 : vector<1x1x8xf32> to vector<8x8x8xf32>
    %228 = arith.mulf %225, %227 : vector<8x8x8xf32>
    %229 = arith.addf %224, %228 : vector<8x8x8xf32>
    %230 = vector.extract_strided_slice %11 {offsets = [0, 6, 0], sizes = [14, 8, 8], strides = [1, 1, 1]} : vector<14x14x8xf32> to vector<14x8x8xf32>
    %231 = vector.extract_strided_slice %230 {offsets = [0, 0, 0], sizes = [8, 8, 8], strides = [1, 1, 1]} : vector<14x8x8xf32> to vector<8x8x8xf32>
    %232 = vector.extract_strided_slice %12 {offsets = [0, 6, 0], sizes = [1, 1, 8], strides = [1, 1, 1]} : vector<7x7x8xf32> to vector<1x1x8xf32>
    %233 = vector.broadcast %232 : vector<1x1x8xf32> to vector<8x8x8xf32>
    %234 = arith.mulf %231, %233 : vector<8x8x8xf32>
    %235 = arith.addf %229, %234 : vector<8x8x8xf32>
    %236 = vector.extract_strided_slice %230 {offsets = [1, 0, 0], sizes = [8, 8, 8], strides = [1, 1, 1]} : vector<14x8x8xf32> to vector<8x8x8xf32>
    %237 = vector.extract_strided_slice %12 {offsets = [1, 6, 0], sizes = [1, 1, 8], strides = [1, 1, 1]} : vector<7x7x8xf32> to vector<1x1x8xf32>
    %238 = vector.broadcast %237 : vector<1x1x8xf32> to vector<8x8x8xf32>
    %239 = arith.mulf %236, %238 : vector<8x8x8xf32>
    %240 = arith.addf %235, %239 : vector<8x8x8xf32>
    %241 = vector.extract_strided_slice %230 {offsets = [2, 0, 0], sizes = [8, 8, 8], strides = [1, 1, 1]} : vector<14x8x8xf32> to vector<8x8x8xf32>
    %242 = vector.extract_strided_slice %12 {offsets = [2, 6, 0], sizes = [1, 1, 8], strides = [1, 1, 1]} : vector<7x7x8xf32> to vector<1x1x8xf32>
    %243 = vector.broadcast %242 : vector<1x1x8xf32> to vector<8x8x8xf32>
    %244 = arith.mulf %241, %243 : vector<8x8x8xf32>
    %245 = arith.addf %240, %244 : vector<8x8x8xf32>
    %246 = vector.extract_strided_slice %230 {offsets = [3, 0, 0], sizes = [8, 8, 8], strides = [1, 1, 1]} : vector<14x8x8xf32> to vector<8x8x8xf32>
    %247 = vector.extract_strided_slice %12 {offsets = [3, 6, 0], sizes = [1, 1, 8], strides = [1, 1, 1]} : vector<7x7x8xf32> to vector<1x1x8xf32>
    %248 = vector.broadcast %247 : vector<1x1x8xf32> to vector<8x8x8xf32>
    %249 = arith.mulf %246, %248 : vector<8x8x8xf32>
    %250 = arith.addf %245, %249 : vector<8x8x8xf32>
    %251 = vector.extract_strided_slice %230 {offsets = [4, 0, 0], sizes = [8, 8, 8], strides = [1, 1, 1]} : vector<14x8x8xf32> to vector<8x8x8xf32>
    %252 = vector.extract_strided_slice %12 {offsets = [4, 6, 0], sizes = [1, 1, 8], strides = [1, 1, 1]} : vector<7x7x8xf32> to vector<1x1x8xf32>
    %253 = vector.broadcast %252 : vector<1x1x8xf32> to vector<8x8x8xf32>
    %254 = arith.mulf %251, %253 : vector<8x8x8xf32>
    %255 = arith.addf %250, %254 : vector<8x8x8xf32>
    %256 = vector.extract_strided_slice %230 {offsets = [5, 0, 0], sizes = [8, 8, 8], strides = [1, 1, 1]} : vector<14x8x8xf32> to vector<8x8x8xf32>
    %257 = vector.extract_strided_slice %12 {offsets = [5, 6, 0], sizes = [1, 1, 8], strides = [1, 1, 1]} : vector<7x7x8xf32> to vector<1x1x8xf32>
    %258 = vector.broadcast %257 : vector<1x1x8xf32> to vector<8x8x8xf32>
    %259 = arith.mulf %256, %258 : vector<8x8x8xf32>
    %260 = arith.addf %255, %259 : vector<8x8x8xf32>
    %261 = vector.extract_strided_slice %230 {offsets = [6, 0, 0], sizes = [8, 8, 8], strides = [1, 1, 1]} : vector<14x8x8xf32> to vector<8x8x8xf32>
    %262 = vector.extract_strided_slice %12 {offsets = [6, 6, 0], sizes = [1, 1, 8], strides = [1, 1, 1]} : vector<7x7x8xf32> to vector<1x1x8xf32>
    %263 = vector.broadcast %262 : vector<1x1x8xf32> to vector<8x8x8xf32>
    %264 = arith.mulf %261, %263 : vector<8x8x8xf32>
    %265 = arith.addf %260, %264 : vector<8x8x8xf32>
    %c0_18 = arith.constant 0 : index
    %c0_19 = arith.constant 0 : index
    %c0_20 = arith.constant 0 : index
    %266 = vector.load %arg6[%c0_18, %c0_19, %c0_20] : memref<1x1x8xf32, #tpu.memory_space<vmem>>, vector<1x1x8xf32>
    %267 = vector.broadcast %266 : vector<1x1x8xf32> to vector<8x8x8xf32>
    %268 = arith.addf %265, %267 : vector<8x8x8xf32>
    %269 = vector.shape_cast %268 : vector<8x8x8xf32> to vector<64x8xf32>
    %c0_21 = arith.constant 0 : index
    %c0_22 = arith.constant 0 : index
    %270 = vector.load %arg7[%c0_21, %c0_22] : memref<1x8xf32, #tpu.memory_space<vmem>>, vector<1x8xf32>
    %c0_23 = arith.constant 0 : index
    %c0_24 = arith.constant 0 : index
    %271 = vector.load %arg8[%c0_23, %c0_24] : memref<1x8xf32, #tpu.memory_space<vmem>>, vector<1x8xf32>
    %cst_25 = arith.constant dense<0.000000e+00> : vector<64xf32>
    %272 = vector.multi_reduction <add>, %269, %cst_25 [1] : vector<64x8xf32> to vector<64xf32>
    %273 = vector.shape_cast %272 : vector<64xf32> to vector<64x1xf32>
    %cst_26 = arith.constant 8.000000e+00 : f32
    %274 = vector.broadcast %cst_26 : f32 to vector<64x1xf32>
    %275 = arith.divf %273, %274 : vector<64x1xf32>
    %276 = vector.broadcast %275 : vector<64x1xf32> to vector<64x8xf32>
    %277 = arith.subf %269, %276 : vector<64x8xf32>
    %278 = arith.mulf %277, %277 : vector<64x8xf32>
    %cst_27 = arith.constant dense<0.000000e+00> : vector<64xf32>
    %279 = vector.multi_reduction <add>, %278, %cst_27 [1] : vector<64x8xf32> to vector<64xf32>
    %280 = vector.shape_cast %279 : vector<64xf32> to vector<64x1xf32>
    %cst_28 = arith.constant 8.000000e+00 : f32
    %281 = vector.broadcast %cst_28 : f32 to vector<64x1xf32>
    %282 = arith.divf %280, %281 : vector<64x1xf32>
    %283 = vector.broadcast %275 : vector<64x1xf32> to vector<64x8xf32>
    %284 = arith.subf %269, %283 : vector<64x8xf32>
    %cst_29 = arith.constant 9.99999974E-6 : f32
    %285 = vector.broadcast %cst_29 : f32 to vector<64x1xf32>
    %286 = arith.addf %282, %285 : vector<64x1xf32>
    %287 = math.rsqrt %286 : vector<64x1xf32>
    %288 = vector.broadcast %287 : vector<64x1xf32> to vector<64x8xf32>
    %289 = arith.mulf %284, %288 : vector<64x8xf32>
    %290 = vector.broadcast %270 : vector<1x8xf32> to vector<64x8xf32>
    %291 = arith.mulf %289, %290 : vector<64x8xf32>
    %292 = vector.broadcast %271 : vector<1x8xf32> to vector<64x8xf32>
    %293 = arith.addf %291, %292 : vector<64x8xf32>
    %c0_30 = arith.constant 0 : index
    %c0_31 = arith.constant 0 : index
    %294 = vector.load %arg9[%c0_30, %c0_31] : memref<8x32xf32, #tpu.memory_space<vmem>>, vector<8x32xf32>
    %cst_32 = arith.constant dense<0.000000e+00> : vector<64x32xf32>
    %295 = tpu.matmul %293, %294, %cst_32 {dimension_numbers = #tpu.dot_dimension_numbers<[1], [0], [0], [1], [0, 0, 1, 1], [], []>} : vector<64x8xf32>, vector<8x32xf32>, vector<64x32xf32> -> vector<64x32xf32>
    %c0_33 = arith.constant 0 : index
    %c0_34 = arith.constant 0 : index
    %296 = vector.load %arg10[%c0_33, %c0_34] : memref<1x32xf32, #tpu.memory_space<vmem>>, vector<1x32xf32>
    %297 = vector.broadcast %296 : vector<1x32xf32> to vector<64x32xf32>
    %298 = arith.addf %295, %297 : vector<64x32xf32>
    %cst_35 = arith.constant 5.000000e-01 : f32
    %299 = vector.broadcast %cst_35 : f32 to vector<64x32xf32>
    %300 = arith.mulf %299, %298 : vector<64x32xf32>
    %cst_36 = arith.constant 0.707106769 : f32
    %301 = vector.broadcast %cst_36 : f32 to vector<64x32xf32>
    %302 = arith.mulf %298, %301 : vector<64x32xf32>
    %303 = math.absf %302 : vector<64x32xf32>
    %cst_37 = arith.constant 0.327591091 : f32
    %304 = vector.broadcast %cst_37 : f32 to vector<64x32xf32>
    %305 = arith.mulf %304, %303 : vector<64x32xf32>
    %cst_38 = arith.constant 1.000000e+00 : f32
    %306 = vector.broadcast %cst_38 : f32 to vector<64x32xf32>
    %307 = arith.addf %306, %305 : vector<64x32xf32>
    %cst_39 = arith.constant 1.000000e+00 : f32
    %308 = vector.broadcast %cst_39 : f32 to vector<64x32xf32>
    %309 = arith.divf %308, %307 : vector<64x32xf32>
    %cst_40 = arith.constant 1.06140542 : f32
    %310 = vector.broadcast %cst_40 : f32 to vector<64x32xf32>
    %311 = arith.mulf %310, %309 : vector<64x32xf32>
    %cst_41 = arith.constant -1.45315206 : f32
    %312 = vector.broadcast %cst_41 : f32 to vector<64x32xf32>
    %313 = arith.addf %311, %312 : vector<64x32xf32>
    %314 = arith.mulf %313, %309 : vector<64x32xf32>
    %cst_42 = arith.constant 1.42141378 : f32
    %315 = vector.broadcast %cst_42 : f32 to vector<64x32xf32>
    %316 = arith.addf %314, %315 : vector<64x32xf32>
    %317 = arith.mulf %316, %309 : vector<64x32xf32>
    %cst_43 = arith.constant -0.284496725 : f32
    %318 = vector.broadcast %cst_43 : f32 to vector<64x32xf32>
    %319 = arith.addf %317, %318 : vector<64x32xf32>
    %320 = arith.mulf %319, %309 : vector<64x32xf32>
    %cst_44 = arith.constant 0.254829586 : f32
    %321 = vector.broadcast %cst_44 : f32 to vector<64x32xf32>
    %322 = arith.addf %320, %321 : vector<64x32xf32>
    %323 = arith.mulf %322, %309 : vector<64x32xf32>
    %cst_45 = arith.constant 0.000000e+00 : f32
    %324 = vector.broadcast %cst_45 : f32 to vector<64x32xf32>
    %325 = arith.subf %324, %303 : vector<64x32xf32>
    %326 = arith.mulf %325, %303 : vector<64x32xf32>
    %327 = math.exp %326 : vector<64x32xf32>
    %328 = arith.mulf %323, %327 : vector<64x32xf32>
    %cst_46 = arith.constant 1.000000e+00 : f32
    %329 = vector.broadcast %cst_46 : f32 to vector<64x32xf32>
    %330 = arith.subf %329, %328 : vector<64x32xf32>
    %cst_47 = arith.constant 0.000000e+00 : f32
    %331 = vector.broadcast %cst_47 : f32 to vector<64x32xf32>
    %332 = arith.cmpf olt, %302, %331 : vector<64x32xf32>
    %cst_48 = arith.constant 0.000000e+00 : f32
    %333 = vector.broadcast %cst_48 : f32 to vector<64x32xf32>
    %334 = arith.subf %333, %330 : vector<64x32xf32>
    %335 = arith.select %332, %334, %330 : vector<64x32xi1>, vector<64x32xf32>
    %cst_49 = arith.constant 1.000000e+00 : f32
    %336 = vector.broadcast %cst_49 : f32 to vector<64x32xf32>
    %337 = arith.addf %336, %335 : vector<64x32xf32>
    %338 = arith.mulf %300, %337 : vector<64x32xf32>
    %c0_50 = arith.constant 0 : index
    %c0_51 = arith.constant 0 : index
    %339 = vector.load %arg11[%c0_50, %c0_51] : memref<32x8xf32, #tpu.memory_space<vmem>>, vector<32x8xf32>
    %cst_52 = arith.constant dense<0.000000e+00> : vector<64x8xf32>
    %340 = tpu.matmul %338, %339, %cst_52 {dimension_numbers = #tpu.dot_dimension_numbers<[1], [0], [0], [1], [0, 0, 1, 1], [], []>} : vector<64x32xf32>, vector<32x8xf32>, vector<64x8xf32> -> vector<64x8xf32>
    %c0_53 = arith.constant 0 : index
    %c0_54 = arith.constant 0 : index
    %341 = vector.load %arg12[%c0_53, %c0_54] : memref<1x8xf32, #tpu.memory_space<vmem>>, vector<1x8xf32>
    %342 = vector.broadcast %341 : vector<1x8xf32> to vector<64x8xf32>
    %343 = arith.addf %340, %342 : vector<64x8xf32>
    %c0_55 = arith.constant 0 : index
    %c0_56 = arith.constant 0 : index
    %344 = vector.load %arg13[%c0_55, %c0_56] : memref<1x8xf32, #tpu.memory_space<vmem>>, vector<1x8xf32>
    %345 = vector.broadcast %344 : vector<1x8xf32> to vector<64x8xf32>
    %346 = arith.mulf %343, %345 : vector<64x8xf32>
    %347 = vector.shape_cast %3 : vector<8x8x8xf32> to vector<64x8xf32>
    %348 = arith.addf %346, %347 : vector<64x8xf32>
    %349 = vector.shape_cast %348 : vector<64x8xf32> to vector<8x8x8xf32>
    %c0_57 = arith.constant 0 : index
    %c0_58 = arith.constant 0 : index
    %c0_59 = arith.constant 0 : index
    %c0_60 = arith.constant 0 : index
    %350 = vector.load %arg14[%c0_57, %c0_58, %c0_59, %c0_60] : memref<1x8x8x8xf32, #tpu.memory_space<vmem>>, vector<1x8x8x8xf32>
    %351 = vector.shape_cast %350 : vector<1x8x8x8xf32> to vector<8x8x8xf32>
    %352 = vector.shape_cast %349 : vector<8x8x8xf32> to vector<1x8x8x8xf32>
    tpu.vector_store %arg14[%c0_57, %c0_58, %c0_59, %c0_60], %352 {strides = array<i32>} : memref<1x8x8x8xf32, #tpu.memory_space<vmem>>, vector<1x8x8x8xf32>,
    return
  }
  func.func @transform_0(%arg0: i32, %arg1: i32) -> (i32, i32, i32, i32) {
    %c1_i32 = arith.constant 1 : i32
    %0 = arith.subi %arg1, %c1_i32 : i32
    %c0_i32 = arith.constant 0 : i32
    %1 = arith.maxsi %0, %c0_i32 : i32
    %c0_i32_0 = arith.constant 0 : i32
    %c0_i32_1 = arith.constant 0 : i32
    %c0_i32_2 = arith.constant 0 : i32
    return %arg0, %1, %c0_i32_0, %c0_i32_1 : i32, i32, i32, i32
  }
  func.func @transform_1(%arg0: i32, %arg1: i32) -> (i32, i32, i32, i32) {
    %c0_i32 = arith.constant 0 : i32
    %c0_i32_0 = arith.constant 0 : i32
    %c0_i32_1 = arith.constant 0 : i32
    return %arg0, %arg1, %c0_i32, %c0_i32_0 : i32, i32, i32, i32
  }
  func.func @transform_2(%arg0: i32, %arg1: i32) -> (i32, i32, i32, i32) {
    %c1_i32 = arith.constant 1 : i32
    %0 = arith.addi %arg1, %c1_i32 : i32
    %c0_i32 = arith.constant 0 : i32
    %1 = arith.minsi %0, %c0_i32 : i32
    %c0_i32_0 = arith.constant 0 : i32
    %c0_i32_1 = arith.constant 0 : i32
    %c0_i32_2 = arith.constant 0 : i32
    return %arg0, %1, %c0_i32_0, %c0_i32_1 : i32, i32, i32, i32
  }
  func.func @transform_3(%arg0: i32, %arg1: i32) -> (i32, i32, i32) {
    %c0_i32 = arith.constant 0 : i32
    %c0_i32_0 = arith.constant 0 : i32
    %c0_i32_1 = arith.constant 0 : i32
    %c0_i32_2 = arith.constant 0 : i32
    return %c0_i32, %c0_i32_0, %c0_i32_1 : i32, i32, i32
  }
  func.func @transform_4(%arg0: i32, %arg1: i32) -> (i32, i32, i32) {
    %c0_i32 = arith.constant 0 : i32
    %c0_i32_0 = arith.constant 0 : i32
    %c0_i32_1 = arith.constant 0 : i32
    %c0_i32_2 = arith.constant 0 : i32
    return %c0_i32, %c0_i32_0, %c0_i32_1 : i32, i32, i32
  }
  func.func @transform_5(%arg0: i32, %arg1: i32) -> (i32, i32) {
    %c0_i32 = arith.constant 0 : i32
    %c0_i32_0 = arith.constant 0 : i32
    %c0_i32_1 = arith.constant 0 : i32
    return %c0_i32, %c0_i32_0 : i32, i32
  }
  func.func @transform_6(%arg0: i32, %arg1: i32) -> (i32, i32) {
    %c0_i32 = arith.constant 0 : i32
    %c0_i32_0 = arith.constant 0 : i32
    %c0_i32_1 = arith.constant 0 : i32
    return %c0_i32, %c0_i32_0 : i32, i32
  }
  func.func @transform_7(%arg0: i32, %arg1: i32) -> (i32, i32) {
    %c0_i32 = arith.constant 0 : i32
    %c0_i32_0 = arith.constant 0 : i32
    %c0_i32_1 = arith.constant 0 : i32
    return %c0_i32, %c0_i32_0 : i32, i32
  }
  func.func @transform_8(%arg0: i32, %arg1: i32) -> (i32, i32) {
    %c0_i32 = arith.constant 0 : i32
    %c0_i32_0 = arith.constant 0 : i32
    %c0_i32_1 = arith.constant 0 : i32
    return %c0_i32, %c0_i32_0 : i32, i32
  }
  func.func @transform_9(%arg0: i32, %arg1: i32) -> (i32, i32) {
    %c0_i32 = arith.constant 0 : i32
    %c0_i32_0 = arith.constant 0 : i32
    %c0_i32_1 = arith.constant 0 : i32
    return %c0_i32, %c0_i32_0 : i32, i32
  }
  func.func @transform_10(%arg0: i32, %arg1: i32) -> (i32, i32) {
    %c0_i32 = arith.constant 0 : i32
    %c0_i32_0 = arith.constant 0 : i32
    %c0_i32_1 = arith.constant 0 : i32
    return %c0_i32, %c0_i32_0 : i32, i32
  }
  func.func @transform_11(%arg0: i32, %arg1: i32) -> (i32, i32) {
    %c0_i32 = arith.constant 0 : i32
    %c0_i32_0 = arith.constant 0 : i32
    %c0_i32_1 = arith.constant 0 : i32
    return %c0_i32, %c0_i32_0 : i32, i32
  }
  func.func @transform_12(%arg0: i32, %arg1: i32) -> (i32, i32, i32, i32) {
    %c0_i32 = arith.constant 0 : i32
    %c0_i32_0 = arith.constant 0 : i32
    %c0_i32_1 = arith.constant 0 : i32
    return %arg0, %arg1, %c0_i32, %c0_i32_0 : i32, i32, i32, i32
  }
}

</mosaic_0001>

<llo_original>
// kernel: convnext_stage_forward.3
$region0: #{convnext_stage_forward.3}
  #allocation0 [shape = 'u32[]', space=smem, size = 0x4, offset = 0x4, fixed_abs, tag = 'smem constant byte address 0x4 - core index']
  #allocation1 [shape = 'u32[144,128]{1,0:T(1,128)}', space=vmem, size = 0x12000, scoped, tag = 'internal scratch']
  %s0 = inlined_call_operand.vmem [shape: f32[4,128,4], index: 0, kind: input, shape index: {}]
  %s1 = inlined_call_operand.vmem [shape: f32[4,4,8], index: 1, kind: input, shape index: {}]
  %s2 = inlined_call_operand.vmem [shape: f32[1,8], index: 2, kind: input, shape index: {}]
  %s3 = inlined_call_operand.vmem [shape: f32[1,4], index: 3, kind: input, shape index: {}]
  %s4 = inlined_call_operand.vmem [shape: f32[1,4], index: 4, kind: input, shape index: {}]
  %s5 = inlined_call_operand.vmem [shape: f32[128,8], index: 5, kind: output, shape index: {}]
  %s6 = sld [smem:[#allocation0]]
  $region30: #{convnext_stage_forward.3} parent=0
    _
  %s8 = ssub.s32 1, %s6
  %s9 = scalar_select 0, %s8, %s6
  // Predicated region
  $region2: #{convnext_stage_forward.3} parent=0 // pred_check
    _
  $region3: #{convnext_stage_forward.3} parent=0 // pred_check_branch
    %11 = sbr.rel (0) target = $region5
  $region4: #{convnext_stage_forward.3} parent=0 // pred_region
    _
  $region5: #{convnext_stage_forward.3} parent=0 // pred_fallthru
    _
  // Predicated region
  $region6: #{convnext_stage_forward.3} parent=0 // pred_check
    _
  $region7: #{convnext_stage_forward.3} parent=0 // pred_check_branch
    %13 = sbr.rel (0) target = $region9
  $region8: #{convnext_stage_forward.3} parent=0 // pred_region
    _
  $region9: #{convnext_stage_forward.3} parent=0 // pred_fallthru
    _
  // Predicated region
  $region10: #{convnext_stage_forward.3} parent=0 // pred_check
    _
  $region11: #{convnext_stage_forward.3} parent=0 // pred_check_branch
    %15 = sbr.rel (0) target = $region13
  $region12: #{convnext_stage_forward.3} parent=0 // pred_region
    _
  $region13: #{convnext_stage_forward.3} parent=0 // pred_fallthru
    _
  // Predicated region
  $region14: #{convnext_stage_forward.3} parent=0 // pred_check
    _
  $region15: #{convnext_stage_forward.3} parent=0 // pred_check_branch
    %17 = sbr.rel (0) target = $region17
  $region16: #{convnext_stage_forward.3} parent=0 // pred_region
    _
  $region17: #{convnext_stage_forward.3} parent=0 // pred_fallthru
    _
  // Predicated region
  $region18: #{convnext_stage_forward.3} parent=0 // pred_check
    _
  $region19: #{convnext_stage_forward.3} parent=0 // pred_check_branch
    %19 = sbr.rel (0) target = $region21
  $region20: #{convnext_stage_forward.3} parent=0 // pred_region
    _
  $region21: #{convnext_stage_forward.3} parent=0 // pred_fallthru
    _
  %v20 = vld [vmem:[%s0] sm:$0xff]
  %v21 = vld [vmem:[%s0 + $0x8] sm:$0xff]
  %v22 = vld [vmem:[%s0 + $0x10] sm:$0xff]
  %v23 = vld [vmem:[%s0 + $0x18] sm:$0xff]
  %v24 = vld [vmem:[%s0 + $0x20] sm:$0xff]
  %v25 = vld [vmem:[%s0 + $0x28] sm:$0xff]
  %v26 = vld [vmem:[%s0 + $0x30] sm:$0xff]
  %v27 = vld [vmem:[%s0 + $0x38] sm:$0xff]
  %v28 = vld [vmem:[%s0 + $0x40] sm:$0xff]
  %v29 = vld [vmem:[%s0 + $0x48] sm:$0xff]
  %v30 = vld [vmem:[%s0 + $0x50] sm:$0xff]
  %v31 = vld [vmem:[%s0 + $0x58] sm:$0xff]
  %v32 = vld [vmem:[%s0 + $0x60] sm:$0xff]
  %v33 = vld [vmem:[%s0 + $0x68] sm:$0xff]
  %v34 = vld [vmem:[%s0 + $0x70] sm:$0xff]
  %v35 = vld [vmem:[%s0 + $0x78] sm:$0xff]
  %v36 = vld [vmem:[%s0 + $0x80] sm:$0xff]
  %v37 = vld [vmem:[%s0 + $0x88] sm:$0xff]
  %v38 = vld [vmem:[%s0 + $0x90] sm:$0xff]
  %v39 = vld [vmem:[%s0 + $0x98] sm:$0xff]
  %v40 = vld [vmem:[%s0 + $0xa0] sm:$0xff]
  %v41 = vld [vmem:[%s0 + $0xa8] sm:$0xff]
  %v42 = vld [vmem:[%s0 + $0xb0] sm:$0xff]
  %v43 = vld [vmem:[%s0 + $0xb8] sm:$0xff]
  %v44 = vld [vmem:[%s0 + $0xc0] sm:$0xff]
  %v45 = vld [vmem:[%s0 + $0xc8] sm:$0xff]
  %v46 = vld [vmem:[%s0 + $0xd0] sm:$0xff]
  %v47 = vld [vmem:[%s0 + $0xd8] sm:$0xff]
  %v48 = vld [vmem:[%s0 + $0xe0] sm:$0xff]
  %v49 = vld [vmem:[%s0 + $0xe8] sm:$0xff]
  %v50 = vld [vmem:[%s0 + $0xf0] sm:$0xff]
  %v51 = vld [vmem:[%s0 + $0xf8] sm:$0xff]
  %v52 = vld [vmem:[%s0 + $0x100] sm:$0xff]
  %v53 = vld [vmem:[%s0 + $0x108] sm:$0xff]
  %v54 = vld [vmem:[%s0 + $0x110] sm:$0xff]
  %v55 = vld [vmem:[%s0 + $0x118] sm:$0xff]
  %v56 = vld [vmem:[%s0 + $0x120] sm:$0xff]
  %v57 = vld [vmem:[%s0 + $0x128] sm:$0xff]
  %v58 = vld [vmem:[%s0 + $0x130] sm:$0xff]
  %v59 = vld [vmem:[%s0 + $0x138] sm:$0xff]
  %v60 = vld [vmem:[%s0 + $0x140] sm:$0xff]
  %v61 = vld [vmem:[%s0 + $0x148] sm:$0xff]
  %v62 = vld [vmem:[%s0 + $0x150] sm:$0xff]
  %v63 = vld [vmem:[%s0 + $0x158] sm:$0xff]
  %v64 = vld [vmem:[%s0 + $0x160] sm:$0xff]
  %v65 = vld [vmem:[%s0 + $0x168] sm:$0xff]
  %v66 = vld [vmem:[%s0 + $0x170] sm:$0xff]
  %v67 = vld [vmem:[%s0 + $0x178] sm:$0xff]
  %v68 = vld [vmem:[%s0 + $0x180] sm:$0xff]
  %v69 = vld [vmem:[%s0 + $0x188] sm:$0xff]
  %v70 = vld [vmem:[%s0 + $0x190] sm:$0xff]
  %v71 = vld [vmem:[%s0 + $0x198] sm:$0xff]
  %v72 = vld [vmem:[%s0 + $0x1a0] sm:$0xff]
  %v73 = vld [vmem:[%s0 + $0x1a8] sm:$0xff]
  %v74 = vld [vmem:[%s0 + $0x1b0] sm:$0xff]
  %v75 = vld [vmem:[%s0 + $0x1b8] sm:$0xff]
  %v76 = vld [vmem:[%s0 + $0x1c0] sm:$0xff]
  %v77 = vld [vmem:[%s0 + $0x1c8] sm:$0xff]
  %v78 = vld [vmem:[%s0 + $0x1d0] sm:$0xff]
  %v79 = vld [vmem:[%s0 + $0x1d8] sm:$0xff]
  %v80 = vld [vmem:[%s0 + $0x1e0] sm:$0xff]
  %v81 = vld [vmem:[%s0 + $0x1e8] sm:$0xff]
  %v82 = vld [vmem:[%s0 + $0x1f0] sm:$0xff]
  %v83 = vld [vmem:[%s0 + $0x1f8] sm:$0xff]
  %v84 = vld [vmem:[%s3] sm:$0x1]
  %v85 = vld [vmem:[%s4] sm:$0x1]
  %vm86 = vcmask 31744
  %v87 = vsel %vm86, %v20, 0.0
  %88 = vadd.xlane.f32.xlu0 %v87
  %v89 = vpop.xlane.xlu0 %88
  %v90 = vsel %vm86, %v21, 0.0
  %91 = vadd.xlane.f32.xlu0 %v90
  %v92 = vpop.xlane.xlu0 %91
  %v93 = vsel %vm86, %v22, 0.0
  %94 = vadd.xlane.f32.xlu0 %v93
  %v95 = vpop.xlane.xlu0 %94
  %v96 = vsel %vm86, %v23, 0.0
  %97 = vadd.xlane.f32.xlu0 %v96
  %v98 = vpop.xlane.xlu0 %97
  %v99 = vsel %vm86, %v24, 0.0
  %100 = vadd.xlane.f32.xlu0 %v99
  %v101 = vpop.xlane.xlu0 %100
  %v102 = vsel %vm86, %v25, 0.0
  %103 = vadd.xlane.f32.xlu0 %v102
  %v104 = vpop.xlane.xlu0 %103
  %v105 = vsel %vm86, %v26, 0.0
  %106 = vadd.xlane.f32.xlu0 %v105
  %v107 = vpop.xlane.xlu0 %106
  %v108 = vsel %vm86, %v27, 0.0
  %109 = vadd.xlane.f32.xlu0 %v108
  %v110 = vpop.xlane.xlu0 %109
  %v111 = vsel %vm86, %v28, 0.0
  %112 = vadd.xlane.f32.xlu0 %v111
  %v113 = vpop.xlane.xlu0 %112
  %v114 = vsel %vm86, %v29, 0.0
  %115 = vadd.xlane.f32.xlu0 %v114
  %v116 = vpop.xlane.xlu0 %115
  %v117 = vsel %vm86, %v30, 0.0
  %118 = vadd.xlane.f32.xlu0 %v117
  %v119 = vpop.xlane.xlu0 %118
  %v120 = vsel %vm86, %v31, 0.0
  %121 = vadd.xlane.f32.xlu0 %v120
  %v122 = vpop.xlane.xlu0 %121
  %v123 = vsel %vm86, %v32, 0.0
  %124 = vadd.xlane.f32.xlu0 %v123
  %v125 = vpop.xlane.xlu0 %124
  %v126 = vsel %vm86, %v33, 0.0
  %127 = vadd.xlane.f32.xlu0 %v126
  %v128 = vpop.xlane.xlu0 %127
  %v129 = vsel %vm86, %v34, 0.0
  %130 = vadd.xlane.f32.xlu0 %v129
  %v131 = vpop.xlane.xlu0 %130
  %v132 = vsel %vm86, %v35, 0.0
  %133 = vadd.xlane.f32.xlu0 %v132
  %v134 = vpop.xlane.xlu0 %133
  %v135 = vsel %vm86, %v36, 0.0
  %136 = vadd.xlane.f32.xlu0 %v135
  %v137 = vpop.xlane.xlu0 %136
  %v138 = vsel %vm86, %v37, 0.0
  %139 = vadd.xlane.f32.xlu0 %v138
  %v140 = vpop.xlane.xlu0 %139
  %v141 = vsel %vm86, %v38, 0.0
  %142 = vadd.xlane.f32.xlu0 %v141
  %v143 = vpop.xlane.xlu0 %142
  %v144 = vsel %vm86, %v39, 0.0
  %145 = vadd.xlane.f32.xlu0 %v144
  %v146 = vpop.xlane.xlu0 %145
  %v147 = vsel %vm86, %v40, 0.0
  %148 = vadd.xlane.f32.xlu0 %v147
  %v149 = vpop.xlane.xlu0 %148
  %v150 = vsel %vm86, %v41, 0.0
  %151 = vadd.xlane.f32.xlu0 %v150
  %v152 = vpop.xlane.xlu0 %151
  %v153 = vsel %vm86, %v42, 0.0
  %154 = vadd.xlane.f32.xlu0 %v153
  %v155 = vpop.xlane.xlu0 %154
  %v156 = vsel %vm86, %v43, 0.0
  %157 = vadd.xlane.f32.xlu0 %v156
  %v158 = vpop.xlane.xlu0 %157
  %v159 = vsel %vm86, %v44, 0.0
  %160 = vadd.xlane.f32.xlu0 %v159
  %v161 = vpop.xlane.xlu0 %160
  %v162 = vsel %vm86, %v45, 0.0
  %163 = vadd.xlane.f32.xlu0 %v162
  %v164 = vpop.xlane.xlu0 %163
  %v165 = vsel %vm86, %v46, 0.0
  %166 = vadd.xlane.f32.xlu0 %v165
  %v167 = vpop.xlane.xlu0 %166
  %v168 = vsel %vm86, %v47, 0.0
  %169 = vadd.xlane.f32.xlu0 %v168
  %v170 = vpop.xlane.xlu0 %169
  %v171 = vsel %vm86, %v48, 0.0
  %172 = vadd.xlane.f32.xlu0 %v171
  %v173 = vpop.xlane.xlu0 %172
  %v174 = vsel %vm86, %v49, 0.0
  %175 = vadd.xlane.f32.xlu0 %v174
  %v176 = vpop.xlane.xlu0 %175
  %v177 = vsel %vm86, %v50, 0.0
  %178 = vadd.xlane.f32.xlu0 %v177
  %v179 = vpop.xlane.xlu0 %178
  %v180 = vsel %vm86, %v51, 0.0
  %181 = vadd.xlane.f32.xlu0 %v180
  %v182 = vpop.xlane.xlu0 %181
  %v183 = vsel %vm86, %v52, 0.0
  %184 = vadd.xlane.f32.xlu0 %v183
  %v185 = vpop.xlane.xlu0 %184
  %v186 = vsel %vm86, %v53, 0.0
  %187 = vadd.xlane.f32.xlu0 %v186
  %v188 = vpop.xlane.xlu0 %187
  %v189 = vsel %vm86, %v54, 0.0
  %190 = vadd.xlane.f32.xlu0 %v189
  %v191 = vpop.xlane.xlu0 %190
  %v192 = vsel %vm86, %v55, 0.0
  %193 = vadd.xlane.f32.xlu0 %v192
  %v194 = vpop.xlane.xlu0 %193
  %v195 = vsel %vm86, %v56, 0.0
  %196 = vadd.xlane.f32.xlu0 %v195
  %v197 = vpop.xlane.xlu0 %196
  %v198 = vsel %vm86, %v57, 0.0
  %199 = vadd.xlane.f32.xlu0 %v198
  %v200 = vpop.xlane.xlu0 %199
  %v201 = vsel %vm86, %v58, 0.0
  %202 = vadd.xlane.f32.xlu0 %v201
  %v203 = vpop.xlane.xlu0 %202
  %v204 = vsel %vm86, %v59, 0.0
  %205 = vadd.xlane.f32.xlu0 %v204
  %v206 = vpop.xlane.xlu0 %205
  %v207 = vsel %vm86, %v60, 0.0
  %208 = vadd.xlane.f32.xlu0 %v207
  %v209 = vpop.xlane.xlu0 %208
  %v210 = vsel %vm86, %v61, 0.0
  %211 = vadd.xlane.f32.xlu0 %v210
  %v212 = vpop.xlane.xlu0 %211
  %v213 = vsel %vm86, %v62, 0.0
  %214 = vadd.xlane.f32.xlu0 %v213
  %v215 = vpop.xlane.xlu0 %214
  %v216 = vsel %vm86, %v63, 0.0
  %217 = vadd.xlane.f32.xlu0 %v216
  %v218 = vpop.xlane.xlu0 %217
  %v219 = vsel %vm86, %v64, 0.0
  %220 = vadd.xlane.f32.xlu0 %v219
  %v221 = vpop.xlane.xlu0 %220
  %v222 = vsel %vm86, %v65, 0.0
  %223 = vadd.xlane.f32.xlu0 %v222
  %v224 = vpop.xlane.xlu0 %223
  %v225 = vsel %vm86, %v66, 0.0
  %226 = vadd.xlane.f32.xlu0 %v225
  %v227 = vpop.xlane.xlu0 %226
  %v228 = vsel %vm86, %v67, 0.0
  %229 = vadd.xlane.f32.xlu0 %v228
  %v230 = vpop.xlane.xlu0 %229
  %v231 = vsel %vm86, %v68, 0.0
  %232 = vadd.xlane.f32.xlu0 %v231
  %v233 = vpop.xlane.xlu0 %232
  %v234 = vsel %vm86, %v69, 0.0
  %235 = vadd.xlane.f32.xlu0 %v234
  %v236 = vpop.xlane.xlu0 %235
  %v237 = vsel %vm86, %v70, 0.0
  %238 = vadd.xlane.f32.xlu0 %v237
  %v239 = vpop.xlane.xlu0 %238
  %v240 = vsel %vm86, %v71, 0.0
  %241 = vadd.xlane.f32.xlu0 %v240
  %v242 = vpop.xlane.xlu0 %241
  %v243 = vsel %vm86, %v72, 0.0
  %244 = vadd.xlane.f32.xlu0 %v243
  %v245 = vpop.xlane.xlu0 %244
  %v246 = vsel %vm86, %v73, 0.0
  %247 = vadd.xlane.f32.xlu0 %v246
  %v248 = vpop.xlane.xlu0 %247
  %v249 = vsel %vm86, %v74, 0.0
  %250 = vadd.xlane.f32.xlu0 %v249
  %v251 = vpop.xlane.xlu0 %250
  %v252 = vsel %vm86, %v75, 0.0
  %253 = vadd.xlane.f32.xlu0 %v252
  %v254 = vpop.xlane.xlu0 %253
  %v255 = vsel %vm86, %v76, 0.0
  %256 = vadd.xlane.f32.xlu0 %v255
  %v257 = vpop.xlane.xlu0 %256
  %v258 = vsel %vm86, %v77, 0.0
  %259 = vadd.xlane.f32.xlu0 %v258
  %v260 = vpop.xlane.xlu0 %259
  %v261 = vsel %vm86, %v78, 0.0
  %262 = vadd.xlane.f32.xlu0 %v261
  %v263 = vpop.xlane.xlu0 %262
  %v264 = vsel %vm86, %v79, 0.0
  %265 = vadd.xlane.f32.xlu0 %v264
  %v266 = vpop.xlane.xlu0 %265
  %v267 = vsel %vm86, %v80, 0.0
  %268 = vadd.xlane.f32.xlu0 %v267
  %v269 = vpop.xlane.xlu0 %268
  %v270 = vsel %vm86, %v81, 0.0
  %271 = vadd.xlane.f32.xlu0 %v270
  %v272 = vpop.xlane.xlu0 %271
  %v273 = vsel %vm86, %v82, 0.0
  %274 = vadd.xlane.f32.xlu0 %v273
  %v275 = vpop.xlane.xlu0 %274
  %v276 = vsel %vm86, %v83, 0.0
  %277 = vadd.xlane.f32.xlu0 %v276
  %v278 = vpop.xlane.xlu0 %277
  %v279 = vrcp.pop 4.0
  %v280 = vmul.f32 %v89, %v279
  %v281 = vmul.f32 %v92, %v279
  %v282 = vmul.f32 %v95, %v279
  %v283 = vmul.f32 %v98, %v279
  %v284 = vmul.f32 %v101, %v279
  %v285 = vmul.f32 %v104, %v279
  %v286 = vmul.f32 %v107, %v279
  %v287 = vmul.f32 %v110, %v279
  %v288 = vmul.f32 %v113, %v279
  %v289 = vmul.f32 %v116, %v279
  %v290 = vmul.f32 %v119, %v279
  %v291 = vmul.f32 %v122, %v279
  %v292 = vmul.f32 %v125, %v279
  %v293 = vmul.f32 %v128, %v279
  %v294 = vmul.f32 %v131, %v279
  %v295 = vmul.f32 %v134, %v279
  %v296 = vmul.f32 %v137, %v279
  %v297 = vmul.f32 %v140, %v279
  %v298 = vmul.f32 %v143, %v279
  %v299 = vmul.f32 %v146, %v279
  %v300 = vmul.f32 %v149, %v279
  %v301 = vmul.f32 %v152, %v279
  %v302 = vmul.f32 %v155, %v279
  %v303 = vmul.f32 %v158, %v279
  %v304 = vmul.f32 %v161, %v279
  %v305 = vmul.f32 %v164, %v279
  %v306 = vmul.f32 %v167, %v279
  %v307 = vmul.f32 %v170, %v279
  %v308 = vmul.f32 %v173, %v279
  %v309 = vmul.f32 %v176, %v279
  %v310 = vmul.f32 %v179, %v279
  %v311 = vmul.f32 %v182, %v279
  %v312 = vmul.f32 %v185, %v279
  %v313 = vmul.f32 %v188, %v279
  %v314 = vmul.f32 %v191, %v279
  %v315 = vmul.f32 %v194, %v279
  %v316 = vmul.f32 %v197, %v279
  %v317 = vmul.f32 %v200, %v279
  %v318 = vmul.f32 %v203, %v279
  %v319 = vmul.f32 %v206, %v279
  %v320 = vmul.f32 %v209, %v279
  %v321 = vmul.f32 %v212, %v279
  %v322 = vmul.f32 %v215, %v279
  %v323 = vmul.f32 %v218, %v279
  %v324 = vmul.f32 %v221, %v279
  %v325 = vmul.f32 %v224, %v279
  %v326 = vmul.f32 %v227, %v279
  %v327 = vmul.f32 %v230, %v279
  %v328 = vmul.f32 %v233, %v279
  %v329 = vmul.f32 %v236, %v279
  %v330 = vmul.f32 %v239, %v279
  %v331 = vmul.f32 %v242, %v279
  %v332 = vmul.f32 %v245, %v279
  %v333 = vmul.f32 %v248, %v279
  %v334 = vmul.f32 %v251, %v279
  %v335 = vmul.f32 %v254, %v279
  %v336 = vmul.f32 %v257, %v279
  %v337 = vmul.f32 %v260, %v279
  %v338 = vmul.f32 %v263, %v279
  %v339 = vmul.f32 %v266, %v279
  %v340 = vmul.f32 %v269, %v279
  %v341 = vmul.f32 %v272, %v279
  %v342 = vmul.f32 %v275, %v279
  %v343 = vmul.f32 %v278, %v279
  %v344 = vsub.f32 %v20, %v280
  %v345 = vsub.f32 %v21, %v281
  %v346 = vsub.f32 %v22, %v282
  %v347 = vsub.f32 %v23, %v283
  %v348 = vsub.f32 %v24, %v284
  %v349 = vsub.f32 %v25, %v285
  %v350 = vsub.f32 %v26, %v286
  %v351 = vsub.f32 %v27, %v287
  %v352 = vsub.f32 %v28, %v288
  %v353 = vsub.f32 %v29, %v289
  %v354 = vsub.f32 %v30, %v290
  %v355 = vsub.f32 %v31, %v291
  %v356 = vsub.f32 %v32, %v292
  %v357 = vsub.f32 %v33, %v293
  %v358 = vsub.f32 %v34, %v294
  %v359 = vsub.f32 %v35, %v295
  %v360 = vsub.f32 %v36, %v296
  %v361 = vsub.f32 %v37, %v297
  %v362 = vsub.f32 %v38, %v298
  %v363 = vsub.f32 %v39, %v299
  %v364 = vsub.f32 %v40, %v300
  %v365 = vsub.f32 %v41, %v301
  %v366 = vsub.f32 %v42, %v302
  %v367 = vsub.f32 %v43, %v303
  %v368 = vsub.f32 %v44, %v304
  %v369 = vsub.f32 %v45, %v305
  %v370 = vsub.f32 %v46, %v306
  %v371 = vsub.f32 %v47, %v307
  %v372 = vsub.f32 %v48, %v308
  %v373 = vsub.f32 %v49, %v309
  %v374 = vsub.f32 %v50, %v310
  %v375 = vsub.f32 %v51, %v311
  %v376 = vsub.f32 %v52, %v312
  %v377 = vsub.f32 %v53, %v313
  %v378 = vsub.f32 %v54, %v314
  %v379 = vsub.f32 %v55, %v315
  %v380 = vsub.f32 %v56, %v316
  %v381 = vsub.f32 %v57, %v317
  %v382 = vsub.f32 %v58, %v318
  %v383 = vsub.f32 %v59, %v319
  %v384 = vsub.f32 %v60, %v320
  %v385 = vsub.f32 %v61, %v321
  %v386 = vsub.f32 %v62, %v322
  %v387 = vsub.f32 %v63, %v323
  %v388 = vsub.f32 %v64, %v324
  %v389 = vsub.f32 %v65, %v325
  %v390 = vsub.f32 %v66, %v326
  %v391 = vsub.f32 %v67, %v327
  %v392 = vsub.f32 %v68, %v328
  %v393 = vsub.f32 %v69, %v329
  %v394 = vsub.f32 %v70, %v330
  %v395 = vsub.f32 %v71, %v331
  %v396 = vsub.f32 %v72, %v332
  %v397 = vsub.f32 %v73, %v333
  %v398 = vsub.f32 %v74, %v334
  %v399 = vsub.f32 %v75, %v335
  %v400 = vsub.f32 %v76, %v336
  %v401 = vsub.f32 %v77, %v337
  %v402 = vsub.f32 %v78, %v338
  %v403 = vsub.f32 %v79, %v339
  %v404 = vsub.f32 %v80, %v340
  %v405 = vsub.f32 %v81, %v341
  %v406 = vsub.f32 %v82, %v342
  %v407 = vsub.f32 %v83, %v343
  %v408 = vmul.f32 %v344, %v344
  %v409 = vmul.f32 %v345, %v345
  %v410 = vmul.f32 %v346, %v346
  %v411 = vmul.f32 %v347, %v347
  %v412 = vmul.f32 %v348, %v348
  %v413 = vmul.f32 %v349, %v349
  %v414 = vmul.f32 %v350, %v350
  %v415 = vmul.f32 %v351, %v351
  %v416 = vmul.f32 %v352, %v352
  %v417 = vmul.f32 %v353, %v353
  %v418 = vmul.f32 %v354, %v354
  %v419 = vmul.f32 %v355, %v355
  %v420 = vmul.f32 %v356, %v356
  %v421 = vmul.f32 %v357, %v357
  %v422 = vmul.f32 %v358, %v358
  %v423 = vmul.f32 %v359, %v359
  %v424 = vmul.f32 %v360, %v360
  %v425 = vmul.f32 %v361, %v361
  %v426 = vmul.f32 %v362, %v362
  %v427 = vmul.f32 %v363, %v363
  %v428 = vmul.f32 %v364, %v364
  %v429 = vmul.f32 %v365, %v365
  %v430 = vmul.f32 %v366, %v366
  %v431 = vmul.f32 %v367, %v367
  %v432 = vmul.f32 %v368, %v368
  %v433 = vmul.f32 %v369, %v369
  %v434 = vmul.f32 %v370, %v370
  %v435 = vmul.f32 %v371, %v371
  %v436 = vmul.f32 %v372, %v372
  %v437 = vmul.f32 %v373, %v373
  %v438 = vmul.f32 %v374, %v374
  %v439 = vmul.f32 %v375, %v375
  %v440 = vmul.f32 %v376, %v376
  %v441 = vmul.f32 %v377, %v377
  %v442 = vmul.f32 %v378, %v378
  %v443 = vmul.f32 %v379, %v379
  %v444 = vmul.f32 %v380, %v380
  %v445 = vmul.f32 %v381, %v381
  %v446 = vmul.f32 %v382, %v382
  %v447 = vmul.f32 %v383, %v383
  %v448 = vmul.f32 %v384, %v384
  %v449 = vmul.f32 %v385, %v385
  %v450 = vmul.f32 %v386, %v386
  %v451 = vmul.f32 %v387, %v387
  %v452 = vmul.f32 %v388, %v388
  %v453 = vmul.f32 %v389, %v389
  %v454 = vmul.f32 %v390, %v390
  %v455 = vmul.f32 %v391, %v391
  %v456 = vmul.f32 %v392, %v392
  %v457 = vmul.f32 %v393, %v393
  %v458 = vmul.f32 %v394, %v394
  %v459 = vmul.f32 %v395, %v395
  %v460 = vmul.f32 %v396, %v396
  %v461 = vmul.f32 %v397, %v397
  %v462 = vmul.f32 %v398, %v398
  %v463 = vmul.f32 %v399, %v399
  %v464 = vmul.f32 %v400, %v400
  %v465 = vmul.f32 %v401, %v401
  %v466 = vmul.f32 %v402, %v402
  %v467 = vmul.f32 %v403, %v403
  %v468 = vmul.f32 %v404, %v404
  %v469 = vmul.f32 %v405, %v405
  %v470 = vmul.f32 %v406, %v406
  %v471 = vmul.f32 %v407, %v407
  %v472 = vsel %vm86, %v408, 0.0
  %473 = vadd.xlane.f32.xlu0 %v472
  %v474 = vpop.xlane.xlu0 %473
  %v475 = vsel %vm86, %v409, 0.0
  %476 = vadd.xlane.f32.xlu0 %v475
  %v477 = vpop.xlane.xlu0 %476
  %v478 = vsel %vm86, %v410, 0.0
  %479 = vadd.xlane.f32.xlu0 %v478
  %v480 = vpop.xlane.xlu0 %479
  %v481 = vsel %vm86, %v411, 0.0
  %482 = vadd.xlane.f32.xlu0 %v481
  %v483 = vpop.xlane.xlu0 %482
  %v484 = vsel %vm86, %v412, 0.0
  %485 = vadd.xlane.f32.xlu0 %v484
  %v486 = vpop.xlane.xlu0 %485
  %v487 = vsel %vm86, %v413, 0.0
  %488 = vadd.xlane.f32.xlu0 %v487
  %v489 = vpop.xlane.xlu0 %488
  %v490 = vsel %vm86, %v414, 0.0
  %491 = vadd.xlane.f32.xlu0 %v490
  %v492 = vpop.xlane.xlu0 %491
  %v493 = vsel %vm86, %v415, 0.0
  %494 = vadd.xlane.f32.xlu0 %v493
  %v495 = vpop.xlane.xlu0 %494
  %v496 = vsel %vm86, %v416, 0.0
  %497 = vadd.xlane.f32.xlu0 %v496
  %v498 = vpop.xlane.xlu0 %497
  %v499 = vsel %vm86, %v417, 0.0
  %500 = vadd.xlane.f32.xlu0 %v499
  %v501 = vpop.xlane.xlu0 %500
  %v502 = vsel %vm86, %v418, 0.0
  %503 = vadd.xlane.f32.xlu0 %v502
  %v504 = vpop.xlane.xlu0 %503
  %v505 = vsel %vm86, %v419, 0.0
  %506 = vadd.xlane.f32.xlu0 %v505
  %v507 = vpop.xlane.xlu0 %506
  %v508 = vsel %vm86, %v420, 0.0
  %509 = vadd.xlane.f32.xlu0 %v508
  %v510 = vpop.xlane.xlu0 %509
  %v511 = vsel %vm86, %v421, 0.0
  %512 = vadd.xlane.f32.xlu0 %v511
  %v513 = vpop.xlane.xlu0 %512
  %v514 = vsel %vm86, %v422, 0.0
  %515 = vadd.xlane.f32.xlu0 %v514
  %v516 = vpop.xlane.xlu0 %515
  %v517 = vsel %vm86, %v423, 0.0
  %518 = vadd.xlane.f32.xlu0 %v517
  %v519 = vpop.xlane.xlu0 %518
  %v520 = vsel %vm86, %v424, 0.0
  %521 = vadd.xlane.f32.xlu0 %v520
  %v522 = vpop.xlane.xlu0 %521
  %v523 = vsel %vm86, %v425, 0.0
  %524 = vadd.xlane.f32.xlu0 %v523
  %v525 = vpop.xlane.xlu0 %524
  %v526 = vsel %vm86, %v426, 0.0
  %527 = vadd.xlane.f32.xlu0 %v526
  %v528 = vpop.xlane.xlu0 %527
  %v529 = vsel %vm86, %v427, 0.0
  %530 = vadd.xlane.f32.xlu0 %v529
  %v531 = vpop.xlane.xlu0 %530
  %v532 = vsel %vm86, %v428, 0.0
  %533 = vadd.xlane.f32.xlu0 %v532
  %v534 = vpop.xlane.xlu0 %533
  %v535 = vsel %vm86, %v429, 0.0
  %536 = vadd.xlane.f32.xlu0 %v535
  %v537 = vpop.xlane.xlu0 %536
  %v538 = vsel %vm86, %v430, 0.0
  %539 = vadd.xlane.f32.xlu0 %v538
  %v540 = vpop.xlane.xlu0 %539
  %v541 = vsel %vm86, %v431, 0.0
  %542 = vadd.xlane.f32.xlu0 %v541
  %v543 = vpop.xlane.xlu0 %542
  %v544 = vsel %vm86, %v432, 0.0
  %545 = vadd.xlane.f32.xlu0 %v544
  %v546 = vpop.xlane.xlu0 %545
  %v547 = vsel %vm86, %v433, 0.0
  %548 = vadd.xlane.f32.xlu0 %v547
  %v549 = vpop.xlane.xlu0 %548
  %v550 = vsel %vm86, %v434, 0.0
  %551 = vadd.xlane.f32.xlu0 %v550
  %v552 = vpop.xlane.xlu0 %551
  %v553 = vsel %vm86, %v435, 0.0
  %554 = vadd.xlane.f32.xlu0 %v553
  %v555 = vpop.xlane.xlu0 %554
  %v556 = vsel %vm86, %v436, 0.0
  %557 = vadd.xlane.f32.xlu0 %v556
  %v558 = vpop.xlane.xlu0 %557
  %v559 = vsel %vm86, %v437, 0.0
  %560 = vadd.xlane.f32.xlu0 %v559
  %v561 = vpop.xlane.xlu0 %560
  %v562 = vsel %vm86, %v438, 0.0
  %563 = vadd.xlane.f32.xlu0 %v562
  %v564 = vpop.xlane.xlu0 %563
  %v565 = vsel %vm86, %v439, 0.0
  %566 = vadd.xlane.f32.xlu0 %v565
  %v567 = vpop.xlane.xlu0 %566
  %v568 = vsel %vm86, %v440, 0.0
  %569 = vadd.xlane.f32.xlu0 %v568
  %v570 = vpop.xlane.xlu0 %569
  %v571 = vsel %vm86, %v441, 0.0
  %572 = vadd.xlane.f32.xlu0 %v571
  %v573 = vpop.xlane.xlu0 %572
  %v574 = vsel %vm86, %v442, 0.0
  %575 = vadd.xlane.f32.xlu0 %v574
  %v576 = vpop.xlane.xlu0 %575
  %v577 = vsel %vm86, %v443, 0.0
  %578 = vadd.xlane.f32.xlu0 %v577
  %v579 = vpop.xlane.xlu0 %578
  %v580 = vsel %vm86, %v444, 0.0
  %581 = vadd.xlane.f32.xlu0 %v580
  %v582 = vpop.xlane.xlu0 %581
  %v583 = vsel %vm86, %v445, 0.0
  %584 = vadd.xlane.f32.xlu0 %v583
  %v585 = vpop.xlane.xlu0 %584
  %v586 = vsel %vm86, %v446, 0.0
  %587 = vadd.xlane.f32.xlu0 %v586
  %v588 = vpop.xlane.xlu0 %587
  %v589 = vsel %vm86, %v447, 0.0
  %590 = vadd.xlane.f32.xlu0 %v589
  %v591 = vpop.xlane.xlu0 %590
  %v592 = vsel %vm86, %v448, 0.0
  %593 = vadd.xlane.f32.xlu0 %v592
  %v594 = vpop.xlane.xlu0 %593
  %v595 = vsel %vm86, %v449, 0.0
  %596 = vadd.xlane.f32.xlu0 %v595
  %v597 = vpop.xlane.xlu0 %596
  %v598 = vsel %vm86, %v450, 0.0
  %599 = vadd.xlane.f32.xlu0 %v598
  %v600 = vpop.xlane.xlu0 %599
  %v601 = vsel %vm86, %v451, 0.0
  %602 = vadd.xlane.f32.xlu0 %v601
  %v603 = vpop.xlane.xlu0 %602
  %v604 = vsel %vm86, %v452, 0.0
  %605 = vadd.xlane.f32.xlu0 %v604
  %v606 = vpop.xlane.xlu0 %605
  %v607 = vsel %vm86, %v453, 0.0
  %608 = vadd.xlane.f32.xlu0 %v607
  %v609 = vpop.xlane.xlu0 %608
  %v610 = vsel %vm86, %v454, 0.0
  %611 = vadd.xlane.f32.xlu0 %v610
  %v612 = vpop.xlane.xlu0 %611
  %v613 = vsel %vm86, %v455, 0.0
  %614 = vadd.xlane.f32.xlu0 %v613
  %v615 = vpop.xlane.xlu0 %614
  %v616 = vsel %vm86, %v456, 0.0
  %617 = vadd.xlane.f32.xlu0 %v616
  %v618 = vpop.xlane.xlu0 %617
  %v619 = vsel %vm86, %v457, 0.0
  %620 = vadd.xlane.f32.xlu0 %v619
  %v621 = vpop.xlane.xlu0 %620
  %v622 = vsel %vm86, %v458, 0.0
  %623 = vadd.xlane.f32.xlu0 %v622
  %v624 = vpop.xlane.xlu0 %623
  %v625 = vsel %vm86, %v459, 0.0
  %626 = vadd.xlane.f32.xlu0 %v625
  %v627 = vpop.xlane.xlu0 %626
  %v628 = vsel %vm86, %v460, 0.0
  %629 = vadd.xlane.f32.xlu0 %v628
  %v630 = vpop.xlane.xlu0 %629
  %v631 = vsel %vm86, %v461, 0.0
  %632 = vadd.xlane.f32.xlu0 %v631
  %v633 = vpop.xlane.xlu0 %632
  %v634 = vsel %vm86, %v462, 0.0
  %635 = vadd.xlane.f32.xlu0 %v634
  %v636 = vpop.xlane.xlu0 %635
  %v637 = vsel %vm86, %v463, 0.0
  %638 = vadd.xlane.f32.xlu0 %v637
  %v639 = vpop.xlane.xlu0 %638
  %v640 = vsel %vm86, %v464, 0.0
  %641 = vadd.xlane.f32.xlu0 %v640
  %v642 = vpop.xlane.xlu0 %641
  %v643 = vsel %vm86, %v465, 0.0
  %644 = vadd.xlane.f32.xlu0 %v643
  %v645 = vpop.xlane.xlu0 %644
  %v646 = vsel %vm86, %v466, 0.0
  %647 = vadd.xlane.f32.xlu0 %v646
  %v648 = vpop.xlane.xlu0 %647
  %v649 = vsel %vm86, %v467, 0.0
  %650 = vadd.xlane.f32.xlu0 %v649
  %v651 = vpop.xlane.xlu0 %650
  %v652 = vsel %vm86, %v468, 0.0
  %653 = vadd.xlane.f32.xlu0 %v652
  %v654 = vpop.xlane.xlu0 %653
  %v655 = vsel %vm86, %v469, 0.0
  %656 = vadd.xlane.f32.xlu0 %v655
  %v657 = vpop.xlane.xlu0 %656
  %v658 = vsel %vm86, %v470, 0.0
  %659 = vadd.xlane.f32.xlu0 %v658
  %v660 = vpop.xlane.xlu0 %659
  %v661 = vsel %vm86, %v471, 0.0
  %662 = vadd.xlane.f32.xlu0 %v661
  %v663 = vpop.xlane.xlu0 %662
  %v664 = vmul.f32 %v474, %v279
  %v665 = vmul.f32 %v477, %v279
  %v666 = vmul.f32 %v480, %v279
  %v667 = vmul.f32 %v483, %v279
  %v668 = vmul.f32 %v486, %v279
  %v669 = vmul.f32 %v489, %v279
  %v670 = vmul.f32 %v492, %v279
  %v671 = vmul.f32 %v495, %v279
  %v672 = vmul.f32 %v498, %v279
  %v673 = vmul.f32 %v501, %v279
  %v674 = vmul.f32 %v504, %v279
  %v675 = vmul.f32 %v507, %v279
  %v676 = vmul.f32 %v510, %v279
  %v677 = vmul.f32 %v513, %v279
  %v678 = vmul.f32 %v516, %v279
  %v679 = vmul.f32 %v519, %v279
  %v680 = vmul.f32 %v522, %v279
  %v681 = vmul.f32 %v525, %v279
  %v682 = vmul.f32 %v528, %v279
  %v683 = vmul.f32 %v531, %v279
  %v684 = vmul.f32 %v534, %v279
  %v685 = vmul.f32 %v537, %v279
  %v686 = vmul.f32 %v540, %v279
  %v687 = vmul.f32 %v543, %v279
  %v688 = vmul.f32 %v546, %v279
  %v689 = vmul.f32 %v549, %v279
  %v690 = vmul.f32 %v552, %v279
  %v691 = vmul.f32 %v555, %v279
  %v692 = vmul.f32 %v558, %v279
  %v693 = vmul.f32 %v561, %v279
  %v694 = vmul.f32 %v564, %v279
  %v695 = vmul.f32 %v567, %v279
  %v696 = vmul.f32 %v570, %v279
  %v697 = vmul.f32 %v573, %v279
  %v698 = vmul.f32 %v576, %v279
  %v699 = vmul.f32 %v579, %v279
  %v700 = vmul.f32 %v582, %v279
  %v701 = vmul.f32 %v585, %v279
  %v702 = vmul.f32 %v588, %v279
  %v703 = vmul.f32 %v591, %v279
  %v704 = vmul.f32 %v594, %v279
  %v705 = vmul.f32 %v597, %v279
  %v706 = vmul.f32 %v600, %v279
  %v707 = vmul.f32 %v603, %v279
  %v708 = vmul.f32 %v606, %v279
  %v709 = vmul.f32 %v609, %v279
  %v710 = vmul.f32 %v612, %v279
  %v711 = vmul.f32 %v615, %v279
  %v712 = vmul.f32 %v618, %v279
  %v713 = vmul.f32 %v621, %v279
  %v714 = vmul.f32 %v624, %v279
  %v715 = vmul.f32 %v627, %v279
  %v716 = vmul.f32 %v630, %v279
  %v717 = vmul.f32 %v633, %v279
  %v718 = vmul.f32 %v636, %v279
  %v719 = vmul.f32 %v639, %v279
  %v720 = vmul.f32 %v642, %v279
  %v721 = vmul.f32 %v645, %v279
  %v722 = vmul.f32 %v648, %v279
  %v723 = vmul.f32 %v651, %v279
  %v724 = vmul.f32 %v654, %v279
  %v725 = vmul.f32 %v657, %v279
  %v726 = vmul.f32 %v660, %v279
  %v727 = vmul.f32 %v663, %v279
  %v728 = vadd.f32 %v664, 1e-05
  %v729 = vadd.f32 %v665, 1e-05
  %v730 = vadd.f32 %v666, 1e-05
  %v731 = vadd.f32 %v667, 1e-05
  %v732 = vadd.f32 %v668, 1e-05
  %v733 = vadd.f32 %v669, 1e-05
  %v734 = vadd.f32 %v670, 1e-05
  %v735 = vadd.f32 %v671, 1e-05
  %v736 = vadd.f32 %v672, 1e-05
  %v737 = vadd.f32 %v673, 1e-05
  %v738 = vadd.f32 %v674, 1e-05
  %v739 = vadd.f32 %v675, 1e-05
  %v740 = vadd.f32 %v676, 1e-05
  %v741 = vadd.f32 %v677, 1e-05
  %v742 = vadd.f32 %v678, 1e-05
  %v743 = vadd.f32 %v679, 1e-05
  %v744 = vadd.f32 %v680, 1e-05
  %v745 = vadd.f32 %v681, 1e-05
  %v746 = vadd.f32 %v682, 1e-05
  %v747 = vadd.f32 %v683, 1e-05
  %v748 = vadd.f32 %v684, 1e-05
  %v749 = vadd.f32 %v685, 1e-05
  %v750 = vadd.f32 %v686, 1e-05
  %v751 = vadd.f32 %v687, 1e-05
  %v752 = vadd.f32 %v688, 1e-05
  %v753 = vadd.f32 %v689, 1e-05
  %v754 = vadd.f32 %v690, 1e-05
  %v755 = vadd.f32 %v691, 1e-05
  %v756 = vadd.f32 %v692, 1e-05
  %v757 = vadd.f32 %v693, 1e-05
  %v758 = vadd.f32 %v694, 1e-05
  %v759 = vadd.f32 %v695, 1e-05
  %v760 = vadd.f32 %v696, 1e-05
  %v761 = vadd.f32 %v697, 1e-05
  %v762 = vadd.f32 %v698, 1e-05
  %v763 = vadd.f32 %v699, 1e-05
  %v764 = vadd.f32 %v700, 1e-05
  %v765 = vadd.f32 %v701, 1e-05
  %v766 = vadd.f32 %v702, 1e-05
  %v767 = vadd.f32 %v703, 1e-05
  %v768 = vadd.f32 %v704, 1e-05
  %v769 = vadd.f32 %v705, 1e-05
  %v770 = vadd.f32 %v706, 1e-05
  %v771 = vadd.f32 %v707, 1e-05
  %v772 = vadd.f32 %v708, 1e-05
  %v773 = vadd.f32 %v709, 1e-05
  %v774 = vadd.f32 %v710, 1e-05
  %v775 = vadd.f32 %v711, 1e-05
  %v776 = vadd.f32 %v712, 1e-05
  %v777 = vadd.f32 %v713, 1e-05
  %v778 = vadd.f32 %v714, 1e-05
  %v779 = vadd.f32 %v715, 1e-05
  %v780 = vadd.f32 %v716, 1e-05
  %v781 = vadd.f32 %v717, 1e-05
  %v782 = vadd.f32 %v718, 1e-05
  %v783 = vadd.f32 %v719, 1e-05
  %v784 = vadd.f32 %v720, 1e-05
  %v785 = vadd.f32 %v721, 1e-05
  %v786 = vadd.f32 %v722, 1e-05
  %v787 = vadd.f32 %v723, 1e-05
  %v788 = vadd.f32 %v724, 1e-05
  %v789 = vadd.f32 %v725, 1e-05
  %v790 = vadd.f32 %v726, 1e-05
  %v791 = vadd.f32 %v727, 1e-05
  %v792 = vrsqrt.pop %v728
  %v793 = vrsqrt.pop %v729
  %v794 = vrsqrt.pop %v730
  %v795 = vrsqrt.pop %v731
  %v796 = vrsqrt.pop %v732
  %v797 = vrsqrt.pop %v733
  %v798 = vrsqrt.pop %v734
  %v799 = vrsqrt.pop %v735
  %v800 = vrsqrt.pop %v736
  %v801 = vrsqrt.pop %v737
  %v802 = vrsqrt.pop %v738
  %v803 = vrsqrt.pop %v739
  %v804 = vrsqrt.pop %v740
  %v805 = vrsqrt.pop %v741
  %v806 = vrsqrt.pop %v742
  %v807 = vrsqrt.pop %v743
  %v808 = vrsqrt.pop %v744
  %v809 = vrsqrt.pop %v745
  %v810 = vrsqrt.pop %v746
  %v811 = vrsqrt.pop %v747
  %v812 = vrsqrt.pop %v748
  %v813 = vrsqrt.pop %v749
  %v814 = vrsqrt.pop %v750
  %v815 = vrsqrt.pop %v751
  %v816 = vrsqrt.pop %v752
  %v817 = vrsqrt.pop %v753
  %v818 = vrsqrt.pop %v754
  %v819 = vrsqrt.pop %v755
  %v820 = vrsqrt.pop %v756
  %v821 = vrsqrt.pop %v757
  %v822 = vrsqrt.pop %v758
  %v823 = vrsqrt.pop %v759
  %v824 = vrsqrt.pop %v760
  %v825 = vrsqrt.pop %v761
  %v826 = vrsqrt.pop %v762
  %v827 = vrsqrt.pop %v763
  %v828 = vrsqrt.pop %v764
  %v829 = vrsqrt.pop %v765
  %v830 = vrsqrt.pop %v766
  %v831 = vrsqrt.pop %v767
  %v832 = vrsqrt.pop %v768
  %v833 = vrsqrt.pop %v769
  %v834 = vrsqrt.pop %v770
  %v835 = vrsqrt.pop %v771
  %v836 = vrsqrt.pop %v772
  %v837 = vrsqrt.pop %v773
  %v838 = vrsqrt.pop %v774
  %v839 = vrsqrt.pop %v775
  %v840 = vrsqrt.pop %v776
  %v841 = vrsqrt.pop %v777
  %v842 = vrsqrt.pop %v778
  %v843 = vrsqrt.pop %v779
  %v844 = vrsqrt.pop %v780
  %v845 = vrsqrt.pop %v781
  %v846 = vrsqrt.pop %v782
  %v847 = vrsqrt.pop %v783
  %v848 = vrsqrt.pop %v784
  %v849 = vrsqrt.pop %v785
  %v850 = vrsqrt.pop %v786
  %v851 = vrsqrt.pop %v787
  %v852 = vrsqrt.pop %v788
  %v853 = vrsqrt.pop %v789
  %v854 = vrsqrt.pop %v790
  %v855 = vrsqrt.pop %v791
  %v856 = vmul.f32 %v344, %v792
  %v857 = vmul.f32 %v345, %v793
  %v858 = vmul.f32 %v346, %v794
  %v859 = vmul.f32 %v347, %v795
  %v860 = vmul.f32 %v348, %v796
  %v861 = vmul.f32 %v349, %v797
  %v862 = vmul.f32 %v350, %v798
  %v863 = vmul.f32 %v351, %v799
  %v864 = vmul.f32 %v352, %v800
  %v865 = vmul.f32 %v353, %v801
  %v866 = vmul.f32 %v354, %v802
  %v867 = vmul.f32 %v355, %v803
  %v868 = vmul.f32 %v356, %v804
  %v869 = vmul.f32 %v357, %v805
  %v870 = vmul.f32 %v358, %v806
  %v871 = vmul.f32 %v359, %v807
  %v872 = vmul.f32 %v360, %v808
  %v873 = vmul.f32 %v361, %v809
  %v874 = vmul.f32 %v362, %v810
  %v875 = vmul.f32 %v363, %v811
  %v876 = vmul.f32 %v364, %v812
  %v877 = vmul.f32 %v365, %v813
  %v878 = vmul.f32 %v366, %v814
  %v879 = vmul.f32 %v367, %v815
  %v880 = vmul.f32 %v368, %v816
  %v881 = vmul.f32 %v369, %v817
  %v882 = vmul.f32 %v370, %v818
  %v883 = vmul.f32 %v371, %v819
  %v884 = vmul.f32 %v372, %v820
  %v885 = vmul.f32 %v373, %v821
  %v886 = vmul.f32 %v374, %v822
  %v887 = vmul.f32 %v375, %v823
  %v888 = vmul.f32 %v376, %v824
  %v889 = vmul.f32 %v377, %v825
  %v890 = vmul.f32 %v378, %v826
  %v891 = vmul.f32 %v379, %v827
  %v892 = vmul.f32 %v380, %v828
  %v893 = vmul.f32 %v381, %v829
  %v894 = vmul.f32 %v382, %v830
  %v895 = vmul.f32 %v383, %v831
  %v896 = vmul.f32 %v384, %v832
  %v897 = vmul.f32 %v385, %v833
  %v898 = vmul.f32 %v386, %v834
  %v899 = vmul.f32 %v387, %v835
  %v900 = vmul.f32 %v388, %v836
  %v901 = vmul.f32 %v389, %v837
  %v902 = vmul.f32 %v390, %v838
  %v903 = vmul.f32 %v391, %v839
  %v904 = vmul.f32 %v392, %v840
  %v905 = vmul.f32 %v393, %v841
  %v906 = vmul.f32 %v394, %v842
  %v907 = vmul.f32 %v395, %v843
  %v908 = vmul.f32 %v396, %v844
  %v909 = vmul.f32 %v397, %v845
  %v910 = vmul.f32 %v398, %v846
  %v911 = vmul.f32 %v399, %v847
  %v912 = vmul.f32 %v400, %v848
  %v913 = vmul.f32 %v401, %v849
  %v914 = vmul.f32 %v402, %v850
  %v915 = vmul.f32 %v403, %v851
  %v916 = vmul.f32 %v404, %v852
  %v917 = vmul.f32 %v405, %v853
  %v918 = vmul.f32 %v406, %v854
  %v919 = vmul.f32 %v407, %v855
  %v921 = vlaneseq
  %v922 = vshrl.u32 %v921, 7
  %v923 = vsub.s32 0, %v922
  %v924 = vrot.slane %v84, %v923
  %v926 = vmul.f32 %v856, %v924
  %v927 = vmul.f32 %v857, %v924
  %v928 = vmul.f32 %v858, %v924
  %v929 = vmul.f32 %v859, %v924
  %v930 = vmul.f32 %v860, %v924
  %v931 = vmul.f32 %v861, %v924
  %v932 = vmul.f32 %v862, %v924
  %v933 = vmul.f32 %v863, %v924
  %v934 = vmul.f32 %v864, %v924
  %v935 = vmul.f32 %v865, %v924
  %v936 = vmul.f32 %v866, %v924
  %v937 = vmul.f32 %v867, %v924
  %v938 = vmul.f32 %v868, %v924
  %v939 = vmul.f32 %v869, %v924
  %v940 = vmul.f32 %v870, %v924
  %v941 = vmul.f32 %v871, %v924
  %v942 = vmul.f32 %v872, %v924
  %v943 = vmul.f32 %v873, %v924
  %v944 = vmul.f32 %v874, %v924
  %v945 = vmul.f32 %v875, %v924
  %v946 = vmul.f32 %v876, %v924
  %v947 = vmul.f32 %v877, %v924
  %v948 = vmul.f32 %v878, %v924
  %v949 = vmul.f32 %v879, %v924
  %v950 = vmul.f32 %v880, %v924
  %v951 = vmul.f32 %v881, %v924
  %v952 = vmul.f32 %v882, %v924
  %v953 = vmul.f32 %v883, %v924
  %v954 = vmul.f32 %v884, %v924
  %v955 = vmul.f32 %v885, %v924
  %v956 = vmul.f32 %v886, %v924
  %v957 = vmul.f32 %v887, %v924
  %v958 = vmul.f32 %v888, %v924
  %v959 = vmul.f32 %v889, %v924
  %v960 = vmul.f32 %v890, %v924
  %v961 = vmul.f32 %v891, %v924
  %v962 = vmul.f32 %v892, %v924
  %v963 = vmul.f32 %v893, %v924
  %v964 = vmul.f32 %v894, %v924
  %v965 = vmul.f32 %v895, %v924
  %v966 = vmul.f32 %v896, %v924
  %v967 = vmul.f32 %v897, %v924
  %v968 = vmul.f32 %v898, %v924
  %v969 = vmul.f32 %v899, %v924
  %v970 = vmul.f32 %v900, %v924
  %v971 = vmul.f32 %v901, %v924
  %v972 = vmul.f32 %v902, %v924
  %v973 = vmul.f32 %v903, %v924
  %v974 = vmul.f32 %v904, %v924
  %v975 = vmul.f32 %v905, %v924
  %v976 = vmul.f32 %v906, %v924
  %v977 = vmul.f32 %v907, %v924
  %v978 = vmul.f32 %v908, %v924
  %v979 = vmul.f32 %v909, %v924
  %v980 = vmul.f32 %v910, %v924
  %v981 = vmul.f32 %v911, %v924
  %v982 = vmul.f32 %v912, %v924
  %v983 = vmul.f32 %v913, %v924
  %v984 = vmul.f32 %v914, %v924
  %v985 = vmul.f32 %v915, %v924
  %v986 = vmul.f32 %v916, %v924
  %v987 = vmul.f32 %v917, %v924
  %v988 = vmul.f32 %v918, %v924
  %v989 = vmul.f32 %v919, %v924
  %v991 = vlaneseq
  %v992 = vshrl.u32 %v991, 7
  %v993 = vsub.s32 0, %v992
  %v994 = vrot.slane %v85, %v993
  %v996 = vadd.f32 %v926, %v994
  %v997 = vadd.f32 %v927, %v994
  %v998 = vadd.f32 %v928, %v994
  %v999 = vadd.f32 %v929, %v994
  %v1000 = vadd.f32 %v930, %v994
  %v1001 = vadd.f32 %v931, %v994
  %v1002 = vadd.f32 %v932, %v994
  %v1003 = vadd.f32 %v933, %v994
  %v1004 = vadd.f32 %v934, %v994
  %v1005 = vadd.f32 %v935, %v994
  %v1006 = vadd.f32 %v936, %v994
  %v1007 = vadd.f32 %v937, %v994
  %v1008 = vadd.f32 %v938, %v994
  %v1009 = vadd.f32 %v939, %v994
  %v1010 = vadd.f32 %v940, %v994
  %v1011 = vadd.f32 %v941, %v994
  %v1012 = vadd.f32 %v942, %v994
  %v1013 = vadd.f32 %v943, %v994
  %v1014 = vadd.f32 %v944, %v994
  %v1015 = vadd.f32 %v945, %v994
  %v1016 = vadd.f32 %v946, %v994
  %v1017 = vadd.f32 %v947, %v994
  %v1018 = vadd.f32 %v948, %v994
  %v1019 = vadd.f32 %v949, %v994
  %v1020 = vadd.f32 %v950, %v994
  %v1021 = vadd.f32 %v951, %v994
  %v1022 = vadd.f32 %v952, %v994
  %v1023 = vadd.f32 %v953, %v994
  %v1024 = vadd.f32 %v954, %v994
  %v1025 = vadd.f32 %v955, %v994
  %v1026 = vadd.f32 %v956, %v994
  %v1027 = vadd.f32 %v957, %v994
  %v1028 = vadd.f32 %v958, %v994
  %v1029 = vadd.f32 %v959, %v994
  %v1030 = vadd.f32 %v960, %v994
  %v1031 = vadd.f32 %v961, %v994
  %v1032 = vadd.f32 %v962, %v994
  %v1033 = vadd.f32 %v963, %v994
  %v1034 = vadd.f32 %v964, %v994
  %v1035 = vadd.f32 %v965, %v994
  %v1036 = vadd.f32 %v966, %v994
  %v1037 = vadd.f32 %v967, %v994
  %v1038 = vadd.f32 %v968, %v994
  %v1039 = vadd.f32 %v969, %v994
  %v1040 = vadd.f32 %v970, %v994
  %v1041 = vadd.f32 %v971, %v994
  %v1042 = vadd.f32 %v972, %v994
  %v1043 = vadd.f32 %v973, %v994
  %v1044 = vadd.f32 %v974, %v994
  %v1045 = vadd.f32 %v975, %v994
  %v1046 = vadd.f32 %v976, %v994
  %v1047 = vadd.f32 %v977, %v994
  %v1048 = vadd.f32 %v978, %v994
  %v1049 = vadd.f32 %v979, %v994
  %v1050 = vadd.f32 %v980, %v994
  %v1051 = vadd.f32 %v981, %v994
  %v1052 = vadd.f32 %v982, %v994
  %v1053 = vadd.f32 %v983, %v994
  %v1054 = vadd.f32 %v984, %v994
  %v1055 = vadd.f32 %v985, %v994
  %v1056 = vadd.f32 %v986, %v994
  %v1057 = vadd.f32 %v987, %v994
  %v1058 = vadd.f32 %v988, %v994
  %v1059 = vadd.f32 %v989, %v994
  %v1060 = vld [vmem:[%s1] sm:$0xf]
  %v1061 = vld [vmem:[%s1 + $0x4] sm:$0xf]
  %v1062 = vld [vmem:[%s1 + $0x8] sm:$0xf]
  %v1063 = vld [vmem:[%s1 + $0xc] sm:$0xf]
  %v1065 = vsel %vm86, %v1012, 0
  %v1068 = vsel %vm86, %v1013, 0
  %v1071 = vsel %vm86, %v1014, 0
  %v1074 = vsel %vm86, %v1015, 0
  %v1077 = vsel %vm86, %v1016, 0
  %v1080 = vsel %vm86, %v1017, 0
  %v1083 = vsel %vm86, %v1018, 0
  %v1086 = vsel %vm86, %v1019, 0
  %v1089 = vsel %vm86, %v1020, 0
  %v1092 = vsel %vm86, %v1021, 0
  %v1095 = vsel %vm86, %v1022, 0
  %v1098 = vsel %vm86, %v1023, 0
  %v1101 = vsel %vm86, %v1024, 0
  %v1104 = vsel %vm86, %v1025, 0
  %v1107 = vsel %vm86, %v1026, 0
  %v1110 = vsel %vm86, %v1027, 0
  %vm1112 = vcmask 1043456
  %v1114 = vsel %vm1112, %v1061, 0
  %1116 = vmatprep.subr.mxu0 0.0
  %1117 = vmatpush1.msra.mxu0 0.0
  %1118 = vmatprep.subr.mxu0 0.0
  %1119 = vmatpush1.msra.mxu0 0.0
  %1120 = vmatprep.subr.mxu0 0.0
  %1121 = vmatpush1.msra.mxu0 0.0
  %1122 = vmatprep.subr.mxu0 0.0
  %1123 = vmatpush1.msra.mxu0 0.0
  %1124 = vmatprep.subr.mxu0 0.0
  %1125 = vmatpush1.msra.mxu0 0.0
  %1126 = vmatprep.subr.mxu0 0.0
  %1127 = vmatpush1.msra.mxu0 0.0
  %1128 = vmatprep.subr.mxu0 0.0
  %1129 = vmatpush1.msra.mxu0 0.0
  %1130 = vmatprep.subr.mxu0 0.0
  %1131 = vmatpush1.msra.mxu0 0.0
  %1132 = vmatprep.subr.mxu0 0.0
  %1133 = vmatpush1.msra.mxu0 0.0
  %1134 = vmatprep.subr.mxu0 0.0
  %1135 = vmatpush1.msra.mxu0 0.0
  %1136 = vmatprep.subr.mxu0 0.0
  %1137 = vmatpush1.msra.mxu0 0.0
  %1138 = vmatprep.subr.mxu0 0.0
  %1139 = vmatpush1.msra.mxu0 0.0
  %1140 = vmatprep.subr.mxu0 0.0
  %1141 = vmatpush1.msra.mxu0 0.0
  %1142 = vmatprep.subr.mxu0 0.0
  %1143 = vmatpush1.msra.mxu0 0.0
  %1144 = vmatprep.subr.mxu0 0.0
  %1145 = vmatpush1.msra.mxu0 0.0
  %1146 = vmatprep.subr.mxu0 0.0
  %1147 = vmatpush1.msra.mxu0 %v1114
  %1148 = vmatprep.subr.mxu0 0.0
  %1149 = vmatpush2.msra.mxu0 0.0
  %1150 = vmatprep.subr.mxu0 0.0
  %1151 = vmatpush2.msra.mxu0 0.0
  %1152 = vmatprep.subr.mxu0 0.0
  %1153 = vmatpush2.msra.mxu0 0.0
  %1154 = vmatprep.subr.mxu0 0.0
  %1155 = vmatpush2.msra.mxu0 0.0
  %1156 = vmatprep.subr.mxu0 0.0
  %1157 = vmatpush2.msra.mxu0 0.0
  %1158 = vmatprep.subr.mxu0 0.0
  %1159 = vmatpush2.msra.mxu0 0.0
  %1160 = vmatprep.subr.mxu0 0.0
  %1161 = vmatpush2.msra.mxu0 0.0
  %1162 = vmatprep.subr.mxu0 0.0
  %1163 = vmatpush2.msra.mxu0 0.0
  %1164 = vmatprep.subr.mxu0 0.0
  %1165 = vmatpush2.msra.mxu0 0.0
  %1166 = vmatprep.subr.mxu0 0.0
  %1167 = vmatpush2.msra.mxu0 0.0
  %1168 = vmatprep.subr.mxu0 0.0
  %1169 = vmatpush2.msra.mxu0 0.0
  %1170 = vmatprep.subr.mxu0 0.0
  %1171 = vmatpush2.msra.mxu0 0.0
  %1172 = vmatprep.subr.mxu0 0.0
  %1173 = vmatpush2.msra.mxu0 0.0
  %1174 = vmatprep.subr.mxu0 0.0
  %1175 = vmatpush2.msra.mxu0 0.0
  %1176 = vmatprep.subr.mxu0 0.0
  %1177 = vmatpush2.msra.mxu0 0.0
  %1178 = vmatprep.subr.mxu0 0.0
  %1179 = vmatpush2.msra.mxu0 0.0
  %1180 = vmatprep.mubr.f32.mxu0 0.0
  %1181 = vmatmul.mubr.f32.gmra.mxu0 %v1065
  %v1182 = vpop.f32.mrf.mxu0
  %v1183 = vadd.f32 0.0, %v1182
  %v1184 = vpop.f32.mrf.mxu0
  %1185 = vmatprep.mubr.f32.mxu0 0.0
  %1186 = vmatmul.mubr.f32.gmra.mxu0 %v1068
  %v1187 = vpop.f32.mrf.mxu0
  %v1188 = vadd.f32 0.0, %v1187
  %v1189 = vpop.f32.mrf.mxu0
  %1190 = vmatprep.mubr.f32.mxu0 0.0
  %1191 = vmatmul.mubr.f32.gmra.mxu0 %v1071
  %v1192 = vpop.f32.mrf.mxu0
  %v1193 = vadd.f32 0.0, %v1192
  %v1194 = vpop.f32.mrf.mxu0
  %1195 = vmatprep.mubr.f32.mxu0 0.0
  %1196 = vmatmul.mubr.f32.gmra.mxu0 %v1074
  %v1197 = vpop.f32.mrf.mxu0
  %v1198 = vadd.f32 0.0, %v1197
  %v1199 = vpop.f32.mrf.mxu0
  %1200 = vmatprep.mubr.f32.mxu0 0.0
  %1201 = vmatmul.mubr.f32.gmra.mxu0 %v1077
  %v1202 = vpop.f32.mrf.mxu0
  %v1203 = vadd.f32 0.0, %v1202
  %v1204 = vpop.f32.mrf.mxu0
  %1205 = vmatprep.mubr.f32.mxu0 0.0
  %1206 = vmatmul.mubr.f32.gmra.mxu0 %v1080
  %v1207 = vpop.f32.mrf.mxu0
  %v1208 = vadd.f32 0.0, %v1207
  %v1209 = vpop.f32.mrf.mxu0
  %1210 = vmatprep.mubr.f32.mxu0 0.0
  %1211 = vmatmul.mubr.f32.gmra.mxu0 %v1083
  %v1212 = vpop.f32.mrf.mxu0
  %v1213 = vadd.f32 0.0, %v1212
  %v1214 = vpop.f32.mrf.mxu0
  %1215 = vmatprep.mubr.f32.mxu0 0.0
  %1216 = vmatmul.mubr.f32.gmra.mxu0 %v1086
  %v1217 = vpop.f32.mrf.mxu0
  %v1218 = vadd.f32 0.0, %v1217
  %v1219 = vpop.f32.mrf.mxu0
  %1220 = vmatprep.mubr.f32.mxu0 0.0
  %1221 = vmatmul.mubr.f32.gmra.mxu0 %v1089
  %v1222 = vpop.f32.mrf.mxu0
  %v1223 = vadd.f32 0.0, %v1222
  %v1224 = vpop.f32.mrf.mxu0
  %1225 = vmatprep.mubr.f32.mxu0 0.0
  %1226 = vmatmul.mubr.f32.gmra.mxu0 %v1092
  %v1227 = vpop.f32.mrf.mxu0
  %v1228 = vadd.f32 0.0, %v1227
  %v1229 = vpop.f32.mrf.mxu0
  %1230 = vmatprep.mubr.f32.mxu0 0.0
  %1231 = vmatmul.mubr.f32.gmra.mxu0 %v1095
  %v1232 = vpop.f32.mrf.mxu0
  %v1233 = vadd.f32 0.0, %v1232
  %v1234 = vpop.f32.mrf.mxu0
  %1235 = vmatprep.mubr.f32.mxu0 0.0
  %1236 = vmatmul.mubr.f32.gmra.mxu0 %v1098
  %v1237 = vpop.f32.mrf.mxu0
  %v1238 = vadd.f32 0.0, %v1237
  %v1239 = vpop.f32.mrf.mxu0
  %1240 = vmatprep.mubr.f32.mxu0 0.0
  %1241 = vmatmul.mubr.f32.gmra.mxu0 %v1101
  %v1242 = vpop.f32.mrf.mxu0
  %v1243 = vadd.f32 0.0, %v1242
  %v1244 = vpop.f32.mrf.mxu0
  %1245 = vmatprep.mubr.f32.mxu0 0.0
  %1246 = vmatmul.mubr.f32.gmra.mxu0 %v1104
  %v1247 = vpop.f32.mrf.mxu0
  %v1248 = vadd.f32 0.0, %v1247
  %v1249 = vpop.f32.mrf.mxu0
  %1250 = vmatprep.mubr.f32.mxu0 0.0
  %1251 = vmatmul.mubr.f32.gmra.mxu0 %v1107
  %v1252 = vpop.f32.mrf.mxu0
  %v1253 = vadd.f32 0.0, %v1252
  %v1254 = vpop.f32.mrf.mxu0
  %1255 = vmatprep.mubr.f32.mxu0 0.0
  %1256 = vmatmul.mubr.f32.gmra.mxu0 %v1110
  %v1257 = vpop.f32.mrf.mxu0
  %v1258 = vadd.f32 0.0, %v1257
  %v1259 = vpop.f32.mrf.mxu0
  %1260 = vdwg.mxu0
  %v1262 = vsel %vm86, %v996, 0
  %v1265 = vsel %vm86, %v997, 0
  %v1268 = vsel %vm86, %v998, 0
  %v1271 = vsel %vm86, %v999, 0
  %v1274 = vsel %vm86, %v1000, 0
  %v1277 = vsel %vm86, %v1001, 0
  %v1280 = vsel %vm86, %v1002, 0
  %v1283 = vsel %vm86, %v1003, 0
  %v1286 = vsel %vm86, %v1004, 0
  %v1289 = vsel %vm86, %v1005, 0
  %v1292 = vsel %vm86, %v1006, 0
  %v1295 = vsel %vm86, %v1007, 0
  %v1298 = vsel %vm86, %v1008, 0
  %v1301 = vsel %vm86, %v1009, 0
  %v1304 = vsel %vm86, %v1010, 0
  %v1307 = vsel %vm86, %v1011, 0
  %v1310 = vsel %vm1112, %v1060, 0
  %1312 = vmatprep.subr.mxu0 0.0
  %1313 = vmatpush1.msra.mxu0 0.0
  %1314 = vmatprep.subr.mxu0 0.0
  %1315 = vmatpush1.msra.mxu0 0.0
  %1316 = vmatprep.subr.mxu0 0.0
  %1317 = vmatpush1.msra.mxu0 0.0
  %1318 = vmatprep.subr.mxu0 0.0
  %1319 = vmatpush1.msra.mxu0 0.0
  %1320 = vmatprep.subr.mxu0 0.0
  %1321 = vmatpush1.msra.mxu0 0.0
  %1322 = vmatprep.subr.mxu0 0.0
  %1323 = vmatpush1.msra.mxu0 0.0
  %1324 = vmatprep.subr.mxu0 0.0
  %1325 = vmatpush1.msra.mxu0 0.0
  %1326 = vmatprep.subr.mxu0 0.0
  %1327 = vmatpush1.msra.mxu0 0.0
  %1328 = vmatprep.subr.mxu0 0.0
  %1329 = vmatpush1.msra.mxu0 0.0
  %1330 = vmatprep.subr.mxu0 0.0
  %1331 = vmatpush1.msra.mxu0 0.0
  %1332 = vmatprep.subr.mxu0 0.0
  %1333 = vmatpush1.msra.mxu0 0.0
  %1334 = vmatprep.subr.mxu0 0.0
  %1335 = vmatpush1.msra.mxu0 0.0
  %1336 = vmatprep.subr.mxu0 0.0
  %1337 = vmatpush1.msra.mxu0 0.0
  %1338 = vmatprep.subr.mxu0 0.0
  %1339 = vmatpush1.msra.mxu0 0.0
  %1340 = vmatprep.subr.mxu0 0.0
  %1341 = vmatpush1.msra.mxu0 0.0
  %1342 = vmatprep.subr.mxu0 0.0
  %1343 = vmatpush1.msra.mxu0 %v1310
  %1344 = vmatprep.subr.mxu0 0.0
  %1345 = vmatpush2.msra.mxu0 0.0
  %1346 = vmatprep.subr.mxu0 0.0
  %1347 = vmatpush2.msra.mxu0 0.0
  %1348 = vmatprep.subr.mxu0 0.0
  %1349 = vmatpush2.msra.mxu0 0.0
  %1350 = vmatprep.subr.mxu0 0.0
  %1351 = vmatpush2.msra.mxu0 0.0
  %1352 = vmatprep.subr.mxu0 0.0
  %1353 = vmatpush2.msra.mxu0 0.0
  %1354 = vmatprep.subr.mxu0 0.0
  %1355 = vmatpush2.msra.mxu0 0.0
  %1356 = vmatprep.subr.mxu0 0.0
  %1357 = vmatpush2.msra.mxu0 0.0
  %1358 = vmatprep.subr.mxu0 0.0
  %1359 = vmatpush2.msra.mxu0 0.0
  %1360 = vmatprep.subr.mxu0 0.0
  %1361 = vmatpush2.msra.mxu0 0.0
  %1362 = vmatprep.subr.mxu0 0.0
  %1363 = vmatpush2.msra.mxu0 0.0
  %1364 = vmatprep.subr.mxu0 0.0
  %1365 = vmatpush2.msra.mxu0 0.0
  %1366 = vmatprep.subr.mxu0 0.0
  %1367 = vmatpush2.msra.mxu0 0.0
  %1368 = vmatprep.subr.mxu0 0.0
  %1369 = vmatpush2.msra.mxu0 0.0
  %1370 = vmatprep.subr.mxu0 0.0
  %1371 = vmatpush2.msra.mxu0 0.0
  %1372 = vmatprep.subr.mxu0 0.0
  %1373 = vmatpush2.msra.mxu0 0.0
  %1374 = vmatprep.subr.mxu0 0.0
  %1375 = vmatpush2.msra.mxu0 0.0
  %1376 = vmatprep.mubr.f32.mxu0 0.0
  %1377 = vmatmul.mubr.f32.gmra.mxu0 %v1262
  %v1378 = vpop.f32.mrf.mxu0
  %v1379 = vadd.f32 %v1183, %v1378
  %v1380 = vpop.f32.mrf.mxu0
  %1381 = vmatprep.mubr.f32.mxu0 0.0
  %1382 = vmatmul.mubr.f32.gmra.mxu0 %v1265
  %v1383 = vpop.f32.mrf.mxu0
  %v1384 = vadd.f32 %v1188, %v1383
  %v1385 = vpop.f32.mrf.mxu0
  %1386 = vmatprep.mubr.f32.mxu0 0.0
  %1387 = vmatmul.mubr.f32.gmra.mxu0 %v1268
  %v1388 = vpop.f32.mrf.mxu0
  %v1389 = vadd.f32 %v1193, %v1388
  %v1390 = vpop.f32.mrf.mxu0
  %1391 = vmatprep.mubr.f32.mxu0 0.0
  %1392 = vmatmul.mubr.f32.gmra.mxu0 %v1271
  %v1393 = vpop.f32.mrf.mxu0
  %v1394 = vadd.f32 %v1198, %v1393
  %v1395 = vpop.f32.mrf.mxu0
  %1396 = vmatprep.mubr.f32.mxu0 0.0
  %1397 = vmatmul.mubr.f32.gmra.mxu0 %v1274
  %v1398 = vpop.f32.mrf.mxu0
  %v1399 = vadd.f32 %v1203, %v1398
  %v1400 = vpop.f32.mrf.mxu0
  %1401 = vmatprep.mubr.f32.mxu0 0.0
  %1402 = vmatmul.mubr.f32.gmra.mxu0 %v1277
  %v1403 = vpop.f32.mrf.mxu0
  %v1404 = vadd.f32 %v1208, %v1403
  %v1405 = vpop.f32.mrf.mxu0
  %1406 = vmatprep.mubr.f32.mxu0 0.0
  %1407 = vmatmul.mubr.f32.gmra.mxu0 %v1280
  %v1408 = vpop.f32.mrf.mxu0
  %v1409 = vadd.f32 %v1213, %v1408
  %v1410 = vpop.f32.mrf.mxu0
  %1411 = vmatprep.mubr.f32.mxu0 0.0
  %1412 = vmatmul.mubr.f32.gmra.mxu0 %v1283
  %v1413 = vpop.f32.mrf.mxu0
  %v1414 = vadd.f32 %v1218, %v1413
  %v1415 = vpop.f32.mrf.mxu0
  %1416 = vmatprep.mubr.f32.mxu0 0.0
  %1417 = vmatmul.mubr.f32.gmra.mxu0 %v1286
  %v1418 = vpop.f32.mrf.mxu0
  %v1419 = vadd.f32 %v1223, %v1418
  %v1420 = vpop.f32.mrf.mxu0
  %1421 = vmatprep.mubr.f32.mxu0 0.0
  %1422 = vmatmul.mubr.f32.gmra.mxu0 %v1289
  %v1423 = vpop.f32.mrf.mxu0
  %v1424 = vadd.f32 %v1228, %v1423
  %v1425 = vpop.f32.mrf.mxu0
  %1426 = vmatprep.mubr.f32.mxu0 0.0
  %1427 = vmatmul.mubr.f32.gmra.mxu0 %v1292
  %v1428 = vpop.f32.mrf.mxu0
  %v1429 = vadd.f32 %v1233, %v1428
  %v1430 = vpop.f32.mrf.mxu0
  %1431 = vmatprep.mubr.f32.mxu0 0.0
  %1432 = vmatmul.mubr.f32.gmra.mxu0 %v1295
  %v1433 = vpop.f32.mrf.mxu0
  %v1434 = vadd.f32 %v1238, %v1433
  %v1435 = vpop.f32.mrf.mxu0
  %1436 = vmatprep.mubr.f32.mxu0 0.0
  %1437 = vmatmul.mubr.f32.gmra.mxu0 %v1298
  %v1438 = vpop.f32.mrf.mxu0
  %v1439 = vadd.f32 %v1243, %v1438
  %v1440 = vpop.f32.mrf.mxu0
  %1441 = vmatprep.mubr.f32.mxu0 0.0
  %1442 = vmatmul.mubr.f32.gmra.mxu0 %v1301
  %v1443 = vpop.f32.mrf.mxu0
  %v1444 = vadd.f32 %v1248, %v1443
  %v1445 = vpop.f32.mrf.mxu0
  %1446 = vmatprep.mubr.f32.mxu0 0.0
  %1447 = vmatmul.mubr.f32.gmra.mxu0 %v1304
  %v1448 = vpop.f32.mrf.mxu0
  %v1449 = vadd.f32 %v1253, %v1448
  %v1450 = vpop.f32.mrf.mxu0
  %1451 = vmatprep.mubr.f32.mxu0 0.0
  %1452 = vmatmul.mubr.f32.gmra.mxu0 %v1307
  %v1453 = vpop.f32.mrf.mxu0
  %v1454 = vadd.f32 %v1258, %v1453
  %v1455 = vpop.f32.mrf.mxu0
  %1456 = vdwg.mxu0
  %v1458 = vsel %vm86, %v1028, 0
  %v1461 = vsel %vm86, %v1029, 0
  %v1464 = vsel %vm86, %v1030, 0
  %v1467 = vsel %vm86, %v1031, 0
  %v1470 = vsel %vm86, %v1032, 0
  %v1473 = vsel %vm86, %v1033, 0
  %v1476 = vsel %vm86, %v1034, 0
  %v1479 = vsel %vm86, %v1035, 0
  %v1482 = vsel %vm86, %v1036, 0
  %v1485 = vsel %vm86, %v1037, 0
  %v1488 = vsel %vm86, %v1038, 0
  %v1491 = vsel %vm86, %v1039, 0
  %v1494 = vsel %vm86, %v1040, 0
  %v1497 = vsel %vm86, %v1041, 0
  %v1500 = vsel %vm86, %v1042, 0
  %v1503 = vsel %vm86, %v1043, 0
  %v1506 = vsel %vm1112, %v1062, 0
  %1508 = vmatprep.subr.mxu0 0.0
  %1509 = vmatpush1.msra.mxu0 0.0
  %1510 = vmatprep.subr.mxu0 0.0
  %1511 = vmatpush1.msra.mxu0 0.0
  %1512 = vmatprep.subr.mxu0 0.0
  %1513 = vmatpush1.msra.mxu0 0.0
  %1514 = vmatprep.subr.mxu0 0.0
  %1515 = vmatpush1.msra.mxu0 0.0
  %1516 = vmatprep.subr.mxu0 0.0
  %1517 = vmatpush1.msra.mxu0 0.0
  %1518 = vmatprep.subr.mxu0 0.0
  %1519 = vmatpush1.msra.mxu0 0.0
  %1520 = vmatprep.subr.mxu0 0.0
  %1521 = vmatpush1.msra.mxu0 0.0
  %1522 = vmatprep.subr.mxu0 0.0
  %1523 = vmatpush1.msra.mxu0 0.0
  %1524 = vmatprep.subr.mxu0 0.0
  %1525 = vmatpush1.msra.mxu0 0.0
  %1526 = vmatprep.subr.mxu0 0.0
  %1527 = vmatpush1.msra.mxu0 0.0
  %1528 = vmatprep.subr.mxu0 0.0
  %1529 = vmatpush1.msra.mxu0 0.0
  %1530 = vmatprep.subr.mxu0 0.0
  %1531 = vmatpush1.msra.mxu0 0.0
  %1532 = vmatprep.subr.mxu0 0.0
  %1533 = vmatpush1.msra.mxu0 0.0
  %1534 = vmatprep.subr.mxu0 0.0
  %1535 = vmatpush1.msra.mxu0 0.0
  %1536 = vmatprep.subr.mxu0 0.0
  %1537 = vmatpush1.msra.mxu0 0.0
  %1538 = vmatprep.subr.mxu0 0.0
  %1539 = vmatpush1.msra.mxu0 %v1506
  %1540 = vmatprep.subr.mxu0 0.0
  %1541 = vmatpush2.msra.mxu0 0.0
  %1542 = vmatprep.subr.mxu0 0.0
  %1543 = vmatpush2.msra.mxu0 0.0
  %1544 = vmatprep.subr.mxu0 0.0
  %1545 = vmatpush2.msra.mxu0 0.0
  %1546 = vmatprep.subr.mxu0 0.0
  %1547 = vmatpush2.msra.mxu0 0.0
  %1548 = vmatprep.subr.mxu0 0.0
  %1549 = vmatpush2.msra.mxu0 0.0
  %1550 = vmatprep.subr.mxu0 0.0
  %1551 = vmatpush2.msra.mxu0 0.0
  %1552 = vmatprep.subr.mxu0 0.0
  %1553 = vmatpush2.msra.mxu0 0.0
  %1554 = vmatprep.subr.mxu0 0.0
  %1555 = vmatpush2.msra.mxu0 0.0
  %1556 = vmatprep.subr.mxu0 0.0
  %1557 = vmatpush2.msra.mxu0 0.0
  %1558 = vmatprep.subr.mxu0 0.0
  %1559 = vmatpush2.msra.mxu0 0.0
  %1560 = vmatprep.subr.mxu0 0.0
  %1561 = vmatpush2.msra.mxu0 0.0
  %1562 = vmatprep.subr.mxu0 0.0
  %1563 = vmatpush2.msra.mxu0 0.0
  %1564 = vmatprep.subr.mxu0 0.0
  %1565 = vmatpush2.msra.mxu0 0.0
  %1566 = vmatprep.subr.mxu0 0.0
  %1567 = vmatpush2.msra.mxu0 0.0
  %1568 = vmatprep.subr.mxu0 0.0
  %1569 = vmatpush2.msra.mxu0 0.0
  %1570 = vmatprep.subr.mxu0 0.0
  %1571 = vmatpush2.msra.mxu0 0.0
  %1572 = vmatprep.mubr.f32.mxu0 0.0
  %1573 = vmatmul.mubr.f32.gmra.mxu0 %v1458
  %v1574 = vpop.f32.mrf.mxu0
  %v1575 = vadd.f32 0.0, %v1574
  %v1576 = vpop.f32.mrf.mxu0
  %1577 = vmatprep.mubr.f32.mxu0 0.0
  %1578 = vmatmul.mubr.f32.gmra.mxu0 %v1461
  %v1579 = vpop.f32.mrf.mxu0
  %v1580 = vadd.f32 0.0, %v1579
  %v1581 = vpop.f32.mrf.mxu0
  %1582 = vmatprep.mubr.f32.mxu0 0.0
  %1583 = vmatmul.mubr.f32.gmra.mxu0 %v1464
  %v1584 = vpop.f32.mrf.mxu0
  %v1585 = vadd.f32 0.0, %v1584
  %v1586 = vpop.f32.mrf.mxu0
  %1587 = vmatprep.mubr.f32.mxu0 0.0
  %1588 = vmatmul.mubr.f32.gmra.mxu0 %v1467
  %v1589 = vpop.f32.mrf.mxu0
  %v1590 = vadd.f32 0.0, %v1589
  %v1591 = vpop.f32.mrf.mxu0
  %1592 = vmatprep.mubr.f32.mxu0 0.0
  %1593 = vmatmul.mubr.f32.gmra.mxu0 %v1470
  %v1594 = vpop.f32.mrf.mxu0
  %v1595 = vadd.f32 0.0, %v1594
  %v1596 = vpop.f32.mrf.mxu0
  %1597 = vmatprep.mubr.f32.mxu0 0.0
  %1598 = vmatmul.mubr.f32.gmra.mxu0 %v1473
  %v1599 = vpop.f32.mrf.mxu0
  %v1600 = vadd.f32 0.0, %v1599
  %v1601 = vpop.f32.mrf.mxu0
  %1602 = vmatprep.mubr.f32.mxu0 0.0
  %1603 = vmatmul.mubr.f32.gmra.mxu0 %v1476
  %v1604 = vpop.f32.mrf.mxu0
  %v1605 = vadd.f32 0.0, %v1604
  %v1606 = vpop.f32.mrf.mxu0
  %1607 = vmatprep.mubr.f32.mxu0 0.0
  %1608 = vmatmul.mubr.f32.gmra.mxu0 %v1479
  %v1609 = vpop.f32.mrf.mxu0
  %v1610 = vadd.f32 0.0, %v1609
  %v1611 = vpop.f32.mrf.mxu0
  %1612 = vmatprep.mubr.f32.mxu0 0.0
  %1613 = vmatmul.mubr.f32.gmra.mxu0 %v1482
  %v1614 = vpop.f32.mrf.mxu0
  %v1615 = vadd.f32 0.0, %v1614
  %v1616 = vpop.f32.mrf.mxu0
  %1617 = vmatprep.mubr.f32.mxu0 0.0
  %1618 = vmatmul.mubr.f32.gmra.mxu0 %v1485
  %v1619 = vpop.f32.mrf.mxu0
  %v1620 = vadd.f32 0.0, %v1619
  %v1621 = vpop.f32.mrf.mxu0
  %1622 = vmatprep.mubr.f32.mxu0 0.0
  %1623 = vmatmul.mubr.f32.gmra.mxu0 %v1488
  %v1624 = vpop.f32.mrf.mxu0
  %v1625 = vadd.f32 0.0, %v1624
  %v1626 = vpop.f32.mrf.mxu0
  %1627 = vmatprep.mubr.f32.mxu0 0.0
  %1628 = vmatmul.mubr.f32.gmra.mxu0 %v1491
  %v1629 = vpop.f32.mrf.mxu0
  %v1630 = vadd.f32 0.0, %v1629
  %v1631 = vpop.f32.mrf.mxu0
  %1632 = vmatprep.mubr.f32.mxu0 0.0
  %1633 = vmatmul.mubr.f32.gmra.mxu0 %v1494
  %v1634 = vpop.f32.mrf.mxu0
  %v1635 = vadd.f32 0.0, %v1634
  %v1636 = vpop.f32.mrf.mxu0
  %1637 = vmatprep.mubr.f32.mxu0 0.0
  %1638 = vmatmul.mubr.f32.gmra.mxu0 %v1497
  %v1639 = vpop.f32.mrf.mxu0
  %v1640 = vadd.f32 0.0, %v1639
  %v1641 = vpop.f32.mrf.mxu0
  %1642 = vmatprep.mubr.f32.mxu0 0.0
  %1643 = vmatmul.mubr.f32.gmra.mxu0 %v1500
  %v1644 = vpop.f32.mrf.mxu0
  %v1645 = vadd.f32 0.0, %v1644
  %v1646 = vpop.f32.mrf.mxu0
  %1647 = vmatprep.mubr.f32.mxu0 0.0
  %1648 = vmatmul.mubr.f32.gmra.mxu0 %v1503
  %v1649 = vpop.f32.mrf.mxu0
  %v1650 = vadd.f32 0.0, %v1649
  %v1651 = vpop.f32.mrf.mxu0
  %1652 = vdwg.mxu0
  %v1653 = vadd.f32 %v1379, %v1575
  %v1654 = vadd.f32 %v1384, %v1580
  %v1655 = vadd.f32 %v1389, %v1585
  %v1656 = vadd.f32 %v1394, %v1590
  %v1657 = vadd.f32 %v1399, %v1595
  %v1658 = vadd.f32 %v1404, %v1600
  %v1659 = vadd.f32 %v1409, %v1605
  %v1660 = vadd.f32 %v1414, %v1610
  %v1661 = vadd.f32 %v1419, %v1615
  %v1662 = vadd.f32 %v1424, %v1620
  %v1663 = vadd.f32 %v1429, %v1625
  %v1664 = vadd.f32 %v1434, %v1630
  %v1665 = vadd.f32 %v1439, %v1635
  %v1666 = vadd.f32 %v1444, %v1640
  %v1667 = vadd.f32 %v1449, %v1645
  %v1668 = vadd.f32 %v1454, %v1650
  %v1670 = vsel %vm86, %v1044, 0
  %v1673 = vsel %vm86, %v1045, 0
  %v1676 = vsel %vm86, %v1046, 0
  %v1679 = vsel %vm86, %v1047, 0
  %v1682 = vsel %vm86, %v1048, 0
  %v1685 = vsel %vm86, %v1049, 0
  %v1688 = vsel %vm86, %v1050, 0
  %v1691 = vsel %vm86, %v1051, 0
  %v1694 = vsel %vm86, %v1052, 0
  %v1697 = vsel %vm86, %v1053, 0
  %v1700 = vsel %vm86, %v1054, 0
  %v1703 = vsel %vm86, %v1055, 0
  %v1706 = vsel %vm86, %v1056, 0
  %v1709 = vsel %vm86, %v1057, 0
  %v1712 = vsel %vm86, %v1058, 0
  %v1715 = vsel %vm86, %v1059, 0
  %v1718 = vsel %vm1112, %v1063, 0
  %1720 = vmatprep.subr.mxu0 0.0
  %1721 = vmatpush1.msra.mxu0 0.0
  %1722 = vmatprep.subr.mxu0 0.0
  %1723 = vmatpush1.msra.mxu0 0.0
  %1724 = vmatprep.subr.mxu0 0.0
  %1725 = vmatpush1.msra.mxu0 0.0
  %1726 = vmatprep.subr.mxu0 0.0
  %1727 = vmatpush1.msra.mxu0 0.0
  %1728 = vmatprep.subr.mxu0 0.0
  %1729 = vmatpush1.msra.mxu0 0.0
  %1730 = vmatprep.subr.mxu0 0.0
  %1731 = vmatpush1.msra.mxu0 0.0
  %1732 = vmatprep.subr.mxu0 0.0
  %1733 = vmatpush1.msra.mxu0 0.0
  %1734 = vmatprep.subr.mxu0 0.0
  %1735 = vmatpush1.msra.mxu0 0.0
  %1736 = vmatprep.subr.mxu0 0.0
  %1737 = vmatpush1.msra.mxu0 0.0
  %1738 = vmatprep.subr.mxu0 0.0
  %1739 = vmatpush1.msra.mxu0 0.0
  %1740 = vmatprep.subr.mxu0 0.0
  %1741 = vmatpush1.msra.mxu0 0.0
  %1742 = vmatprep.subr.mxu0 0.0
  %1743 = vmatpush1.msra.mxu0 0.0
  %1744 = vmatprep.subr.mxu0 0.0
  %1745 = vmatpush1.msra.mxu0 0.0
  %1746 = vmatprep.subr.mxu0 0.0
  %1747 = vmatpush1.msra.mxu0 0.0
  %1748 = vmatprep.subr.mxu0 0.0
  %1749 = vmatpush1.msra.mxu0 0.0
  %1750 = vmatprep.subr.mxu0 0.0
  %1751 = vmatpush1.msra.mxu0 %v1718
  %1752 = vmatprep.subr.mxu0 0.0
  %1753 = vmatpush2.msra.mxu0 0.0
  %1754 = vmatprep.subr.mxu0 0.0
  %1755 = vmatpush2.msra.mxu0 0.0
  %1756 = vmatprep.subr.mxu0 0.0
  %1757 = vmatpush2.msra.mxu0 0.0
  %1758 = vmatprep.subr.mxu0 0.0
  %1759 = vmatpush2.msra.mxu0 0.0
  %1760 = vmatprep.subr.mxu0 0.0
  %1761 = vmatpush2.msra.mxu0 0.0
  %1762 = vmatprep.subr.mxu0 0.0
  %1763 = vmatpush2.msra.mxu0 0.0
  %1764 = vmatprep.subr.mxu0 0.0
  %1765 = vmatpush2.msra.mxu0 0.0
  %1766 = vmatprep.subr.mxu0 0.0
  %1767 = vmatpush2.msra.mxu0 0.0
  %1768 = vmatprep.subr.mxu0 0.0
  %1769 = vmatpush2.msra.mxu0 0.0
  %1770 = vmatprep.subr.mxu0 0.0
  %1771 = vmatpush2.msra.mxu0 0.0
  %1772 = vmatprep.subr.mxu0 0.0
  %1773 = vmatpush2.msra.mxu0 0.0
  %1774 = vmatprep.subr.mxu0 0.0
  %1775 = vmatpush2.msra.mxu0 0.0
  %1776 = vmatprep.subr.mxu0 0.0
  %1777 = vmatpush2.msra.mxu0 0.0
  %1778 = vmatprep.subr.mxu0 0.0
  %1779 = vmatpush2.msra.mxu0 0.0
  %1780 = vmatprep.subr.mxu0 0.0
  %1781 = vmatpush2.msra.mxu0 0.0
  %1782 = vmatprep.subr.mxu0 0.0
  %1783 = vmatpush2.msra.mxu0 0.0
  %1784 = vmatprep.mubr.f32.mxu0 0.0
  %1785 = vmatmul.mubr.f32.gmra.mxu0 %v1670
  %v1786 = vpop.f32.mrf.mxu0
  %v1787 = vadd.f32 0.0, %v1786
  %v1788 = vpop.f32.mrf.mxu0
  %1789 = vmatprep.mubr.f32.mxu0 0.0
  %1790 = vmatmul.mubr.f32.gmra.mxu0 %v1673
  %v1791 = vpop.f32.mrf.mxu0
  %v1792 = vadd.f32 0.0, %v1791
  %v1793 = vpop.f32.mrf.mxu0
  %1794 = vmatprep.mubr.f32.mxu0 0.0
  %1795 = vmatmul.mubr.f32.gmra.mxu0 %v1676
  %v1796 = vpop.f32.mrf.mxu0
  %v1797 = vadd.f32 0.0, %v1796
  %v1798 = vpop.f32.mrf.mxu0
  %1799 = vmatprep.mubr.f32.mxu0 0.0
  %1800 = vmatmul.mubr.f32.gmra.mxu0 %v1679
  %v1801 = vpop.f32.mrf.mxu0
  %v1802 = vadd.f32 0.0, %v1801
  %v1803 = vpop.f32.mrf.mxu0
  %1804 = vmatprep.mubr.f32.mxu0 0.0
  %1805 = vmatmul.mubr.f32.gmra.mxu0 %v1682
  %v1806 = vpop.f32.mrf.mxu0
  %v1807 = vadd.f32 0.0, %v1806
  %v1808 = vpop.f32.mrf.mxu0
  %1809 = vmatprep.mubr.f32.mxu0 0.0
  %1810 = vmatmul.mubr.f32.gmra.mxu0 %v1685
  %v1811 = vpop.f32.mrf.mxu0
  %v1812 = vadd.f32 0.0, %v1811
  %v1813 = vpop.f32.mrf.mxu0
  %1814 = vmatprep.mubr.f32.mxu0 0.0
  %1815 = vmatmul.mubr.f32.gmra.mxu0 %v1688
  %v1816 = vpop.f32.mrf.mxu0
  %v1817 = vadd.f32 0.0, %v1816
  %v1818 = vpop.f32.mrf.mxu0
  %1819 = vmatprep.mubr.f32.mxu0 0.0
  %1820 = vmatmul.mubr.f32.gmra.mxu0 %v1691
  %v1821 = vpop.f32.mrf.mxu0
  %v1822 = vadd.f32 0.0, %v1821
  %v1823 = vpop.f32.mrf.mxu0
  %1824 = vmatprep.mubr.f32.mxu0 0.0
  %1825 = vmatmul.mubr.f32.gmra.mxu0 %v1694
  %v1826 = vpop.f32.mrf.mxu0
  %v1827 = vadd.f32 0.0, %v1826
  %v1828 = vpop.f32.mrf.mxu0
  %1829 = vmatprep.mubr.f32.mxu0 0.0
  %1830 = vmatmul.mubr.f32.gmra.mxu0 %v1697
  %v1831 = vpop.f32.mrf.mxu0
  %v1832 = vadd.f32 0.0, %v1831
  %v1833 = vpop.f32.mrf.mxu0
  %1834 = vmatprep.mubr.f32.mxu0 0.0
  %1835 = vmatmul.mubr.f32.gmra.mxu0 %v1700
  %v1836 = vpop.f32.mrf.mxu0
  %v1837 = vadd.f32 0.0, %v1836
  %v1838 = vpop.f32.mrf.mxu0
  %1839 = vmatprep.mubr.f32.mxu0 0.0
  %1840 = vmatmul.mubr.f32.gmra.mxu0 %v1703
  %v1841 = vpop.f32.mrf.mxu0
  %v1842 = vadd.f32 0.0, %v1841
  %v1843 = vpop.f32.mrf.mxu0
  %1844 = vmatprep.mubr.f32.mxu0 0.0
  %1845 = vmatmul.mubr.f32.gmra.mxu0 %v1706
  %v1846 = vpop.f32.mrf.mxu0
  %v1847 = vadd.f32 0.0, %v1846
  %v1848 = vpop.f32.mrf.mxu0
  %1849 = vmatprep.mubr.f32.mxu0 0.0
  %1850 = vmatmul.mubr.f32.gmra.mxu0 %v1709
  %v1851 = vpop.f32.mrf.mxu0
  %v1852 = vadd.f32 0.0, %v1851
  %v1853 = vpop.f32.mrf.mxu0
  %1854 = vmatprep.mubr.f32.mxu0 0.0
  %1855 = vmatmul.mubr.f32.gmra.mxu0 %v1712
  %v1856 = vpop.f32.mrf.mxu0
  %v1857 = vadd.f32 0.0, %v1856
  %v1858 = vpop.f32.mrf.mxu0
  %1859 = vmatprep.mubr.f32.mxu0 0.0
  %1860 = vmatmul.mubr.f32.gmra.mxu0 %v1715
  %v1861 = vpop.f32.mrf.mxu0
  %v1862 = vadd.f32 0.0, %v1861
  %v1863 = vpop.f32.mrf.mxu0
  %1864 = vdwg.mxu0
  %v1865 = vadd.f32 %v1653, %v1787
  %v1866 = vadd.f32 %v1654, %v1792
  %v1867 = vadd.f32 %v1655, %v1797
  %v1868 = vadd.f32 %v1656, %v1802
  %v1869 = vadd.f32 %v1657, %v1807
  %v1870 = vadd.f32 %v1658, %v1812
  %v1871 = vadd.f32 %v1659, %v1817
  %v1872 = vadd.f32 %v1660, %v1822
  %v1873 = vadd.f32 %v1661, %v1827
  %v1874 = vadd.f32 %v1662, %v1832
  %v1875 = vadd.f32 %v1663, %v1837
  %v1876 = vadd.f32 %v1664, %v1842
  %v1877 = vadd.f32 %v1665, %v1847
  %v1878 = vadd.f32 %v1666, %v1852
  %v1879 = vadd.f32 %v1667, %v1857
  %v1880 = vadd.f32 %v1668, %v1862
  %v1881 = vld [vmem:[%s2] sm:$0x1]
  %v1883 = vlaneseq
  %v1884 = vshrl.u32 %v1883, 7
  %v1885 = vsub.s32 0, %v1884
  %v1886 = vrot.slane %v1881, %v1885
  %v1888 = vadd.f32 %v1865, %v1886
  %v1889 = vadd.f32 %v1866, %v1886
  %v1890 = vadd.f32 %v1867, %v1886
  %v1891 = vadd.f32 %v1868, %v1886
  %v1892 = vadd.f32 %v1869, %v1886
  %v1893 = vadd.f32 %v1870, %v1886
  %v1894 = vadd.f32 %v1871, %v1886
  %v1895 = vadd.f32 %v1872, %v1886
  %v1896 = vadd.f32 %v1873, %v1886
  %v1897 = vadd.f32 %v1874, %v1886
  %v1898 = vadd.f32 %v1875, %v1886
  %v1899 = vadd.f32 %v1876, %v1886
  %v1900 = vadd.f32 %v1877, %v1886
  %v1901 = vadd.f32 %v1878, %v1886
  %v1902 = vadd.f32 %v1879, %v1886
  %v1903 = vadd.f32 %v1880, %v1886
  %vm1904 = vcmask 64512
  %1905 = vst.msk [vmem:[%s5] sm:$0xff] %vm1904, %v1888
  %1906 = vst.msk [vmem:[%s5 + $0x8] sm:$0xff] %vm1904, %v1889
  %1907 = vst.msk [vmem:[%s5 + $0x10] sm:$0xff] %vm1904, %v1890
  %1908 = vst.msk [vmem:[%s5 + $0x18] sm:$0xff] %vm1904, %v1891
  %1909 = vst.msk [vmem:[%s5 + $0x20] sm:$0xff] %vm1904, %v1892
  %1910 = vst.msk [vmem:[%s5 + $0x28] sm:$0xff] %vm1904, %v1893
  %1911 = vst.msk [vmem:[%s5 + $0x30] sm:$0xff] %vm1904, %v1894
  %1912 = vst.msk [vmem:[%s5 + $0x38] sm:$0xff] %vm1904, %v1895
  %1913 = vst.msk [vmem:[%s5 + $0x40] sm:$0xff] %vm1904, %v1896
  %1914 = vst.msk [vmem:[%s5 + $0x48] sm:$0xff] %vm1904, %v1897
  %1915 = vst.msk [vmem:[%s5 + $0x50] sm:$0xff] %vm1904, %v1898
  %1916 = vst.msk [vmem:[%s5 + $0x58] sm:$0xff] %vm1904, %v1899
  %1917 = vst.msk [vmem:[%s5 + $0x60] sm:$0xff] %vm1904, %v1900
  %1918 = vst.msk [vmem:[%s5 + $0x68] sm:$0xff] %vm1904, %v1901
  %1919 = vst.msk [vmem:[%s5 + $0x70] sm:$0xff] %vm1904, %v1902
  %1920 = vst.msk [vmem:[%s5 + $0x78] sm:$0xff] %vm1904, %v1903
  // Predicated region
  $region22: #{convnext_stage_forward.3} parent=0 // pred_check
    _
  $region23: #{convnext_stage_forward.3} parent=0 // pred_check_branch
    %1922 = sbr.rel (0) target = $region25
  $region24: #{convnext_stage_forward.3} parent=0 // pred_region
    _
  $region25: #{convnext_stage_forward.3} parent=0 // pred_fallthru
    _
  // Predicated region
  $region26: #{convnext_stage_forward.3} parent=0 // pred_check
    _
  $region27: #{convnext_stage_forward.3} parent=0 // pred_check_branch
    %1924 = sbr.rel (0) target = $region29
  $region28: #{convnext_stage_forward.3} parent=0 // pred_region
    _
  $region29: #{convnext_stage_forward.3} parent=0 // pred_fallthru
    _

// kernel: convnext_stage_forward.4
$region0: #{convnext_stage_forward.4}
  #allocation0 [shape = 'u32[]', space=smem, size = 0x4, offset = 0x4, fixed_abs, tag = 'smem constant byte address 0x4 - core index']
  #allocation1 [shape = 'u32[144,128]{1,0:T(1,128)}', space=vmem, size = 0x12000, scoped, tag = 'internal scratch']
  #allocation2 [shape = 'f32[14,14,8]{2,1,0:T(8,128)}', space=vmem, size = 0x1c000, scoped, tag = 'scratch operand']
  %s0 = inlined_call_operand.vmem [shape: f32[2,8,8,8], index: 0, kind: input, shape index: {}, may-alias: {0,1,2}]
  %s1 = inlined_call_operand.vmem [shape: f32[2,8,8,8], index: 1, kind: input, shape index: {}, may-alias: {0,1,2}]
  %s2 = inlined_call_operand.vmem [shape: f32[2,8,8,8], index: 2, kind: input, shape index: {}, may-alias: {0,1,2}]
  %s3 = inlined_call_operand.vmem [shape: f32[7,7,8], index: 3, kind: input, shape index: {}]
  %s4 = inlined_call_operand.vmem [shape: f32[1,1,8], index: 4, kind: input, shape index: {}]
  %s5 = inlined_call_operand.vmem [shape: f32[1,8], index: 5, kind: input, shape index: {}]
  %s6 = inlined_call_operand.vmem [shape: f32[1,8], index: 6, kind: input, shape index: {}]
  %s7 = inlined_call_operand.vmem [shape: f32[8,32], index: 7, kind: input, shape index: {}]
  %s8 = inlined_call_operand.vmem [shape: f32[1,32], index: 8, kind: input, shape index: {}]
  %s9 = inlined_call_operand.vmem [shape: f32[32,8], index: 9, kind: input, shape index: {}]
  %s10 = inlined_call_operand.vmem [shape: f32[1,8], index: 10, kind: input, shape index: {}]
  %s11 = inlined_call_operand.vmem [shape: f32[1,8], index: 11, kind: input, shape index: {}]
  %s12 = inlined_call_operand.vmem [shape: f32[2,8,8,8], index: 12, kind: output, shape index: {}]
  %s13 = sld [smem:[#allocation0]]
  $region89: #{convnext_stage_forward.4} parent=0
    _
  %s15 = ssub.s32 1, %s13
  %s16 = scalar_select 0, %s15, %s13
  loop: start=0, step=1, limit=4
  $region2: #{convnext_stage_forward.4} parent=0 // loop_pre_header
    _
  $region3: #{convnext_stage_forward.4} parent=0 // loop_header
    %s18 = sphi 0, %s22
    %p19 = scmp.ge.s32.totalorder %s18, 4
    %s25 = sphi 0, %s37
    %s26 = sphi 0, %s33
    %s27 = sphi 0, %s25
    %s28 = sphi 0, %s26
    %s29 = sphi 0, %s27
    %s30 = sphi 0, %s28
    %s48 = sphi 0, %s50
    %s51 = sphi 0, %s48
    %s52 = sphi 0, %s51
    %s68 = sphi 0, %s52
    %s76 = sphi 0, %s78
    %s79 = sphi 0, %s76
    %s80 = sphi 0, %s79
    %s96 = sphi 0, %s80
    %s110 = sphi 0, %s112
    %s113 = sphi 0, %s110
    %s114 = sphi 0, %s113
    %s130 = sphi 0, %s114
    %s134 = sphi 0, %s134
    %s136 = sphi 0, %s134
    %s137 = sphi 0, %s136
    %s151 = sphi 0, %s137
    %s155 = sphi 0, %s155
    %s157 = sphi 0, %s155
    %s158 = sphi 0, %s157
    %s172 = sphi 0, %s158
    %s176 = sphi 0, %s176
    %s178 = sphi 0, %s176
    %s179 = sphi 0, %s178
    %s193 = sphi 0, %s179
    %s197 = sphi 0, %s197
    %s199 = sphi 0, %s197
    %s200 = sphi 0, %s199
    %s214 = sphi 0, %s200
    %s218 = sphi 0, %s218
    %s220 = sphi 0, %s218
    %s221 = sphi 0, %s220
    %s235 = sphi 0, %s221
    %s239 = sphi 0, %s239
    %s241 = sphi 0, %s239
    %s242 = sphi 0, %s241
    %s256 = sphi 0, %s242
    %s260 = sphi 0, %s260
    %s262 = sphi 0, %s260
    %s263 = sphi 0, %s262
    %s277 = sphi 0, %s263
    %s281 = sphi 0, %s281
    %s283 = sphi 0, %s281
    %s284 = sphi 0, %s283
    %s298 = sphi 0, %s284
    %s302 = sphi 0, %s302
    %s304 = sphi 0, %s302
    %s305 = sphi 0, %s304
    %s319 = sphi 0, %s305
    %s327 = sphi 0, %s329
    %s330 = sphi 0, %s327
    %s331 = sphi 0, %s330
    %s347 = sphi 0, %s331
  $region4: #{convnext_stage_forward.4} parent=0 // loop_header_branch
    %21 = sbr.rel (%p19) target = $region8
  $region5: #{convnext_stage_forward.4} parent=0 // loop_body
    %s23 = ssub.s32 %s18, 1
    %s24 = ssub.s32 %s18, 2
    %s31 = sadd.s32 1, %s26
    %p32 = scmp.ge.s32.totalorder %s31, 1
    %s33 = scalar_select %p32, 0, %s31
    %s34 = sadd.s32 1, %s25
    %s35 = scalar_select %p32, %s34, %s25
    %p36 = scmp.ge.s32.totalorder %s35, 2
    %s37 = scalar_select %p36, 0, %s35
    %s38 = ssub.s32 %s26, 1
    %p39 = scmp.gt.s32.totalorder %s38, 0
    %s40 = scalar_select %p39, %s38, 0
    %s41 = ssub.s32 %s33, 1
    %p42 = scmp.gt.s32.totalorder %s41, 0
    %s43 = scalar_select %p42, %s41, 0
    %s44 = ssub.s32 %s25, %s37
    %s45 = ssub.s32 %s40, %s43
    %s46 = sor.u32 %s44, %s45
    %p47 = scmp.eq.s32.totalorder %s46, 0
    %s49 = sadd.s32 %s48, 1
    %s50 = scalar_select %p47, %s48, %s49
    %p53 = pneg %p47
    %p54 = scmp.eq.s32.totalorder %s18, 1
    %p55 = por %p53, %p54
    %p56 = scmp.ne.s32.totalorder %s48, %s51
    %p57 = scmp.eq.s32.totalorder %s18, 0
    %p58 = por %p56, %p57
    %p59 = scmp.ne.s32.totalorder %s48, %s51
    %p60 = scmp.eq.s32.totalorder %s23, 1
    %p61 = por %p59, %p60
    %p62 = scmp.ne.s32.totalorder %s51, %s52
    %p63 = scmp.eq.s32.totalorder %s23, 0
    %p64 = por %p62, %p63
    %p65 = scmp.ne.s32.totalorder %s51, %s52
    %p66 = scmp.eq.s32.totalorder %s24, 1
    %p67 = por %p65, %p66
    %p69 = scmp.ne.s32.totalorder %s52, %s68
    %p70 = scmp.eq.s32.totalorder %s24, 0
    %p71 = por %p69, %p70
    %s72 = ssub.s32 %s25, %s37
    %s73 = ssub.s32 %s26, %s33
    %s74 = sor.u32 %s72, %s73
    %p75 = scmp.eq.s32.totalorder %s74, 0
    %s77 = sadd.s32 %s76, 1
    %s78 = scalar_select %p75, %s76, %s77
    %p81 = pneg %p75
    %p82 = scmp.eq.s32.totalorder %s18, 1
    %p83 = por %p81, %p82
    %p84 = scmp.ne.s32.totalorder %s76, %s79
    %p85 = scmp.eq.s32.totalorder %s18, 0
    %p86 = por %p84, %p85
    %p87 = scmp.ne.s32.totalorder %s76, %s79
    %p88 = scmp.eq.s32.totalorder %s23, 1
    %p89 = por %p87, %p88
    %p90 = scmp.ne.s32.totalorder %s79, %s80
    %p91 = scmp.eq.s32.totalorder %s23, 0
    %p92 = por %p90, %p91
    %p93 = scmp.ne.s32.totalorder %s79, %s80
    %p94 = scmp.eq.s32.totalorder %s24, 1
    %p95 = por %p93, %p94
    %p97 = scmp.ne.s32.totalorder %s80, %s96
    %p98 = scmp.eq.s32.totalorder %s24, 0
    %p99 = por %p97, %p98
    %s100 = sadd.s32 %s26, 1
    %p101 = scmp.lt.s32.totalorder %s100, 0
    %s102 = scalar_select %p101, %s100, 0
    %s103 = sadd.s32 %s33, 1
    %p104 = scmp.lt.s32.totalorder %s103, 0
    %s105 = scalar_select %p104, %s103, 0
    %s106 = ssub.s32 %s25, %s37
    %s107 = ssub.s32 %s102, %s105
    %s108 = sor.u32 %s106, %s107
    %p109 = scmp.eq.s32.totalorder %s108, 0
    %s111 = sadd.s32 %s110, 1
    %s112 = scalar_select %p109, %s110, %s111
    %p115 = pneg %p109
    %p116 = scmp.eq.s32.totalorder %s18, 1
    %p117 = por %p115, %p116
    %p118 = scmp.ne.s32.totalorder %s110, %s113
    %p119 = scmp.eq.s32.totalorder %s18, 0
    %p120 = por %p118, %p119
    %p121 = scmp.ne.s32.totalorder %s110, %s113
    %p122 = scmp.eq.s32.totalorder %s23, 1
    %p123 = por %p121, %p122
    %p124 = scmp.ne.s32.totalorder %s113, %s114
    %p125 = scmp.eq.s32.totalorder %s23, 0
    %p126 = por %p124, %p125
    %p127 = scmp.ne.s32.totalorder %s113, %s114
    %p128 = scmp.eq.s32.totalorder %s24, 1
    %p129 = por %p127, %p128
    %p131 = scmp.ne.s32.totalorder %s114, %s130
    %p132 = scmp.eq.s32.totalorder %s24, 0
    %p133 = por %p131, %p132
    %s135 = sadd.s32 %s134, 1
    %p138 = scmp.eq.s32.totalorder %s18, 1
    %p139 = scmp.ne.s32.totalorder %s134, %s136
    %p140 = scmp.eq.s32.totalorder %s18, 0
    %p141 = por %p139, %p140
    %p142 = scmp.ne.s32.totalorder %s134, %s136
    %p143 = scmp.eq.s32.totalorder %s23, 1
    %p144 = por %p142, %p143
    %p145 = scmp.ne.s32.totalorder %s136, %s137
    %p146 = scmp.eq.s32.totalorder %s23, 0
    %p147 = por %p145, %p146
    %p148 = scmp.ne.s32.totalorder %s136, %s137
    %p149 = scmp.eq.s32.totalorder %s24, 1
    %p150 = por %p148, %p149
    %p152 = scmp.ne.s32.totalorder %s137, %s151
    %p153 = scmp.eq.s32.totalorder %s24, 0
    %p154 = por %p152, %p153
    %s156 = sadd.s32 %s155, 1
    %p159 = scmp.eq.s32.totalorder %s18, 1
    %p160 = scmp.ne.s32.totalorder %s155, %s157
    %p161 = scmp.eq.s32.totalorder %s18, 0
    %p162 = por %p160, %p161
    %p163 = scmp.ne.s32.totalorder %s155, %s157
    %p164 = scmp.eq.s32.totalorder %s23, 1
    %p165 = por %p163, %p164
    %p166 = scmp.ne.s32.totalorder %s157, %s158
    %p167 = scmp.eq.s32.totalorder %s23, 0
    %p168 = por %p166, %p167
    %p169 = scmp.ne.s32.totalorder %s157, %s158
    %p170 = scmp.eq.s32.totalorder %s24, 1
    %p171 = por %p169, %p170
    %p173 = scmp.ne.s32.totalorder %s158, %s172
    %p174 = scmp.eq.s32.totalorder %s24, 0
    %p175 = por %p173, %p174
    %s177 = sadd.s32 %s176, 1
    %p180 = scmp.eq.s32.totalorder %s18, 1
    %p181 = scmp.ne.s32.totalorder %s176, %s178
    %p182 = scmp.eq.s32.totalorder %s18, 0
    %p183 = por %p181, %p182
    %p184 = scmp.ne.s32.totalorder %s176, %s178
    %p185 = scmp.eq.s32.totalorder %s23, 1
    %p186 = por %p184, %p185
    %p187 = scmp.ne.s32.totalorder %s178, %s179
    %p188 = scmp.eq.s32.totalorder %s23, 0
    %p189 = por %p187, %p188
    %p190 = scmp.ne.s32.totalorder %s178, %s179
    %p191 = scmp.eq.s32.totalorder %s24, 1
    %p192 = por %p190, %p191
    %p194 = scmp.ne.s32.totalorder %s179, %s193
    %p195 = scmp.eq.s32.totalorder %s24, 0
    %p196 = por %p194, %p195
    %s198 = sadd.s32 %s197, 1
    %p201 = scmp.eq.s32.totalorder %s18, 1
    %p202 = scmp.ne.s32.totalorder %s197, %s199
    %p203 = scmp.eq.s32.totalorder %s18, 0
    %p204 = por %p202, %p203
    %p205 = scmp.ne.s32.totalorder %s197, %s199
    %p206 = scmp.eq.s32.totalorder %s23, 1
    %p207 = por %p205, %p206
    %p208 = scmp.ne.s32.totalorder %s199, %s200
    %p209 = scmp.eq.s32.totalorder %s23, 0
    %p210 = por %p208, %p209
    %p211 = scmp.ne.s32.totalorder %s199, %s200
    %p212 = scmp.eq.s32.totalorder %s24, 1
    %p213 = por %p211, %p212
    %p215 = scmp.ne.s32.totalorder %s200, %s214
    %p216 = scmp.eq.s32.totalorder %s24, 0
    %p217 = por %p215, %p216
    %s219 = sadd.s32 %s218, 1
    %p222 = scmp.eq.s32.totalorder %s18, 1
    %p223 = scmp.ne.s32.totalorder %s218, %s220
    %p224 = scmp.eq.s32.totalorder %s18, 0
    %p225 = por %p223, %p224
    %p226 = scmp.ne.s32.totalorder %s218, %s220
    %p227 = scmp.eq.s32.totalorder %s23, 1
    %p228 = por %p226, %p227
    %p229 = scmp.ne.s32.totalorder %s220, %s221
    %p230 = scmp.eq.s32.totalorder %s23, 0
    %p231 = por %p229, %p230
    %p232 = scmp.ne.s32.totalorder %s220, %s221
    %p233 = scmp.eq.s32.totalorder %s24, 1
    %p234 = por %p232, %p233
    %p236 = scmp.ne.s32.totalorder %s221, %s235
    %p237 = scmp.eq.s32.totalorder %s24, 0
    %p238 = por %p236, %p237
    %s240 = sadd.s32 %s239, 1
    %p243 = scmp.eq.s32.totalorder %s18, 1
    %p244 = scmp.ne.s32.totalorder %s239, %s241
    %p245 = scmp.eq.s32.totalorder %s18, 0
    %p246 = por %p244, %p245
    %p247 = scmp.ne.s32.totalorder %s239, %s241
    %p248 = scmp.eq.s32.totalorder %s23, 1
    %p249 = por %p247, %p248
    %p250 = scmp.ne.s32.totalorder %s241, %s242
    %p251 = scmp.eq.s32.totalorder %s23, 0
    %p252 = por %p250, %p251
    %p253 = scmp.ne.s32.totalorder %s241, %s242
    %p254 = scmp.eq.s32.totalorder %s24, 1
    %p255 = por %p253, %p254
    %p257 = scmp.ne.s32.totalorder %s242, %s256
    %p258 = scmp.eq.s32.totalorder %s24, 0
    %p259 = por %p257, %p258
    %s261 = sadd.s32 %s260, 1
    %p264 = scmp.eq.s32.totalorder %s18, 1
    %p265 = scmp.ne.s32.totalorder %s260, %s262
    %p266 = scmp.eq.s32.totalorder %s18, 0
    %p267 = por %p265, %p266
    %p268 = scmp.ne.s32.totalorder %s260, %s262
    %p269 = scmp.eq.s32.totalorder %s23, 1
    %p270 = por %p268, %p269
    %p271 = scmp.ne.s32.totalorder %s262, %s263
    %p272 = scmp.eq.s32.totalorder %s23, 0
    %p273 = por %p271, %p272
    %p274 = scmp.ne.s32.totalorder %s262, %s263
    %p275 = scmp.eq.s32.totalorder %s24, 1
    %p276 = por %p274, %p275
    %p278 = scmp.ne.s32.totalorder %s263, %s277
    %p279 = scmp.eq.s32.totalorder %s24, 0
    %p280 = por %p278, %p279
    %s282 = sadd.s32 %s281, 1
    %p285 = scmp.eq.s32.totalorder %s18, 1
    %p286 = scmp.ne.s32.totalorder %s281, %s283
    %p287 = scmp.eq.s32.totalorder %s18, 0
    %p288 = por %p286, %p287
    %p289 = scmp.ne.s32.totalorder %s281, %s283
    %p290 = scmp.eq.s32.totalorder %s23, 1
    %p291 = por %p289, %p290
    %p292 = scmp.ne.s32.totalorder %s283, %s284
    %p293 = scmp.eq.s32.totalorder %s23, 0
    %p294 = por %p292, %p293
    %p295 = scmp.ne.s32.totalorder %s283, %s284
    %p296 = scmp.eq.s32.totalorder %s24, 1
    %p297 = por %p295, %p296
    %p299 = scmp.ne.s32.totalorder %s284, %s298
    %p300 = scmp.eq.s32.totalorder %s24, 0
    %p301 = por %p299, %p300
    %s303 = sadd.s32 %s302, 1
    %p306 = scmp.eq.s32.totalorder %s18, 1
    %p307 = scmp.ne.s32.totalorder %s302, %s304
    %p308 = scmp.eq.s32.totalorder %s18, 0
    %p309 = por %p307, %p308
    %p310 = scmp.ne.s32.totalorder %s302, %s304
    %p311 = scmp.eq.s32.totalorder %s23, 1
    %p312 = por %p310, %p311
    %p313 = scmp.ne.s32.totalorder %s304, %s305
    %p314 = scmp.eq.s32.totalorder %s23, 0
    %p315 = por %p313, %p314
    %p316 = scmp.ne.s32.totalorder %s304, %s305
    %p317 = scmp.eq.s32.totalorder %s24, 1
    %p318 = por %p316, %p317
    %p320 = scmp.ne.s32.totalorder %s305, %s319
    %p321 = scmp.eq.s32.totalorder %s24, 0
    %p322 = por %p320, %p321
    %s323 = ssub.s32 %s25, %s37
    %s324 = ssub.s32 %s26, %s33
    %s325 = sor.u32 %s323, %s324
    %p326 = scmp.eq.s32.totalorder %s325, 0
    %s328 = sadd.s32 %s327, 1
    %s329 = scalar_select %p326, %s327, %s328
    %p332 = pneg %p326
    %p333 = scmp.eq.s32.totalorder %s18, 1
    %p334 = por %p332, %p333
    %p335 = scmp.ne.s32.totalorder %s327, %s330
    %p336 = scmp.eq.s32.totalorder %s18, 0
    %p337 = por %p335, %p336
    %p338 = scmp.ne.s32.totalorder %s327, %s330
    %p339 = scmp.eq.s32.totalorder %s23, 1
    %p340 = por %p338, %p339
    %p341 = scmp.ne.s32.totalorder %s330, %s331
    %p342 = scmp.eq.s32.totalorder %s23, 0
    %p343 = por %p341, %p342
    %p344 = scmp.ne.s32.totalorder %s330, %s331
    %p345 = scmp.eq.s32.totalorder %s24, 1
    %p346 = por %p344, %p345
    %p348 = scmp.ne.s32.totalorder %s331, %s347
    %p349 = scmp.eq.s32.totalorder %s24, 0
    %p350 = por %p348, %p349
    %p351 = scmp.le.s32.totalorder 1, %s18
    %p352 = scmp.lt.s32.totalorder %s18, 3
    %p353 = pnand %p351, %p352
    %p354 = pneg %p353
    // Predicated region
    $region9: #{convnext_stage_forward.4} parent=5 // pred_check
      _
    $region10: #{convnext_stage_forward.4} parent=5 // pred_check_branch
      %356 = sbr.rel (%p353) target = $region12
    $region11: #{convnext_stage_forward.4} parent=5 // pred_region
      %s357 = ssub.s32 %s18, 1
      // Predicated region
      $region13: #{convnext_stage_forward.4} parent=11 // pred_check
        %p358 = pneg %p147
      $region14: #{convnext_stage_forward.4} parent=11 // pred_check_branch
        %360 = sbr.rel (%p358) target = $region16
      $region15: #{convnext_stage_forward.4} parent=11 // pred_region
        _
      $region16: #{convnext_stage_forward.4} parent=11 // pred_fallthru
        _
      // Predicated region
      $region17: #{convnext_stage_forward.4} parent=11 // pred_check
        %p361 = pneg %p168
      $region18: #{convnext_stage_forward.4} parent=11 // pred_check_branch
        %363 = sbr.rel (%p361) target = $region20
      $region19: #{convnext_stage_forward.4} parent=11 // pred_region
        _
      $region20: #{convnext_stage_forward.4} parent=11 // pred_fallthru
        _
      // Predicated region
      $region21: #{convnext_stage_forward.4} parent=11 // pred_check
        %p364 = pneg %p189
      $region22: #{convnext_stage_forward.4} parent=11 // pred_check_branch
        %366 = sbr.rel (%p364) target = $region24
      $region23: #{convnext_stage_forward.4} parent=11 // pred_region
        _
      $region24: #{convnext_stage_forward.4} parent=11 // pred_fallthru
        _
      // Predicated region
      $region25: #{convnext_stage_forward.4} parent=11 // pred_check
        %p367 = pneg %p210
      $region26: #{convnext_stage_forward.4} parent=11 // pred_check_branch
        %369 = sbr.rel (%p367) target = $region28
      $region27: #{convnext_stage_forward.4} parent=11 // pred_region
        _
      $region28: #{convnext_stage_forward.4} parent=11 // pred_fallthru
        _
      // Predicated region
      $region29: #{convnext_stage_forward.4} parent=11 // pred_check
        %p370 = pneg %p231
      $region30: #{convnext_stage_forward.4} parent=11 // pred_check_branch
        %372 = sbr.rel (%p370) target = $region32
      $region31: #{convnext_stage_forward.4} parent=11 // pred_region
        _
      $region32: #{convnext_stage_forward.4} parent=11 // pred_fallthru
        _
      // Predicated region
      $region33: #{convnext_stage_forward.4} parent=11 // pred_check
        %p373 = pneg %p252
      $region34: #{convnext_stage_forward.4} parent=11 // pred_check_branch
        %375 = sbr.rel (%p373) target = $region36
      $region35: #{convnext_stage_forward.4} parent=11 // pred_region
        _
      $region36: #{convnext_stage_forward.4} parent=11 // pred_fallthru
        _
      // Predicated region
      $region37: #{convnext_stage_forward.4} parent=11 // pred_check
        %p376 = pneg %p273
      $region38: #{convnext_stage_forward.4} parent=11 // pred_check_branch
        %378 = sbr.rel (%p376) target = $region40
      $region39: #{convnext_stage_forward.4} parent=11 // pred_region
        _
      $region40: #{convnext_stage_forward.4} parent=11 // pred_fallthru
        _
      // Predicated region
      $region41: #{convnext_stage_forward.4} parent=11 // pred_check
        %p379 = pneg %p294
      $region42: #{convnext_stage_forward.4} parent=11 // pred_check_branch
        %381 = sbr.rel (%p379) target = $region44
      $region43: #{convnext_stage_forward.4} parent=11 // pred_region
        _
      $region44: #{convnext_stage_forward.4} parent=11 // pred_fallthru
        _
      // Predicated region
      $region45: #{convnext_stage_forward.4} parent=11 // pred_check
        %p382 = pneg %p315
      $region46: #{convnext_stage_forward.4} parent=11 // pred_check_branch
        %384 = sbr.rel (%p382) target = $region48
      $region47: #{convnext_stage_forward.4} parent=11 // pred_region
        _
      $region48: #{convnext_stage_forward.4} parent=11 // pred_fallthru
        _
    $region12: #{convnext_stage_forward.4} parent=5 // pred_fallthru
      _
    %p385 = scmp.lt.s32.totalorder %s18, 2
    // Predicated region
    $region49: #{convnext_stage_forward.4} parent=5 // pred_check
      %p386 = pneg %p385
    $region50: #{convnext_stage_forward.4} parent=5 // pred_check_branch
      %388 = sbr.rel (%p386) target = $region52
    $region51: #{convnext_stage_forward.4} parent=5 // pred_region
      // Predicated region
      $region53: #{convnext_stage_forward.4} parent=51 // pred_check
        %p389 = pneg %p58
      $region54: #{convnext_stage_forward.4} parent=51 // pred_check_branch
        %391 = sbr.rel (%p389) target = $region56
      $region55: #{convnext_stage_forward.4} parent=51 // pred_region
        %s392 = ssub.s32 %s26, 1
        %p393 = scmp.gt.s32.totalorder %s392, 0
        %s394 = scalar_select %p393, %s392, 0
        %s395 = smul.u32 8, %s394
        %p396 = scmp.lt.s32.totalorder %s25, 1
        %s397 = scalar_select %p396, %s25, 1
        %p398 = scmp.lt.s32.totalorder %s395, 7
        %s399 = scalar_select %p398, %s395, 7
        %s400 = smul.addr %s397, 8
        %s401 = sadd.s32 %s399, %s400
        %s402 = smul.addr %s401, 8
        %s403 = scalar_lea.vmem %s0, %s402
        %s404 = ssub.s32 %s26, 1
        %p405 = scmp.gt.s32.totalorder %s404, 0
        %s406 = scalar_select %p405, %s404, 0
        %s407 = smul.u32 8, %s406
      $region56: #{convnext_stage_forward.4} parent=51 // pred_fallthru
        _
      // Predicated region
      $region57: #{convnext_stage_forward.4} parent=51 // pred_check
        %p408 = pneg %p86
      $region58: #{convnext_stage_forward.4} parent=51 // pred_check_branch
        %410 = sbr.rel (%p408) target = $region60
      $region59: #{convnext_stage_forward.4} parent=51 // pred_region
        %s411 = smul.u32 8, %s26
        %p412 = scmp.lt.s32.totalorder %s25, 1
        %s413 = scalar_select %p412, %s25, 1
        %p414 = scmp.lt.s32.totalorder %s411, 7
        %s415 = scalar_select %p414, %s411, 7
        %s416 = smul.addr %s413, 8
        %s417 = sadd.s32 %s415, %s416
        %s418 = smul.addr %s417, 8
        %s419 = scalar_lea.vmem %s1, %s418
        %s420 = smul.u32 8, %s26
      $region60: #{convnext_stage_forward.4} parent=51 // pred_fallthru
        _
      // Predicated region
      $region61: #{convnext_stage_forward.4} parent=51 // pred_check
        %p421 = pneg %p120
      $region62: #{convnext_stage_forward.4} parent=51 // pred_check_branch
        %423 = sbr.rel (%p421) target = $region64
      $region63: #{convnext_stage_forward.4} parent=51 // pred_region
        %s424 = sadd.s32 %s26, 1
        %p425 = scmp.lt.s32.totalorder %s424, 0
        %s426 = scalar_select %p425, %s424, 0
        %s427 = smul.u32 8, %s426
        %p428 = scmp.lt.s32.totalorder %s25, 1
        %s429 = scalar_select %p428, %s25, 1
        %p430 = scmp.lt.s32.totalorder %s427, 7
        %s431 = scalar_select %p430, %s427, 7
        %s432 = smul.addr %s429, 8
        %s433 = sadd.s32 %s431, %s432
        %s434 = smul.addr %s433, 8
        %s435 = scalar_lea.vmem %s2, %s434
        %s436 = sadd.s32 %s26, 1
        %p437 = scmp.lt.s32.totalorder %s436, 0
        %s438 = scalar_select %p437, %s436, 0
        %s439 = smul.u32 8, %s438
      $region64: #{convnext_stage_forward.4} parent=51 // pred_fallthru
        _
    $region52: #{convnext_stage_forward.4} parent=5 // pred_fallthru
      _
    %p440 = scmp.le.s32.totalorder 1, %s18
    %p441 = scmp.lt.s32.totalorder %s18, 3
    %p442 = pnand %p440, %p441
    %p443 = pneg %p442
    // Predicated region
    $region65: #{convnext_stage_forward.4} parent=5 // pred_check
      _
    $region66: #{convnext_stage_forward.4} parent=5 // pred_check_branch
      %445 = sbr.rel (%p442) target = $region68
    $region67: #{convnext_stage_forward.4} parent=5 // pred_region
      %s446 = ssub.s32 %s18, 1
      %s447 = ssub.s32 %s28, 1
      %p448 = scmp.gt.s32.totalorder %s447, 0
      %s449 = scalar_select %p448, %s447, 0
      %s450 = smul.u32 8, %s449
      %p451 = scmp.lt.s32.totalorder %s27, 1
      %s452 = scalar_select %p451, %s27, 1
      %p453 = scmp.lt.s32.totalorder %s450, 7
      %s454 = scalar_select %p453, %s450, 7
      %s455 = smul.addr %s452, 8
      %s456 = sadd.s32 %s454, %s455
      %s457 = smul.addr %s456, 8
      %s458 = scalar_lea.vmem %s0, %s457
      %p459 = pneg %p64
      %p460 = pneg %p61
      %s461 = smul.u32 8, %s28
      %p462 = scmp.lt.s32.totalorder %s27, 1
      %s463 = scalar_select %p462, %s27, 1
      %p464 = scmp.lt.s32.totalorder %s461, 7
      %s465 = scalar_select %p464, %s461, 7
      %s466 = smul.addr %s463, 8
      %s467 = sadd.s32 %s465, %s466
      %s468 = smul.addr %s467, 8
      %s469 = scalar_lea.vmem %s1, %s468
      %p470 = pneg %p92
      %p471 = pneg %p89
      %s472 = sadd.s32 %s28, 1
      %p473 = scmp.lt.s32.totalorder %s472, 0
      %s474 = scalar_select %p473, %s472, 0
      %s475 = smul.u32 8, %s474
      %p476 = scmp.lt.s32.totalorder %s27, 1
      %s477 = scalar_select %p476, %s27, 1
      %p478 = scmp.lt.s32.totalorder %s475, 7
      %s479 = scalar_select %p478, %s475, 7
      %s480 = smul.addr %s477, 8
      %s481 = sadd.s32 %s479, %s480
      %s482 = smul.addr %s481, 8
      %s483 = scalar_lea.vmem %s2, %s482
      %p484 = pneg %p126
      %p485 = pneg %p123
      %p486 = pneg %p147
      %p487 = pneg %p144
      %p488 = pneg %p168
      %p489 = pneg %p165
      %p490 = pneg %p189
      %p491 = pneg %p186
      %p492 = pneg %p210
      %p493 = pneg %p207
      %p494 = pneg %p231
      %p495 = pneg %p228
      %p496 = pneg %p252
      %p497 = pneg %p249
      %p498 = pneg %p273
      %p499 = pneg %p270
      %p500 = pneg %p294
      %p501 = pneg %p291
      %p502 = pneg %p315
      %p503 = pneg %p312
      %p504 = pneg %p343
      %p505 = pneg %p340
      %s506 = smul.u32 8, %s28
      %p507 = scmp.lt.s32.totalorder %s27, 1
      %s508 = scalar_select %p507, %s27, 1
      %p509 = scmp.lt.s32.totalorder %s506, 7
      %s510 = scalar_select %p509, %s506, 7
      %s511 = smul.addr %s508, 8
      %s512 = sadd.s32 %s510, %s511
      %s513 = smul.addr %s512, 8
      %s514 = scalar_lea.vmem %s12, %s513
      %s515 = ssub.s32 %s28, 1
      %p516 = scmp.gt.s32.totalorder %s515, 0
      %s517 = scalar_select %p516, %s515, 0
      %s518 = smul.u32 8, %s517
      %p519 = scmp.lt.s32.totalorder %s27, 1
      %s520 = scalar_select %p519, %s27, 1
      %p521 = scmp.lt.s32.totalorder %s518, 7
      %s522 = scalar_select %p521, %s518, 7
      %s523 = smul.addr %s520, 8
      %s524 = sadd.s32 %s522, %s523
      %s525 = smul.addr %s524, 8
      %s526 = scalar_lea.vmem %s0, %s525
      %s527 = ssub.s32 %s28, 1
      %p528 = scmp.gt.s32.totalorder %s527, 0
      %s529 = scalar_select %p528, %s527, 0
      %s530 = smul.u32 8, %s529
      %s531 = smul.u32 8, %s28
      %p532 = scmp.lt.s32.totalorder %s27, 1
      %s533 = scalar_select %p532, %s27, 1
      %p534 = scmp.lt.s32.totalorder %s531, 7
      %s535 = scalar_select %p534, %s531, 7
      %s536 = smul.addr %s533, 8
      %s537 = sadd.s32 %s535, %s536
      %s538 = smul.addr %s537, 8
      %s539 = scalar_lea.vmem %s1, %s538
      %s540 = smul.u32 8, %s28
      %s541 = sadd.s32 %s28, 1
      %p542 = scmp.lt.s32.totalorder %s541, 0
      %s543 = scalar_select %p542, %s541, 0
      %s544 = smul.u32 8, %s543
      %p545 = scmp.lt.s32.totalorder %s27, 1
      %s546 = scalar_select %p545, %s27, 1
      %p547 = scmp.lt.s32.totalorder %s544, 7
      %s548 = scalar_select %p547, %s544, 7
      %s549 = smul.addr %s546, 8
      %s550 = sadd.s32 %s548, %s549
      %s551 = smul.addr %s550, 8
      %s552 = scalar_lea.vmem %s2, %s551
      %s553 = sadd.s32 %s28, 1
      %p554 = scmp.lt.s32.totalorder %s553, 0
      %s555 = scalar_select %p554, %s553, 0
      %s556 = smul.u32 8, %s555
      %s557 = smul.u32 8, %s28
      %p558 = scmp.lt.s32.totalorder %s27, 1
      %s559 = scalar_select %p558, %s27, 1
      %p560 = scmp.lt.s32.totalorder %s557, 7
      %s561 = scalar_select %p560, %s557, 7
      %s562 = smul.addr %s559, 8
      %s563 = sadd.s32 %s561, %s562
      %s564 = smul.addr %s563, 8
      %s565 = scalar_lea.vmem %s12, %s564
      %s566 = smul.u32 8, %s28
      %vm567 = vcmask 64512
      %568 = vst.msk [vmem:[#allocation2] sm:$0xff] %vm567, 0.0
      %vm569 = vcmask 62464
      %570 = vst.msk [vmem:[#allocation2 + $0x8] sm:$0x3f] %vm569, 0.0
      %571 = vst.msk [vmem:[#allocation2 + $0x10] sm:$0xff] %vm567, 0.0
      %572 = vst.msk [vmem:[#allocation2 + $0x18] sm:$0x3f] %vm569, 0.0
      %573 = vst.msk [vmem:[#allocation2 + $0x20] sm:$0xff] %vm567, 0.0
      %574 = vst.msk [vmem:[#allocation2 + $0x28] sm:$0x3f] %vm569, 0.0
      %575 = vst.msk [vmem:[#allocation2 + $0x30] sm:$0xff] %vm567, 0.0
      %576 = vst.msk [vmem:[#allocation2 + $0x38] sm:$0x3f] %vm569, 0.0
      %577 = vst.msk [vmem:[#allocation2 + $0x40] sm:$0xff] %vm567, 0.0
      %578 = vst.msk [vmem:[#allocation2 + $0x48] sm:$0x3f] %vm569, 0.0
      %579 = vst.msk [vmem:[#allocation2 + $0x50] sm:$0xff] %vm567, 0.0
      %580 = vst.msk [vmem:[#allocation2 + $0x58] sm:$0x3f] %vm569, 0.0
      %581 = vst.msk [vmem:[#allocation2 + $0x60] sm:$0xff] %vm567, 0.0
      %582 = vst.msk [vmem:[#allocation2 + $0x68] sm:$0x3f] %vm569, 0.0
      %583 = vst.msk [vmem:[#allocation2 + $0x70] sm:$0xff] %vm567, 0.0
      %584 = vst.msk [vmem:[#allocation2 + $0x78] sm:$0x3f] %vm569, 0.0
      %585 = vst.msk [vmem:[#allocation2 + $0x80] sm:$0xff] %vm567, 0.0
      %586 = vst.msk [vmem:[#allocation2 + $0x88] sm:$0x3f] %vm569, 0.0
      %587 = vst.msk [vmem:[#allocation2 + $0x90] sm:$0xff] %vm567, 0.0
      %588 = vst.msk [vmem:[#allocation2 + $0x98] sm:$0x3f] %vm569, 0.0
      %589 = vst.msk [vmem:[#allocation2 + $0xa0] sm:$0xff] %vm567, 0.0
      %590 = vst.msk [vmem:[#allocation2 + $0xa8] sm:$0x3f] %vm569, 0.0
      %591 = vst.msk [vmem:[#allocation2 + $0xb0] sm:$0xff] %vm567, 0.0
      %592 = vst.msk [vmem:[#allocation2 + $0xb8] sm:$0x3f] %vm569, 0.0
      %593 = vst.msk [vmem:[#allocation2 + $0xc0] sm:$0xff] %vm567, 0.0
      %594 = vst.msk [vmem:[#allocation2 + $0xc8] sm:$0x3f] %vm569, 0.0
      %595 = vst.msk [vmem:[#allocation2 + $0xd0] sm:$0xff] %vm567, 0.0
      %596 = vst.msk [vmem:[#allocation2 + $0xd8] sm:$0x3f] %vm569, 0.0
      %v597 = vld [vmem:[%s539] sm:$0xff]
      %v598 = vld [vmem:[%s539 + $0x8] sm:$0xff]
      %v599 = vld [vmem:[%s539 + $0x10] sm:$0xff]
      %v600 = vld [vmem:[%s539 + $0x18] sm:$0xff]
      %v601 = vld [vmem:[%s539 + $0x20] sm:$0xff]
      %v602 = vld [vmem:[%s539 + $0x28] sm:$0xff]
      %v603 = vld [vmem:[%s539 + $0x30] sm:$0xff]
      %v604 = vld [vmem:[%s539 + $0x38] sm:$0xff]
      %s605 = scalar_lea.vmem [#allocation2], 48
      %606 = vst.msk [vmem:[%s605 + $0x3] sm:$0xff] %vm567, %v597
      %607 = vst.msk [vmem:[%s605 + $0x13] sm:$0xff] %vm567, %v598
      %608 = vst.msk [vmem:[%s605 + $0x23] sm:$0xff] %vm567, %v599
      %609 = vst.msk [vmem:[%s605 + $0x33] sm:$0xff] %vm567, %v600
      %610 = vst.msk [vmem:[%s605 + $0x43] sm:$0xff] %vm567, %v601
      %611 = vst.msk [vmem:[%s605 + $0x53] sm:$0xff] %vm567, %v602
      %612 = vst.msk [vmem:[%s605 + $0x63] sm:$0xff] %vm567, %v603
      %613 = vst.msk [vmem:[%s605 + $0x73] sm:$0xff] %vm567, %v604
      %p614 = scmp.gt.s32.totalorder %s28, 0
      // Predicated region
      $region69: #{convnext_stage_forward.4} parent=67 // pred_check
        %p615 = pneg %p614
      $region70: #{convnext_stage_forward.4} parent=67 // pred_check_branch
        %617 = sbr.rel (%p615) target = $region72
      $region71: #{convnext_stage_forward.4} parent=67 // pred_region
        %s618 = scalar_lea.vmem %s526, 40
        %v619 = vld [vmem:[%s618] sm:$0xff]
        %v620 = vld [vmem:[%s618 + $0x8] sm:$0xff]
        %v621 = vld [vmem:[%s618 + $0x10] sm:$0xff]
        %622 = vst.msk [vmem:[#allocation2 + $0x3] sm:$0xff] %vm567, %v619
        %623 = vst.msk [vmem:[#allocation2 + $0x13] sm:$0xff] %vm567, %v620
        %624 = vst.msk [vmem:[#allocation2 + $0x23] sm:$0xff] %vm567, %v621
      $region72: #{convnext_stage_forward.4} parent=67 // pred_fallthru
        _
      %p625 = scmp.lt.s32.totalorder %s28, 0
      // Predicated region
      $region73: #{convnext_stage_forward.4} parent=67 // pred_check
        %p626 = pneg %p625
      $region74: #{convnext_stage_forward.4} parent=67 // pred_check_branch
        %628 = sbr.rel (%p626) target = $region76
      $region75: #{convnext_stage_forward.4} parent=67 // pred_region
        %v629 = vld [vmem:[%s552] sm:$0xff]
        %v630 = vld [vmem:[%s552 + $0x8] sm:$0xff]
        %v631 = vld [vmem:[%s552 + $0x10] sm:$0xff]
        %s632 = scalar_lea.vmem [#allocation2], 176
        %633 = vst.msk [vmem:[%s632 + $0x3] sm:$0xff] %vm567, %v629
        %634 = vst.msk [vmem:[%s632 + $0x13] sm:$0xff] %vm567, %v630
        %635 = vst.msk [vmem:[%s632 + $0x23] sm:$0xff] %vm567, %v631
      $region76: #{convnext_stage_forward.4} parent=67 // pred_fallthru
        _
      %v636 = vld [vmem:[#allocation2] sm:$0xff]
      %v637 = vld [vmem:[#allocation2 + $0x8] sm:$0x3f]
      %v638 = vld [vmem:[#allocation2 + $0x10] sm:$0xff]
      %v639 = vld [vmem:[#allocation2 + $0x18] sm:$0x3f]
      %v640 = vld [vmem:[#allocation2 + $0x20] sm:$0xff]
      %v641 = vld [vmem:[#allocation2 + $0x28] sm:$0x3f]
      %v642 = vld [vmem:[#allocation2 + $0x30] sm:$0xff]
      %v643 = vld [vmem:[#allocation2 + $0x38] sm:$0x3f]
      %v644 = vld [vmem:[#allocation2 + $0x40] sm:$0xff]
      %v645 = vld [vmem:[#allocation2 + $0x48] sm:$0x3f]
      %v646 = vld [vmem:[#allocation2 + $0x50] sm:$0xff]
      %v647 = vld [vmem:[#allocation2 + $0x58] sm:$0x3f]
      %v648 = vld [vmem:[#allocation2 + $0x60] sm:$0xff]
      %v649 = vld [vmem:[#allocation2 + $0x68] sm:$0x3f]
      %v650 = vld [vmem:[#allocation2 + $0x70] sm:$0xff]
      %v651 = vld [vmem:[#allocation2 + $0x78] sm:$0x3f]
      %v652 = vld [vmem:[#allocation2 + $0x80] sm:$0xff]
      %v653 = vld [vmem:[#allocation2 + $0x88] sm:$0x3f]
      %v654 = vld [vmem:[#allocation2 + $0x90] sm:$0xff]
      %v655 = vld [vmem:[#allocation2 + $0x98] sm:$0x3f]
      %v656 = vld [vmem:[#allocation2 + $0xa0] sm:$0xff]
      %v657 = vld [vmem:[#allocation2 + $0xa8] sm:$0x3f]
      %v658 = vld [vmem:[#allocation2 + $0xb0] sm:$0xff]
      %v659 = vld [vmem:[#allocation2 + $0xb8] sm:$0x3f]
      %v660 = vld [vmem:[#allocation2 + $0xc0] sm:$0xff]
      %v661 = vld [vmem:[#allocation2 + $0xc8] sm:$0x3f]
      %v662 = vld [vmem:[#allocation2 + $0xd0] sm:$0xff]
      %v663 = vld [vmem:[#allocation2 + $0xd8] sm:$0x3f]
      %v664 = vld [vmem:[%s3] sm:$0x7f]
      %v665 = vld [vmem:[%s3 + $0x8] sm:$0x7f]
      %v666 = vld [vmem:[%s3 + $0x10] sm:$0x7f]
      %v667 = vld [vmem:[%s3 + $0x18] sm:$0x7f]
      %v668 = vld [vmem:[%s3 + $0x20] sm:$0x7f]
      %v669 = vld [vmem:[%s3 + $0x28] sm:$0x7f]
      %v670 = vld [vmem:[%s3 + $0x30] sm:$0x7f]
      %v671 = vlaneseq
      %v672 = vshrl.u32 %v671, 7
      %v673 = vsub.s32 0, %v672
      %v674 = vrot.slane %v664, %v673
      %v675 = vmul.f32 %v636, %v674
      %v676 = vmul.f32 %v638, %v674
      %v677 = vmul.f32 %v640, %v674
      %v678 = vmul.f32 %v642, %v674
      %v679 = vmul.f32 %v644, %v674
      %v680 = vmul.f32 %v646, %v674
      %v681 = vmul.f32 %v648, %v674
      %v682 = vmul.f32 %v650, %v674
      %v683 = vadd.f32 %v675, 0.0
      %v684 = vadd.f32 %v676, 0.0
      %v685 = vadd.f32 %v677, 0.0
      %v686 = vadd.f32 %v678, 0.0
      %v687 = vadd.f32 %v679, 0.0
      %v688 = vadd.f32 %v680, 0.0
      %v689 = vadd.f32 %v681, 0.0
      %v690 = vadd.f32 %v682, 0.0
      %v691 = vlaneseq
      %v692 = vshrl.u32 %v691, 7
      %v693 = vsub.s32 0, %v692
      %v694 = vrot.slane %v665, %v693
      %v695 = vmul.f32 %v638, %v694
      %v696 = vmul.f32 %v640, %v694
      %v697 = vmul.f32 %v642, %v694
      %v698 = vmul.f32 %v644, %v694
      %v699 = vmul.f32 %v646, %v694
      %v700 = vmul.f32 %v648, %v694
      %v701 = vmul.f32 %v650, %v694
      %v702 = vmul.f32 %v652, %v694
      %v703 = vadd.f32 %v683, %v695
      %v704 = vadd.f32 %v684, %v696
      %v705 = vadd.f32 %v685, %v697
      %v706 = vadd.f32 %v686, %v698
      %v707 = vadd.f32 %v687, %v699
      %v708 = vadd.f32 %v688, %v700
      %v709 = vadd.f32 %v689, %v701
      %v710 = vadd.f32 %v690, %v702
      %v711 = vlaneseq
      %v712 = vshrl.u32 %v711, 7
      %v713 = vsub.s32 0, %v712
      %v714 = vrot.slane %v666, %v713
      %v715 = vmul.f32 %v640, %v714
      %v716 = vmul.f32 %v642, %v714
      %v717 = vmul.f32 %v644, %v714
      %v718 = vmul.f32 %v646, %v714
      %v719 = vmul.f32 %v648, %v714
      %v720 = vmul.f32 %v650, %v714
      %v721 = vmul.f32 %v652, %v714
      %v722 = vmul.f32 %v654, %v714
      %v723 = vadd.f32 %v703, %v715
      %v724 = vadd.f32 %v704, %v716
      %v725 = vadd.f32 %v705, %v717
      %v726 = vadd.f32 %v706, %v718
      %v727 = vadd.f32 %v707, %v719
      %v728 = vadd.f32 %v708, %v720
      %v729 = vadd.f32 %v709, %v721
      %v730 = vadd.f32 %v710, %v722
      %v731 = vlaneseq
      %v732 = vshrl.u32 %v731, 7
      %v733 = vsub.s32 0, %v732
      %v734 = vrot.slane %v667, %v733
      %v735 = vmul.f32 %v642, %v734
      %v736 = vmul.f32 %v644, %v734
      %v737 = vmul.f32 %v646, %v734
      %v738 = vmul.f32 %v648, %v734
      %v739 = vmul.f32 %v650, %v734
      %v740 = vmul.f32 %v652, %v734
      %v741 = vmul.f32 %v654, %v734
      %v742 = vmul.f32 %v656, %v734
      %v743 = vadd.f32 %v723, %v735
      %v744 = vadd.f32 %v724, %v736
      %v745 = vadd.f32 %v725, %v737
      %v746 = vadd.f32 %v726, %v738
      %v747 = vadd.f32 %v727, %v739
      %v748 = vadd.f32 %v728, %v740
      %v749 = vadd.f32 %v729, %v741
      %v750 = vadd.f32 %v730, %v742
      %v751 = vlaneseq
      %v752 = vshrl.u32 %v751, 7
      %v753 = vsub.s32 0, %v752
      %v754 = vrot.slane %v668, %v753
      %v755 = vmul.f32 %v644, %v754
      %v756 = vmul.f32 %v646, %v754
      %v757 = vmul.f32 %v648, %v754
      %v758 = vmul.f32 %v650, %v754
      %v759 = vmul.f32 %v652, %v754
      %v760 = vmul.f32 %v654, %v754
      %v761 = vmul.f32 %v656, %v754
      %v762 = vmul.f32 %v658, %v754
      %v763 = vadd.f32 %v743, %v755
      %v764 = vadd.f32 %v744, %v756
      %v765 = vadd.f32 %v745, %v757
      %v766 = vadd.f32 %v746, %v758
      %v767 = vadd.f32 %v747, %v759
      %v768 = vadd.f32 %v748, %v760
      %v769 = vadd.f32 %v749, %v761
      %v770 = vadd.f32 %v750, %v762
      %v771 = vlaneseq
      %v772 = vshrl.u32 %v771, 7
      %v773 = vsub.s32 0, %v772
      %v774 = vrot.slane %v669, %v773
      %v775 = vmul.f32 %v646, %v774
      %v776 = vmul.f32 %v648, %v774
      %v777 = vmul.f32 %v650, %v774
      %v778 = vmul.f32 %v652, %v774
      %v779 = vmul.f32 %v654, %v774
      %v780 = vmul.f32 %v656, %v774
      %v781 = vmul.f32 %v658, %v774
      %v782 = vmul.f32 %v660, %v774
      %v783 = vadd.f32 %v763, %v775
      %v784 = vadd.f32 %v764, %v776
      %v785 = vadd.f32 %v765, %v777
      %v786 = vadd.f32 %v766, %v778
      %v787 = vadd.f32 %v767, %v779
      %v788 = vadd.f32 %v768, %v780
      %v789 = vadd.f32 %v769, %v781
      %v790 = vadd.f32 %v770, %v782
      %v791 = vlaneseq
      %v792 = vshrl.u32 %v791, 7
      %v793 = vsub.s32 0, %v792
      %v794 = vrot.slane %v670, %v793
      %v795 = vmul.f32 %v648, %v794
      %v796 = vmul.f32 %v650, %v794
      %v797 = vmul.f32 %v652, %v794
      %v798 = vmul.f32 %v654, %v794
      %v799 = vmul.f32 %v656, %v794
      %v800 = vmul.f32 %v658, %v794
      %v801 = vmul.f32 %v660, %v794
      %v802 = vmul.f32 %v662, %v794
      %v803 = vadd.f32 %v783, %v795
      %v804 = vadd.f32 %v784, %v796
      %v805 = vadd.f32 %v785, %v797
      %v806 = vadd.f32 %v786, %v798
      %v807 = vadd.f32 %v787, %v799
      %v808 = vadd.f32 %v788, %v800
      %v809 = vadd.f32 %v789, %v801
      %v810 = vadd.f32 %v790, %v802
      %v811 = vlaneseq
      %v812 = vshrl.u32 %v811, 7
      %v813 = vsub.s32 1, %v812
      %v814 = vrot.slane %v664, %v813
      %v815 = vmul.f32 %v636, %v814
      %v816 = vmul.f32 %v637, %v814
      %v817 = vmul.f32 %v638, %v814
      %v818 = vmul.f32 %v639, %v814
      %v819 = vmul.f32 %v640, %v814
      %v820 = vmul.f32 %v641, %v814
      %v821 = vmul.f32 %v642, %v814
      %v822 = vmul.f32 %v643, %v814
      %v823 = vmul.f32 %v644, %v814
      %v824 = vmul.f32 %v645, %v814
      %v825 = vmul.f32 %v646, %v814
      %v826 = vmul.f32 %v647, %v814
      %v827 = vmul.f32 %v648, %v814
      %v828 = vmul.f32 %v649, %v814
      %v829 = vmul.f32 %v650, %v814
      %v830 = vmul.f32 %v651, %v814
      %vm847 = vcmask 1046528
      %v848 = vrot.slane %v815, 1
      %v849 = vrot.slane %v816, 1
      %v850 = vsel %vm847, %v848, %v849
      %v851 = vrot.slane %v817, 1
      %v852 = vrot.slane %v818, 1
      %v853 = vsel %vm847, %v851, %v852
      %v854 = vrot.slane %v819, 1
      %v855 = vrot.slane %v820, 1
      %v856 = vsel %vm847, %v854, %v855
      %v857 = vrot.slane %v821, 1
      %v858 = vrot.slane %v822, 1
      %v859 = vsel %vm847, %v857, %v858
      %v860 = vrot.slane %v823, 1
      %v861 = vrot.slane %v824, 1
      %v862 = vsel %vm847, %v860, %v861
      %v863 = vrot.slane %v825, 1
      %v864 = vrot.slane %v826, 1
      %v865 = vsel %vm847, %v863, %v864
      %v866 = vrot.slane %v827, 1
      %v867 = vrot.slane %v828, 1
      %v868 = vsel %vm847, %v866, %v867
      %v869 = vrot.slane %v829, 1
      %v870 = vrot.slane %v830, 1
      %v871 = vsel %vm847, %v869, %v870
      %v880 = vadd.f32 %v803, %v850
      %v881 = vadd.f32 %v804, %v853
      %v882 = vadd.f32 %v805, %v856
      %v883 = vadd.f32 %v806, %v859
      %v884 = vadd.f32 %v807, %v862
      %v885 = vadd.f32 %v808, %v865
      %v886 = vadd.f32 %v809, %v868
      %v887 = vadd.f32 %v810, %v871
      %v888 = vlaneseq
      %v889 = vshrl.u32 %v888, 7
      %v890 = vsub.s32 1, %v889
      %v891 = vrot.slane %v665, %v890
      %v892 = vmul.f32 %v638, %v891
      %v893 = vmul.f32 %v639, %v891
      %v894 = vmul.f32 %v640, %v891
      %v895 = vmul.f32 %v641, %v891
      %v896 = vmul.f32 %v642, %v891
      %v897 = vmul.f32 %v643, %v891
      %v898 = vmul.f32 %v644, %v891
      %v899 = vmul.f32 %v645, %v891
      %v900 = vmul.f32 %v646, %v891
      %v901 = vmul.f32 %v647, %v891
      %v902 = vmul.f32 %v648, %v891
      %v903 = vmul.f32 %v649, %v891
      %v904 = vmul.f32 %v650, %v891
      %v905 = vmul.f32 %v651, %v891
      %v906 = vmul.f32 %v652, %v891
      %v907 = vmul.f32 %v653, %v891
      %v924 = vrot.slane %v892, 1
      %v925 = vrot.slane %v893, 1
      %v926 = vsel %vm847, %v924, %v925
      %v927 = vrot.slane %v894, 1
      %v928 = vrot.slane %v895, 1
      %v929 = vsel %vm847, %v927, %v928
      %v930 = vrot.slane %v896, 1
      %v931 = vrot.slane %v897, 1
      %v932 = vsel %vm847, %v930, %v931
      %v933 = vrot.slane %v898, 1
      %v934 = vrot.slane %v899, 1
      %v935 = vsel %vm847, %v933, %v934
      %v936 = vrot.slane %v900, 1
      %v937 = vrot.slane %v901, 1
      %v938 = vsel %vm847, %v936, %v937
      %v939 = vrot.slane %v902, 1
      %v940 = vrot.slane %v903, 1
      %v941 = vsel %vm847, %v939, %v940
      %v942 = vrot.slane %v904, 1
      %v943 = vrot.slane %v905, 1
      %v944 = vsel %vm847, %v942, %v943
      %v945 = vrot.slane %v906, 1
      %v946 = vrot.slane %v907, 1
      %v947 = vsel %vm847, %v945, %v946
      %v956 = vadd.f32 %v880, %v926
      %v957 = vadd.f32 %v881, %v929
      %v958 = vadd.f32 %v882, %v932
      %v959 = vadd.f32 %v883, %v935
      %v960 = vadd.f32 %v884, %v938
      %v961 = vadd.f32 %v885, %v941
      %v962 = vadd.f32 %v886, %v944
      %v963 = vadd.f32 %v887, %v947
      %v964 = vlaneseq
      %v965 = vshrl.u32 %v964, 7
      %v966 = vsub.s32 1, %v965
      %v967 = vrot.slane %v666, %v966
      %v968 = vmul.f32 %v640, %v967
      %v969 = vmul.f32 %v641, %v967
      %v970 = vmul.f32 %v642, %v967
      %v971 = vmul.f32 %v643, %v967
      %v972 = vmul.f32 %v644, %v967
      %v973 = vmul.f32 %v645, %v967
      %v974 = vmul.f32 %v646, %v967
      %v975 = vmul.f32 %v647, %v967
      %v976 = vmul.f32 %v648, %v967
      %v977 = vmul.f32 %v649, %v967
      %v978 = vmul.f32 %v650, %v967
      %v979 = vmul.f32 %v651, %v967
      %v980 = vmul.f32 %v652, %v967
      %v981 = vmul.f32 %v653, %v967
      %v982 = vmul.f32 %v654, %v967
      %v983 = vmul.f32 %v655, %v967
      %v1000 = vrot.slane %v968, 1
      %v1001 = vrot.slane %v969, 1
      %v1002 = vsel %vm847, %v1000, %v1001
      %v1003 = vrot.slane %v970, 1
      %v1004 = vrot.slane %v971, 1
      %v1005 = vsel %vm847, %v1003, %v1004
      %v1006 = vrot.slane %v972, 1
      %v1007 = vrot.slane %v973, 1
      %v1008 = vsel %vm847, %v1006, %v1007
      %v1009 = vrot.slane %v974, 1
      %v1010 = vrot.slane %v975, 1
      %v1011 = vsel %vm847, %v1009, %v1010
      %v1012 = vrot.slane %v976, 1
      %v1013 = vrot.slane %v977, 1
      %v1014 = vsel %vm847, %v1012, %v1013
      %v1015 = vrot.slane %v978, 1
      %v1016 = vrot.slane %v979, 1
      %v1017 = vsel %vm847, %v1015, %v1016
      %v1018 = vrot.slane %v980, 1
      %v1019 = vrot.slane %v981, 1
      %v1020 = vsel %vm847, %v1018, %v1019
      %v1021 = vrot.slane %v982, 1
      %v1022 = vrot.slane %v983, 1
      %v1023 = vsel %vm847, %v1021, %v1022
      %v1032 = vadd.f32 %v956, %v1002
      %v1033 = vadd.f32 %v957, %v1005
      %v1034 = vadd.f32 %v958, %v1008
      %v1035 = vadd.f32 %v959, %v1011
      %v1036 = vadd.f32 %v960, %v1014
      %v1037 = vadd.f32 %v961, %v1017
      %v1038 = vadd.f32 %v962, %v1020
      %v1039 = vadd.f32 %v963, %v1023
      %v1040 = vlaneseq
      %v1041 = vshrl.u32 %v1040, 7
      %v1042 = vsub.s32 1, %v1041
      %v1043 = vrot.slane %v667, %v1042
      %v1044 = vmul.f32 %v642, %v1043
      %v1045 = vmul.f32 %v643, %v1043
      %v1046 = vmul.f32 %v644, %v1043
      %v1047 = vmul.f32 %v645, %v1043
      %v1048 = vmul.f32 %v646, %v1043
      %v1049 = vmul.f32 %v647, %v1043
      %v1050 = vmul.f32 %v648, %v1043
      %v1051 = vmul.f32 %v649, %v1043
      %v1052 = vmul.f32 %v650, %v1043
      %v1053 = vmul.f32 %v651, %v1043
      %v1054 = vmul.f32 %v652, %v1043
      %v1055 = vmul.f32 %v653, %v1043
      %v1056 = vmul.f32 %v654, %v1043
      %v1057 = vmul.f32 %v655, %v1043
      %v1058 = vmul.f32 %v656, %v1043
      %v1059 = vmul.f32 %v657, %v1043
      %v1076 = vrot.slane %v1044, 1
      %v1077 = vrot.slane %v1045, 1
      %v1078 = vsel %vm847, %v1076, %v1077
      %v1079 = vrot.slane %v1046, 1
      %v1080 = vrot.slane %v1047, 1
      %v1081 = vsel %vm847, %v1079, %v1080
      %v1082 = vrot.slane %v1048, 1
      %v1083 = vrot.slane %v1049, 1
      %v1084 = vsel %vm847, %v1082, %v1083
      %v1085 = vrot.slane %v1050, 1
      %v1086 = vrot.slane %v1051, 1
      %v1087 = vsel %vm847, %v1085, %v1086
      %v1088 = vrot.slane %v1052, 1
      %v1089 = vrot.slane %v1053, 1
      %v1090 = vsel %vm847, %v1088, %v1089
      %v1091 = vrot.slane %v1054, 1
      %v1092 = vrot.slane %v1055, 1
      %v1093 = vsel %vm847, %v1091, %v1092
      %v1094 = vrot.slane %v1056, 1
      %v1095 = vrot.slane %v1057, 1
      %v1096 = vsel %vm847, %v1094, %v1095
      %v1097 = vrot.slane %v1058, 1
      %v1098 = vrot.slane %v1059, 1
      %v1099 = vsel %vm847, %v1097, %v1098
      %v1108 = vadd.f32 %v1032, %v1078
      %v1109 = vadd.f32 %v1033, %v1081
      %v1110 = vadd.f32 %v1034, %v1084
      %v1111 = vadd.f32 %v1035, %v1087
      %v1112 = vadd.f32 %v1036, %v1090
      %v1113 = vadd.f32 %v1037, %v1093
      %v1114 = vadd.f32 %v1038, %v1096
      %v1115 = vadd.f32 %v1039, %v1099
      %v1116 = vlaneseq
      %v1117 = vshrl.u32 %v1116, 7
      %v1118 = vsub.s32 1, %v1117
      %v1119 = vrot.slane %v668, %v1118
      %v1120 = vmul.f32 %v644, %v1119
      %v1121 = vmul.f32 %v645, %v1119
      %v1122 = vmul.f32 %v646, %v1119
      %v1123 = vmul.f32 %v647, %v1119
      %v1124 = vmul.f32 %v648, %v1119
      %v1125 = vmul.f32 %v649, %v1119
      %v1126 = vmul.f32 %v650, %v1119
      %v1127 = vmul.f32 %v651, %v1119
      %v1128 = vmul.f32 %v652, %v1119
      %v1129 = vmul.f32 %v653, %v1119
      %v1130 = vmul.f32 %v654, %v1119
      %v1131 = vmul.f32 %v655, %v1119
      %v1132 = vmul.f32 %v656, %v1119
      %v1133 = vmul.f32 %v657, %v1119
      %v1134 = vmul.f32 %v658, %v1119
      %v1135 = vmul.f32 %v659, %v1119
      %v1152 = vrot.slane %v1120, 1
      %v1153 = vrot.slane %v1121, 1
      %v1154 = vsel %vm847, %v1152, %v1153
      %v1155 = vrot.slane %v1122, 1
      %v1156 = vrot.slane %v1123, 1
      %v1157 = vsel %vm847, %v1155, %v1156
      %v1158 = vrot.slane %v1124, 1
      %v1159 = vrot.slane %v1125, 1
      %v1160 = vsel %vm847, %v1158, %v1159
      %v1161 = vrot.slane %v1126, 1
      %v1162 = vrot.slane %v1127, 1
      %v1163 = vsel %vm847, %v1161, %v1162
      %v1164 = vrot.slane %v1128, 1
      %v1165 = vrot.slane %v1129, 1
      %v1166 = vsel %vm847, %v1164, %v1165
      %v1167 = vrot.slane %v1130, 1
      %v1168 = vrot.slane %v1131, 1
      %v1169 = vsel %vm847, %v1167, %v1168
      %v1170 = vrot.slane %v1132, 1
      %v1171 = vrot.slane %v1133, 1
      %v1172 = vsel %vm847, %v1170, %v1171
      %v1173 = vrot.slane %v1134, 1
      %v1174 = vrot.slane %v1135, 1
      %v1175 = vsel %vm847, %v1173, %v1174
      %v1184 = vadd.f32 %v1108, %v1154
      %v1185 = vadd.f32 %v1109, %v1157
      %v1186 = vadd.f32 %v1110, %v1160
      %v1187 = vadd.f32 %v1111, %v1163
      %v1188 = vadd.f32 %v1112, %v1166
      %v1189 = vadd.f32 %v1113, %v1169
      %v1190 = vadd.f32 %v1114, %v1172
      %v1191 = vadd.f32 %v1115, %v1175
      %v1192 = vlaneseq
      %v1193 = vshrl.u32 %v1192, 7
      %v1194 = vsub.s32 1, %v1193
      %v1195 = vrot.slane %v669, %v1194
      %v1196 = vmul.f32 %v646, %v1195
      %v1197 = vmul.f32 %v647, %v1195
      %v1198 = vmul.f32 %v648, %v1195
      %v1199 = vmul.f32 %v649, %v1195
      %v1200 = vmul.f32 %v650, %v1195
      %v1201 = vmul.f32 %v651, %v1195
      %v1202 = vmul.f32 %v652, %v1195
      %v1203 = vmul.f32 %v653, %v1195
      %v1204 = vmul.f32 %v654, %v1195
      %v1205 = vmul.f32 %v655, %v1195
      %v1206 = vmul.f32 %v656, %v1195
      %v1207 = vmul.f32 %v657, %v1195
      %v1208 = vmul.f32 %v658, %v1195
      %v1209 = vmul.f32 %v659, %v1195
      %v1210 = vmul.f32 %v660, %v1195
      %v1211 = vmul.f32 %v661, %v1195
      %v1228 = vrot.slane %v1196, 1
      %v1229 = vrot.slane %v1197, 1
      %v1230 = vsel %vm847, %v1228, %v1229
      %v1231 = vrot.slane %v1198, 1
      %v1232 = vrot.slane %v1199, 1
      %v1233 = vsel %vm847, %v1231, %v1232
      %v1234 = vrot.slane %v1200, 1
      %v1235 = vrot.slane %v1201, 1
      %v1236 = vsel %vm847, %v1234, %v1235
      %v1237 = vrot.slane %v1202, 1
      %v1238 = vrot.slane %v1203, 1
      %v1239 = vsel %vm847, %v1237, %v1238
      %v1240 = vrot.slane %v1204, 1
      %v1241 = vrot.slane %v1205, 1
      %v1242 = vsel %vm847, %v1240, %v1241
      %v1243 = vrot.slane %v1206, 1
      %v1244 = vrot.slane %v1207, 1
      %v1245 = vsel %vm847, %v1243, %v1244
      %v1246 = vrot.slane %v1208, 1
      %v1247 = vrot.slane %v1209, 1
      %v1248 = vsel %vm847, %v1246, %v1247
      %v1249 = vrot.slane %v1210, 1
      %v1250 = vrot.slane %v1211, 1
      %v1251 = vsel %vm847, %v1249, %v1250
      %v1260 = vadd.f32 %v1184, %v1230
      %v1261 = vadd.f32 %v1185, %v1233
      %v1262 = vadd.f32 %v1186, %v1236
      %v1263 = vadd.f32 %v1187, %v1239
      %v1264 = vadd.f32 %v1188, %v1242
      %v1265 = vadd.f32 %v1189, %v1245
      %v1266 = vadd.f32 %v1190, %v1248
      %v1267 = vadd.f32 %v1191, %v1251
      %v1268 = vlaneseq
      %v1269 = vshrl.u32 %v1268, 7
      %v1270 = vsub.s32 1, %v1269
      %v1271 = vrot.slane %v670, %v1270
      %v1272 = vmul.f32 %v648, %v1271
      %v1273 = vmul.f32 %v649, %v1271
      %v1274 = vmul.f32 %v650, %v1271
      %v1275 = vmul.f32 %v651, %v1271
      %v1276 = vmul.f32 %v652, %v1271
      %v1277 = vmul.f32 %v653, %v1271
      %v1278 = vmul.f32 %v654, %v1271
      %v1279 = vmul.f32 %v655, %v1271
      %v1280 = vmul.f32 %v656, %v1271
      %v1281 = vmul.f32 %v657, %v1271
      %v1282 = vmul.f32 %v658, %v1271
      %v1283 = vmul.f32 %v659, %v1271
      %v1284 = vmul.f32 %v660, %v1271
      %v1285 = vmul.f32 %v661, %v1271
      %v1286 = vmul.f32 %v662, %v1271
      %v1287 = vmul.f32 %v663, %v1271
      %v1304 = vrot.slane %v1272, 1
      %v1305 = vrot.slane %v1273, 1
      %v1306 = vsel %vm847, %v1304, %v1305
      %v1307 = vrot.slane %v1274, 1
      %v1308 = vrot.slane %v1275, 1
      %v1309 = vsel %vm847, %v1307, %v1308
      %v1310 = vrot.slane %v1276, 1
      %v1311 = vrot.slane %v1277, 1
      %v1312 = vsel %vm847, %v1310, %v1311
      %v1313 = vrot.slane %v1278, 1
      %v1314 = vrot.slane %v1279, 1
      %v1315 = vsel %vm847, %v1313, %v1314
      %v1316 = vrot.slane %v1280, 1
      %v1317 = vrot.slane %v1281, 1
      %v1318 = vsel %vm847, %v1316, %v1317
      %v1319 = vrot.slane %v1282, 1
      %v1320 = vrot.slane %v1283, 1
      %v1321 = vsel %vm847, %v1319, %v1320
      %v1322 = vrot.slane %v1284, 1
      %v1323 = vrot.slane %v1285, 1
      %v1324 = vsel %vm847, %v1322, %v1323
      %v1325 = vrot.slane %v1286, 1
      %v1326 = vrot.slane %v1287, 1
      %v1327 = vsel %vm847, %v1325, %v1326
      %v1336 = vadd.f32 %v1260, %v1306
      %v1337 = vadd.f32 %v1261, %v1309
      %v1338 = vadd.f32 %v1262, %v1312
      %v1339 = vadd.f32 %v1263, %v1315
      %v1340 = vadd.f32 %v1264, %v1318
      %v1341 = vadd.f32 %v1265, %v1321
      %v1342 = vadd.f32 %v1266, %v1324
      %v1343 = vadd.f32 %v1267, %v1327
      %v1344 = vlaneseq
      %v1345 = vshrl.u32 %v1344, 7
      %v1346 = vsub.s32 2, %v1345
      %v1347 = vrot.slane %v664, %v1346
      %v1348 = vmul.f32 %v636, %v1347
      %v1349 = vmul.f32 %v637, %v1347
      %v1350 = vmul.f32 %v638, %v1347
      %v1351 = vmul.f32 %v639, %v1347
      %v1352 = vmul.f32 %v640, %v1347
      %v1353 = vmul.f32 %v641, %v1347
      %v1354 = vmul.f32 %v642, %v1347
      %v1355 = vmul.f32 %v643, %v1347
      %v1356 = vmul.f32 %v644, %v1347
      %v1357 = vmul.f32 %v645, %v1347
      %v1358 = vmul.f32 %v646, %v1347
      %v1359 = vmul.f32 %v647, %v1347
      %v1360 = vmul.f32 %v648, %v1347
      %v1361 = vmul.f32 %v649, %v1347
      %v1362 = vmul.f32 %v650, %v1347
      %v1363 = vmul.f32 %v651, %v1347
      %vm1380 = vcmask 1045504
      %v1381 = vrot.slane %v1348, 2
      %v1382 = vrot.slane %v1349, 2
      %v1383 = vsel %vm1380, %v1381, %v1382
      %v1384 = vrot.slane %v1350, 2
      %v1385 = vrot.slane %v1351, 2
      %v1386 = vsel %vm1380, %v1384, %v1385
      %v1387 = vrot.slane %v1352, 2
      %v1388 = vrot.slane %v1353, 2
      %v1389 = vsel %vm1380, %v1387, %v1388
      %v1390 = vrot.slane %v1354, 2
      %v1391 = vrot.slane %v1355, 2
      %v1392 = vsel %vm1380, %v1390, %v1391
      %v1393 = vrot.slane %v1356, 2
      %v1394 = vrot.slane %v1357, 2
      %v1395 = vsel %vm1380, %v1393, %v1394
      %v1396 = vrot.slane %v1358, 2
      %v1397 = vrot.slane %v1359, 2
      %v1398 = vsel %vm1380, %v1396, %v1397
      %v1399 = vrot.slane %v1360, 2
      %v1400 = vrot.slane %v1361, 2
      %v1401 = vsel %vm1380, %v1399, %v1400
      %v1402 = vrot.slane %v1362, 2
      %v1403 = vrot.slane %v1363, 2
      %v1404 = vsel %vm1380, %v1402, %v1403
      %v1413 = vadd.f32 %v1336, %v1383
      %v1414 = vadd.f32 %v1337, %v1386
      %v1415 = vadd.f32 %v1338, %v1389
      %v1416 = vadd.f32 %v1339, %v1392
      %v1417 = vadd.f32 %v1340, %v1395
      %v1418 = vadd.f32 %v1341, %v1398
      %v1419 = vadd.f32 %v1342, %v1401
      %v1420 = vadd.f32 %v1343, %v1404
      %v1421 = vlaneseq
      %v1422 = vshrl.u32 %v1421, 7
      %v1423 = vsub.s32 2, %v1422
      %v1424 = vrot.slane %v665, %v1423
      %v1425 = vmul.f32 %v638, %v1424
      %v1426 = vmul.f32 %v639, %v1424
      %v1427 = vmul.f32 %v640, %v1424
      %v1428 = vmul.f32 %v641, %v1424
      %v1429 = vmul.f32 %v642, %v1424
      %v1430 = vmul.f32 %v643, %v1424
      %v1431 = vmul.f32 %v644, %v1424
      %v1432 = vmul.f32 %v645, %v1424
      %v1433 = vmul.f32 %v646, %v1424
      %v1434 = vmul.f32 %v647, %v1424
      %v1435 = vmul.f32 %v648, %v1424
      %v1436 = vmul.f32 %v649, %v1424
      %v1437 = vmul.f32 %v650, %v1424
      %v1438 = vmul.f32 %v651, %v1424
      %v1439 = vmul.f32 %v652, %v1424
      %v1440 = vmul.f32 %v653, %v1424
      %v1457 = vrot.slane %v1425, 2
      %v1458 = vrot.slane %v1426, 2
      %v1459 = vsel %vm1380, %v1457, %v1458
      %v1460 = vrot.slane %v1427, 2
      %v1461 = vrot.slane %v1428, 2
      %v1462 = vsel %vm1380, %v1460, %v1461
      %v1463 = vrot.slane %v1429, 2
      %v1464 = vrot.slane %v1430, 2
      %v1465 = vsel %vm1380, %v1463, %v1464
      %v1466 = vrot.slane %v1431, 2
      %v1467 = vrot.slane %v1432, 2
      %v1468 = vsel %vm1380, %v1466, %v1467
      %v1469 = vrot.slane %v1433, 2
      %v1470 = vrot.slane %v1434, 2
      %v1471 = vsel %vm1380, %v1469, %v1470
      %v1472 = vrot.slane %v1435, 2
      %v1473 = vrot.slane %v1436, 2
      %v1474 = vsel %vm1380, %v1472, %v1473
      %v1475 = vrot.slane %v1437, 2
      %v1476 = vrot.slane %v1438, 2
      %v1477 = vsel %vm1380, %v1475, %v1476
      %v1478 = vrot.slane %v1439, 2
      %v1479 = vrot.slane %v1440, 2
      %v1480 = vsel %vm1380, %v1478, %v1479
      %v1489 = vadd.f32 %v1413, %v1459
      %v1490 = vadd.f32 %v1414, %v1462
      %v1491 = vadd.f32 %v1415, %v1465
      %v1492 = vadd.f32 %v1416, %v1468
      %v1493 = vadd.f32 %v1417, %v1471
      %v1494 = vadd.f32 %v1418, %v1474
      %v1495 = vadd.f32 %v1419, %v1477
      %v1496 = vadd.f32 %v1420, %v1480
      %v1497 = vlaneseq
      %v1498 = vshrl.u32 %v1497, 7
      %v1499 = vsub.s32 2, %v1498
      %v1500 = vrot.slane %v666, %v1499
      %v1501 = vmul.f32 %v640, %v1500
      %v1502 = vmul.f32 %v641, %v1500
      %v1503 = vmul.f32 %v642, %v1500
      %v1504 = vmul.f32 %v643, %v1500
      %v1505 = vmul.f32 %v644, %v1500
      %v1506 = vmul.f32 %v645, %v1500
      %v1507 = vmul.f32 %v646, %v1500
      %v1508 = vmul.f32 %v647, %v1500
      %v1509 = vmul.f32 %v648, %v1500
      %v1510 = vmul.f32 %v649, %v1500
      %v1511 = vmul.f32 %v650, %v1500
      %v1512 = vmul.f32 %v651, %v1500
      %v1513 = vmul.f32 %v652, %v1500
      %v1514 = vmul.f32 %v653, %v1500
      %v1515 = vmul.f32 %v654, %v1500
      %v1516 = vmul.f32 %v655, %v1500
      %v1533 = vrot.slane %v1501, 2
      %v1534 = vrot.slane %v1502, 2
      %v1535 = vsel %vm1380, %v1533, %v1534
      %v1536 = vrot.slane %v1503, 2
      %v1537 = vrot.slane %v1504, 2
      %v1538 = vsel %vm1380, %v1536, %v1537
      %v1539 = vrot.slane %v1505, 2
      %v1540 = vrot.slane %v1506, 2
      %v1541 = vsel %vm1380, %v1539, %v1540
      %v1542 = vrot.slane %v1507, 2
      %v1543 = vrot.slane %v1508, 2
      %v1544 = vsel %vm1380, %v1542, %v1543
      %v1545 = vrot.slane %v1509, 2
      %v1546 = vrot.slane %v1510, 2
      %v1547 = vsel %vm1380, %v1545, %v1546
      %v1548 = vrot.slane %v1511, 2
      %v1549 = vrot.slane %v1512, 2
      %v1550 = vsel %vm1380, %v1548, %v1549
      %v1551 = vrot.slane %v1513, 2
      %v1552 = vrot.slane %v1514, 2
      %v1553 = vsel %vm1380, %v1551, %v1552
      %v1554 = vrot.slane %v1515, 2
      %v1555 = vrot.slane %v1516, 2
      %v1556 = vsel %vm1380, %v1554, %v1555
      %v1565 = vadd.f32 %v1489, %v1535
      %v1566 = vadd.f32 %v1490, %v1538
      %v1567 = vadd.f32 %v1491, %v1541
      %v1568 = vadd.f32 %v1492, %v1544
      %v1569 = vadd.f32 %v1493, %v1547
      %v1570 = vadd.f32 %v1494, %v1550
      %v1571 = vadd.f32 %v1495, %v1553
      %v1572 = vadd.f32 %v1496, %v1556
      %v1573 = vlaneseq
      %v1574 = vshrl.u32 %v1573, 7
      %v1575 = vsub.s32 2, %v1574
      %v1576 = vrot.slane %v667, %v1575
      %v1577 = vmul.f32 %v642, %v1576
      %v1578 = vmul.f32 %v643, %v1576
      %v1579 = vmul.f32 %v644, %v1576
      %v1580 = vmul.f32 %v645, %v1576
      %v1581 = vmul.f32 %v646, %v1576
      %v1582 = vmul.f32 %v647, %v1576
      %v1583 = vmul.f32 %v648, %v1576
      %v1584 = vmul.f32 %v649, %v1576
      %v1585 = vmul.f32 %v650, %v1576
      %v1586 = vmul.f32 %v651, %v1576
      %v1587 = vmul.f32 %v652, %v1576
      %v1588 = vmul.f32 %v653, %v1576
      %v1589 = vmul.f32 %v654, %v1576
      %v1590 = vmul.f32 %v655, %v1576
      %v1591 = vmul.f32 %v656, %v1576
      %v1592 = vmul.f32 %v657, %v1576
      %v1609 = vrot.slane %v1577, 2
      %v1610 = vrot.slane %v1578, 2
      %v1611 = vsel %vm1380, %v1609, %v1610
      %v1612 = vrot.slane %v1579, 2
      %v1613 = vrot.slane %v1580, 2
      %v1614 = vsel %vm1380, %v1612, %v1613
      %v1615 = vrot.slane %v1581, 2
      %v1616 = vrot.slane %v1582, 2
      %v1617 = vsel %vm1380, %v1615, %v1616
      %v1618 = vrot.slane %v1583, 2
      %v1619 = vrot.slane %v1584, 2
      %v1620 = vsel %vm1380, %v1618, %v1619
      %v1621 = vrot.slane %v1585, 2
      %v1622 = vrot.slane %v1586, 2
      %v1623 = vsel %vm1380, %v1621, %v1622
      %v1624 = vrot.slane %v1587, 2
      %v1625 = vrot.slane %v1588, 2
      %v1626 = vsel %vm1380, %v1624, %v1625
      %v1627 = vrot.slane %v1589, 2
      %v1628 = vrot.slane %v1590, 2
      %v1629 = vsel %vm1380, %v1627, %v1628
      %v1630 = vrot.slane %v1591, 2
      %v1631 = vrot.slane %v1592, 2
      %v1632 = vsel %vm1380, %v1630, %v1631
      %v1641 = vadd.f32 %v1565, %v1611
      %v1642 = vadd.f32 %v1566, %v1614
      %v1643 = vadd.f32 %v1567, %v1617
      %v1644 = vadd.f32 %v1568, %v1620
      %v1645 = vadd.f32 %v1569, %v1623
      %v1646 = vadd.f32 %v1570, %v1626
      %v1647 = vadd.f32 %v1571, %v1629
      %v1648 = vadd.f32 %v1572, %v1632
      %v1649 = vlaneseq
      %v1650 = vshrl.u32 %v1649, 7
      %v1651 = vsub.s32 2, %v1650
      %v1652 = vrot.slane %v668, %v1651
      %v1653 = vmul.f32 %v644, %v1652
      %v1654 = vmul.f32 %v645, %v1652
      %v1655 = vmul.f32 %v646, %v1652
      %v1656 = vmul.f32 %v647, %v1652
      %v1657 = vmul.f32 %v648, %v1652
      %v1658 = vmul.f32 %v649, %v1652
      %v1659 = vmul.f32 %v650, %v1652
      %v1660 = vmul.f32 %v651, %v1652
      %v1661 = vmul.f32 %v652, %v1652
      %v1662 = vmul.f32 %v653, %v1652
      %v1663 = vmul.f32 %v654, %v1652
      %v1664 = vmul.f32 %v655, %v1652
      %v1665 = vmul.f32 %v656, %v1652
      %v1666 = vmul.f32 %v657, %v1652
      %v1667 = vmul.f32 %v658, %v1652
      %v1668 = vmul.f32 %v659, %v1652
      %v1685 = vrot.slane %v1653, 2
      %v1686 = vrot.slane %v1654, 2
      %v1687 = vsel %vm1380, %v1685, %v1686
      %v1688 = vrot.slane %v1655, 2
      %v1689 = vrot.slane %v1656, 2
      %v1690 = vsel %vm1380, %v1688, %v1689
      %v1691 = vrot.slane %v1657, 2
      %v1692 = vrot.slane %v1658, 2
      %v1693 = vsel %vm1380, %v1691, %v1692
      %v1694 = vrot.slane %v1659, 2
      %v1695 = vrot.slane %v1660, 2
      %v1696 = vsel %vm1380, %v1694, %v1695
      %v1697 = vrot.slane %v1661, 2
      %v1698 = vrot.slane %v1662, 2
      %v1699 = vsel %vm1380, %v1697, %v1698
      %v1700 = vrot.slane %v1663, 2
      %v1701 = vrot.slane %v1664, 2
      %v1702 = vsel %vm1380, %v1700, %v1701
      %v1703 = vrot.slane %v1665, 2
      %v1704 = vrot.slane %v1666, 2
      %v1705 = vsel %vm1380, %v1703, %v1704
      %v1706 = vrot.slane %v1667, 2
      %v1707 = vrot.slane %v1668, 2
      %v1708 = vsel %vm1380, %v1706, %v1707
      %v1717 = vadd.f32 %v1641, %v1687
      %v1718 = vadd.f32 %v1642, %v1690
      %v1719 = vadd.f32 %v1643, %v1693
      %v1720 = vadd.f32 %v1644, %v1696
      %v1721 = vadd.f32 %v1645, %v1699
      %v1722 = vadd.f32 %v1646, %v1702
      %v1723 = vadd.f32 %v1647, %v1705
      %v1724 = vadd.f32 %v1648, %v1708
      %v1725 = vlaneseq
      %v1726 = vshrl.u32 %v1725, 7
      %v1727 = vsub.s32 2, %v1726
      %v1728 = vrot.slane %v669, %v1727
      %v1729 = vmul.f32 %v646, %v1728
      %v1730 = vmul.f32 %v647, %v1728
      %v1731 = vmul.f32 %v648, %v1728
      %v1732 = vmul.f32 %v649, %v1728
      %v1733 = vmul.f32 %v650, %v1728
      %v1734 = vmul.f32 %v651, %v1728
      %v1735 = vmul.f32 %v652, %v1728
      %v1736 = vmul.f32 %v653, %v1728
      %v1737 = vmul.f32 %v654, %v1728
      %v1738 = vmul.f32 %v655, %v1728
      %v1739 = vmul.f32 %v656, %v1728
      %v1740 = vmul.f32 %v657, %v1728
      %v1741 = vmul.f32 %v658, %v1728
      %v1742 = vmul.f32 %v659, %v1728
      %v1743 = vmul.f32 %v660, %v1728
      %v1744 = vmul.f32 %v661, %v1728
      %v1761 = vrot.slane %v1729, 2
      %v1762 = vrot.slane %v1730, 2
      %v1763 = vsel %vm1380, %v1761, %v1762
      %v1764 = vrot.slane %v1731, 2
      %v1765 = vrot.slane %v1732, 2
      %v1766 = vsel %vm1380, %v1764, %v1765
      %v1767 = vrot.slane %v1733, 2
      %v1768 = vrot.slane %v1734, 2
      %v1769 = vsel %vm1380, %v1767, %v1768
      %v1770 = vrot.slane %v1735, 2
      %v1771 = vrot.slane %v1736, 2
      %v1772 = vsel %vm1380, %v1770, %v1771
      %v1773 = vrot.slane %v1737, 2
      %v1774 = vrot.slane %v1738, 2
      %v1775 = vsel %vm1380, %v1773, %v1774
      %v1776 = vrot.slane %v1739, 2
      %v1777 = vrot.slane %v1740, 2
      %v1778 = vsel %vm1380, %v1776, %v1777
      %v1779 = vrot.slane %v1741, 2
      %v1780 = vrot.slane %v1742, 2
      %v1781 = vsel %vm1380, %v1779, %v1780
      %v1782 = vrot.slane %v1743, 2
      %v1783 = vrot.slane %v1744, 2
      %v1784 = vsel %vm1380, %v1782, %v1783
      %v1793 = vadd.f32 %v1717, %v1763
      %v1794 = vadd.f32 %v1718, %v1766
      %v1795 = vadd.f32 %v1719, %v1769
      %v1796 = vadd.f32 %v1720, %v1772
      %v1797 = vadd.f32 %v1721, %v1775
      %v1798 = vadd.f32 %v1722, %v1778
      %v1799 = vadd.f32 %v1723, %v1781
      %v1800 = vadd.f32 %v1724, %v1784
      %v1801 = vlaneseq
      %v1802 = vshrl.u32 %v1801, 7
      %v1803 = vsub.s32 2, %v1802
      %v1804 = vrot.slane %v670, %v1803
      %v1805 = vmul.f32 %v648, %v1804
      %v1806 = vmul.f32 %v649, %v1804
      %v1807 = vmul.f32 %v650, %v1804
      %v1808 = vmul.f32 %v651, %v1804
      %v1809 = vmul.f32 %v652, %v1804
      %v1810 = vmul.f32 %v653, %v1804
      %v1811 = vmul.f32 %v654, %v1804
      %v1812 = vmul.f32 %v655, %v1804
      %v1813 = vmul.f32 %v656, %v1804
      %v1814 = vmul.f32 %v657, %v1804
      %v1815 = vmul.f32 %v658, %v1804
      %v1816 = vmul.f32 %v659, %v1804
      %v1817 = vmul.f32 %v660, %v1804
      %v1818 = vmul.f32 %v661, %v1804
      %v1819 = vmul.f32 %v662, %v1804
      %v1820 = vmul.f32 %v663, %v1804
      %v1837 = vrot.slane %v1805, 2
      %v1838 = vrot.slane %v1806, 2
      %v1839 = vsel %vm1380, %v1837, %v1838
      %v1840 = vrot.slane %v1807, 2
      %v1841 = vrot.slane %v1808, 2
      %v1842 = vsel %vm1380, %v1840, %v1841
      %v1843 = vrot.slane %v1809, 2
      %v1844 = vrot.slane %v1810, 2
      %v1845 = vsel %vm1380, %v1843, %v1844
      %v1846 = vrot.slane %v1811, 2
      %v1847 = vrot.slane %v1812, 2
      %v1848 = vsel %vm1380, %v1846, %v1847
      %v1849 = vrot.slane %v1813, 2
      %v1850 = vrot.slane %v1814, 2
      %v1851 = vsel %vm1380, %v1849, %v1850
      %v1852 = vrot.slane %v1815, 2
      %v1853 = vrot.slane %v1816, 2
      %v1854 = vsel %vm1380, %v1852, %v1853
      %v1855 = vrot.slane %v1817, 2
      %v1856 = vrot.slane %v1818, 2
      %v1857 = vsel %vm1380, %v1855, %v1856
      %v1858 = vrot.slane %v1819, 2
      %v1859 = vrot.slane %v1820, 2
      %v1860 = vsel %vm1380, %v1858, %v1859
      %v1869 = vadd.f32 %v1793, %v1839
      %v1870 = vadd.f32 %v1794, %v1842
      %v1871 = vadd.f32 %v1795, %v1845
      %v1872 = vadd.f32 %v1796, %v1848
      %v1873 = vadd.f32 %v1797, %v1851
      %v1874 = vadd.f32 %v1798, %v1854
      %v1875 = vadd.f32 %v1799, %v1857
      %v1876 = vadd.f32 %v1800, %v1860
      %v1877 = vlaneseq
      %v1878 = vshrl.u32 %v1877, 7
      %v1879 = vsub.s32 3, %v1878
      %v1880 = vrot.slane %v664, %v1879
      %v1881 = vmul.f32 %v636, %v1880
      %v1882 = vmul.f32 %v637, %v1880
      %v1883 = vmul.f32 %v638, %v1880
      %v1884 = vmul.f32 %v639, %v1880
      %v1885 = vmul.f32 %v640, %v1880
      %v1886 = vmul.f32 %v641, %v1880
      %v1887 = vmul.f32 %v642, %v1880
      %v1888 = vmul.f32 %v643, %v1880
      %v1889 = vmul.f32 %v644, %v1880
      %v1890 = vmul.f32 %v645, %v1880
      %v1891 = vmul.f32 %v646, %v1880
      %v1892 = vmul.f32 %v647, %v1880
      %v1893 = vmul.f32 %v648, %v1880
      %v1894 = vmul.f32 %v649, %v1880
      %v1895 = vmul.f32 %v650, %v1880
      %v1896 = vmul.f32 %v651, %v1880
      %vm1913 = vcmask 1044480
      %v1914 = vrot.slane %v1881, 3
      %v1915 = vrot.slane %v1882, 3
      %v1916 = vsel %vm1913, %v1914, %v1915
      %v1917 = vrot.slane %v1883, 3
      %v1918 = vrot.slane %v1884, 3
      %v1919 = vsel %vm1913, %v1917, %v1918
      %v1920 = vrot.slane %v1885, 3
      %v1921 = vrot.slane %v1886, 3
      %v1922 = vsel %vm1913, %v1920, %v1921
      %v1923 = vrot.slane %v1887, 3
      %v1924 = vrot.slane %v1888, 3
      %v1925 = vsel %vm1913, %v1923, %v1924
      %v1926 = vrot.slane %v1889, 3
      %v1927 = vrot.slane %v1890, 3
      %v1928 = vsel %vm1913, %v1926, %v1927
      %v1929 = vrot.slane %v1891, 3
      %v1930 = vrot.slane %v1892, 3
      %v1931 = vsel %vm1913, %v1929, %v1930
      %v1932 = vrot.slane %v1893, 3
      %v1933 = vrot.slane %v1894, 3
      %v1934 = vsel %vm1913, %v1932, %v1933
      %v1935 = vrot.slane %v1895, 3
      %v1936 = vrot.slane %v1896, 3
      %v1937 = vsel %vm1913, %v1935, %v1936
      %v1946 = vadd.f32 %v1869, %v1916
      %v1947 = vadd.f32 %v1870, %v1919
      %v1948 = vadd.f32 %v1871, %v1922
      %v1949 = vadd.f32 %v1872, %v1925
      %v1950 = vadd.f32 %v1873, %v1928
      %v1951 = vadd.f32 %v1874, %v1931
      %v1952 = vadd.f32 %v1875, %v1934
      %v1953 = vadd.f32 %v1876, %v1937
      %v1954 = vlaneseq
      %v1955 = vshrl.u32 %v1954, 7
      %v1956 = vsub.s32 3, %v1955
      %v1957 = vrot.slane %v665, %v1956
      %v1958 = vmul.f32 %v638, %v1957
      %v1959 = vmul.f32 %v639, %v1957
      %v1960 = vmul.f32 %v640, %v1957
      %v1961 = vmul.f32 %v641, %v1957
      %v1962 = vmul.f32 %v642, %v1957
      %v1963 = vmul.f32 %v643, %v1957
      %v1964 = vmul.f32 %v644, %v1957
      %v1965 = vmul.f32 %v645, %v1957
      %v1966 = vmul.f32 %v646, %v1957
      %v1967 = vmul.f32 %v647, %v1957
      %v1968 = vmul.f32 %v648, %v1957
      %v1969 = vmul.f32 %v649, %v1957
      %v1970 = vmul.f32 %v650, %v1957
      %v1971 = vmul.f32 %v651, %v1957
      %v1972 = vmul.f32 %v652, %v1957
      %v1973 = vmul.f32 %v653, %v1957
      %v1990 = vrot.slane %v1958, 3
      %v1991 = vrot.slane %v1959, 3
      %v1992 = vsel %vm1913, %v1990, %v1991
      %v1993 = vrot.slane %v1960, 3
      %v1994 = vrot.slane %v1961, 3
      %v1995 = vsel %vm1913, %v1993, %v1994
      %v1996 = vrot.slane %v1962, 3
      %v1997 = vrot.slane %v1963, 3
      %v1998 = vsel %vm1913, %v1996, %v1997
      %v1999 = vrot.slane %v1964, 3
      %v2000 = vrot.slane %v1965, 3
      %v2001 = vsel %vm1913, %v1999, %v2000
      %v2002 = vrot.slane %v1966, 3
      %v2003 = vrot.slane %v1967, 3
      %v2004 = vsel %vm1913, %v2002, %v2003
      %v2005 = vrot.slane %v1968, 3
      %v2006 = vrot.slane %v1969, 3
      %v2007 = vsel %vm1913, %v2005, %v2006
      %v2008 = vrot.slane %v1970, 3
      %v2009 = vrot.slane %v1971, 3
      %v2010 = vsel %vm1913, %v2008, %v2009
      %v2011 = vrot.slane %v1972, 3
      %v2012 = vrot.slane %v1973, 3
      %v2013 = vsel %vm1913, %v2011, %v2012
      %v2022 = vadd.f32 %v1946, %v1992
      %v2023 = vadd.f32 %v1947, %v1995
      %v2024 = vadd.f32 %v1948, %v1998
      %v2025 = vadd.f32 %v1949, %v2001
      %v2026 = vadd.f32 %v1950, %v2004
      %v2027 = vadd.f32 %v1951, %v2007
      %v2028 = vadd.f32 %v1952, %v2010
      %v2029 = vadd.f32 %v1953, %v2013
      %v2030 = vlaneseq
      %v2031 = vshrl.u32 %v2030, 7
      %v2032 = vsub.s32 3, %v2031
      %v2033 = vrot.slane %v666, %v2032
      %v2034 = vmul.f32 %v640, %v2033
      %v2035 = vmul.f32 %v641, %v2033
      %v2036 = vmul.f32 %v642, %v2033
      %v2037 = vmul.f32 %v643, %v2033
      %v2038 = vmul.f32 %v644, %v2033
      %v2039 = vmul.f32 %v645, %v2033
      %v2040 = vmul.f32 %v646, %v2033
      %v2041 = vmul.f32 %v647, %v2033
      %v2042 = vmul.f32 %v648, %v2033
      %v2043 = vmul.f32 %v649, %v2033
      %v2044 = vmul.f32 %v650, %v2033
      %v2045 = vmul.f32 %v651, %v2033
      %v2046 = vmul.f32 %v652, %v2033
      %v2047 = vmul.f32 %v653, %v2033
      %v2048 = vmul.f32 %v654, %v2033
      %v2049 = vmul.f32 %v655, %v2033
      %v2066 = vrot.slane %v2034, 3
      %v2067 = vrot.slane %v2035, 3
      %v2068 = vsel %vm1913, %v2066, %v2067
      %v2069 = vrot.slane %v2036, 3
      %v2070 = vrot.slane %v2037, 3
      %v2071 = vsel %vm1913, %v2069, %v2070
      %v2072 = vrot.slane %v2038, 3
      %v2073 = vrot.slane %v2039, 3
      %v2074 = vsel %vm1913, %v2072, %v2073
      %v2075 = vrot.slane %v2040, 3
      %v2076 = vrot.slane %v2041, 3
      %v2077 = vsel %vm1913, %v2075, %v2076
      %v2078 = vrot.slane %v2042, 3
      %v2079 = vrot.slane %v2043, 3
      %v2080 = vsel %vm1913, %v2078, %v2079
      %v2081 = vrot.slane %v2044, 3
      %v2082 = vrot.slane %v2045, 3
      %v2083 = vsel %vm1913, %v2081, %v2082
      %v2084 = vrot.slane %v2046, 3
      %v2085 = vrot.slane %v2047, 3
      %v2086 = vsel %vm1913, %v2084, %v2085
      %v2087 = vrot.slane %v2048, 3
      %v2088 = vrot.slane %v2049, 3
      %v2089 = vsel %vm1913, %v2087, %v2088
      %v2098 = vadd.f32 %v2022, %v2068
      %v2099 = vadd.f32 %v2023, %v2071
      %v2100 = vadd.f32 %v2024, %v2074
      %v2101 = vadd.f32 %v2025, %v2077
      %v2102 = vadd.f32 %v2026, %v2080
      %v2103 = vadd.f32 %v2027, %v2083
      %v2104 = vadd.f32 %v2028, %v2086
      %v2105 = vadd.f32 %v2029, %v2089
      %v2106 = vlaneseq
      %v2107 = vshrl.u32 %v2106, 7
      %v2108 = vsub.s32 3, %v2107
      %v2109 = vrot.slane %v667, %v2108
      %v2110 = vmul.f32 %v642, %v2109
      %v2111 = vmul.f32 %v643, %v2109
      %v2112 = vmul.f32 %v644, %v2109
      %v2113 = vmul.f32 %v645, %v2109
      %v2114 = vmul.f32 %v646, %v2109
      %v2115 = vmul.f32 %v647, %v2109
      %v2116 = vmul.f32 %v648, %v2109
      %v2117 = vmul.f32 %v649, %v2109
      %v2118 = vmul.f32 %v650, %v2109
      %v2119 = vmul.f32 %v651, %v2109
      %v2120 = vmul.f32 %v652, %v2109
      %v2121 = vmul.f32 %v653, %v2109
      %v2122 = vmul.f32 %v654, %v2109
      %v2123 = vmul.f32 %v655, %v2109
      %v2124 = vmul.f32 %v656, %v2109
      %v2125 = vmul.f32 %v657, %v2109
      %v2142 = vrot.slane %v2110, 3
      %v2143 = vrot.slane %v2111, 3
      %v2144 = vsel %vm1913, %v2142, %v2143
      %v2145 = vrot.slane %v2112, 3
      %v2146 = vrot.slane %v2113, 3
      %v2147 = vsel %vm1913, %v2145, %v2146
      %v2148 = vrot.slane %v2114, 3
      %v2149 = vrot.slane %v2115, 3
      %v2150 = vsel %vm1913, %v2148, %v2149
      %v2151 = vrot.slane %v2116, 3
      %v2152 = vrot.slane %v2117, 3
      %v2153 = vsel %vm1913, %v2151, %v2152
      %v2154 = vrot.slane %v2118, 3
      %v2155 = vrot.slane %v2119, 3
      %v2156 = vsel %vm1913, %v2154, %v2155
      %v2157 = vrot.slane %v2120, 3
      %v2158 = vrot.slane %v2121, 3
      %v2159 = vsel %vm1913, %v2157, %v2158
      %v2160 = vrot.slane %v2122, 3
      %v2161 = vrot.slane %v2123, 3
      %v2162 = vsel %vm1913, %v2160, %v2161
      %v2163 = vrot.slane %v2124, 3
      %v2164 = vrot.slane %v2125, 3
      %v2165 = vsel %vm1913, %v2163, %v2164
      %v2174 = vadd.f32 %v2098, %v2144
      %v2175 = vadd.f32 %v2099, %v2147
      %v2176 = vadd.f32 %v2100, %v2150
      %v2177 = vadd.f32 %v2101, %v2153
      %v2178 = vadd.f32 %v2102, %v2156
      %v2179 = vadd.f32 %v2103, %v2159
      %v2180 = vadd.f32 %v2104, %v2162
      %v2181 = vadd.f32 %v2105, %v2165
      %v2182 = vlaneseq
      %v2183 = vshrl.u32 %v2182, 7
      %v2184 = vsub.s32 3, %v2183
      %v2185 = vrot.slane %v668, %v2184
      %v2186 = vmul.f32 %v644, %v2185
      %v2187 = vmul.f32 %v645, %v2185
      %v2188 = vmul.f32 %v646, %v2185
      %v2189 = vmul.f32 %v647, %v2185
      %v2190 = vmul.f32 %v648, %v2185
      %v2191 = vmul.f32 %v649, %v2185
      %v2192 = vmul.f32 %v650, %v2185
      %v2193 = vmul.f32 %v651, %v2185
      %v2194 = vmul.f32 %v652, %v2185
      %v2195 = vmul.f32 %v653, %v2185
      %v2196 = vmul.f32 %v654, %v2185
      %v2197 = vmul.f32 %v655, %v2185
      %v2198 = vmul.f32 %v656, %v2185
      %v2199 = vmul.f32 %v657, %v2185
      %v2200 = vmul.f32 %v658, %v2185
      %v2201 = vmul.f32 %v659, %v2185
      %v2218 = vrot.slane %v2186, 3
      %v2219 = vrot.slane %v2187, 3
      %v2220 = vsel %vm1913, %v2218, %v2219
      %v2221 = vrot.slane %v2188, 3
      %v2222 = vrot.slane %v2189, 3
      %v2223 = vsel %vm1913, %v2221, %v2222
      %v2224 = vrot.slane %v2190, 3
      %v2225 = vrot.slane %v2191, 3
      %v2226 = vsel %vm1913, %v2224, %v2225
      %v2227 = vrot.slane %v2192, 3
      %v2228 = vrot.slane %v2193, 3
      %v2229 = vsel %vm1913, %v2227, %v2228
      %v2230 = vrot.slane %v2194, 3
      %v2231 = vrot.slane %v2195, 3
      %v2232 = vsel %vm1913, %v2230, %v2231
      %v2233 = vrot.slane %v2196, 3
      %v2234 = vrot.slane %v2197, 3
      %v2235 = vsel %vm1913, %v2233, %v2234
      %v2236 = vrot.slane %v2198, 3
      %v2237 = vrot.slane %v2199, 3
      %v2238 = vsel %vm1913, %v2236, %v2237
      %v2239 = vrot.slane %v2200, 3
      %v2240 = vrot.slane %v2201, 3
      %v2241 = vsel %vm1913, %v2239, %v2240
      %v2250 = vadd.f32 %v2174, %v2220
      %v2251 = vadd.f32 %v2175, %v2223
      %v2252 = vadd.f32 %v2176, %v2226
      %v2253 = vadd.f32 %v2177, %v2229
      %v2254 = vadd.f32 %v2178, %v2232
      %v2255 = vadd.f32 %v2179, %v2235
      %v2256 = vadd.f32 %v2180, %v2238
      %v2257 = vadd.f32 %v2181, %v2241
      %v2258 = vlaneseq
      %v2259 = vshrl.u32 %v2258, 7
      %v2260 = vsub.s32 3, %v2259
      %v2261 = vrot.slane %v669, %v2260
      %v2262 = vmul.f32 %v646, %v2261
      %v2263 = vmul.f32 %v647, %v2261
      %v2264 = vmul.f32 %v648, %v2261
      %v2265 = vmul.f32 %v649, %v2261
      %v2266 = vmul.f32 %v650, %v2261
      %v2267 = vmul.f32 %v651, %v2261
      %v2268 = vmul.f32 %v652, %v2261
      %v2269 = vmul.f32 %v653, %v2261
      %v2270 = vmul.f32 %v654, %v2261
      %v2271 = vmul.f32 %v655, %v2261
      %v2272 = vmul.f32 %v656, %v2261
      %v2273 = vmul.f32 %v657, %v2261
      %v2274 = vmul.f32 %v658, %v2261
      %v2275 = vmul.f32 %v659, %v2261
      %v2276 = vmul.f32 %v660, %v2261
      %v2277 = vmul.f32 %v661, %v2261
      %v2294 = vrot.slane %v2262, 3
      %v2295 = vrot.slane %v2263, 3
      %v2296 = vsel %vm1913, %v2294, %v2295
      %v2297 = vrot.slane %v2264, 3
      %v2298 = vrot.slane %v2265, 3
      %v2299 = vsel %vm1913, %v2297, %v2298
      %v2300 = vrot.slane %v2266, 3
      %v2301 = vrot.slane %v2267, 3
      %v2302 = vsel %vm1913, %v2300, %v2301
      %v2303 = vrot.slane %v2268, 3
      %v2304 = vrot.slane %v2269, 3
      %v2305 = vsel %vm1913, %v2303, %v2304
      %v2306 = vrot.slane %v2270, 3
      %v2307 = vrot.slane %v2271, 3
      %v2308 = vsel %vm1913, %v2306, %v2307
      %v2309 = vrot.slane %v2272, 3
      %v2310 = vrot.slane %v2273, 3
      %v2311 = vsel %vm1913, %v2309, %v2310
      %v2312 = vrot.slane %v2274, 3
      %v2313 = vrot.slane %v2275, 3
      %v2314 = vsel %vm1913, %v2312, %v2313
      %v2315 = vrot.slane %v2276, 3
      %v2316 = vrot.slane %v2277, 3
      %v2317 = vsel %vm1913, %v2315, %v2316
      %v2326 = vadd.f32 %v2250, %v2296
      %v2327 = vadd.f32 %v2251, %v2299
      %v2328 = vadd.f32 %v2252, %v2302
      %v2329 = vadd.f32 %v2253, %v2305
      %v2330 = vadd.f32 %v2254, %v2308
      %v2331 = vadd.f32 %v2255, %v2311
      %v2332 = vadd.f32 %v2256, %v2314
      %v2333 = vadd.f32 %v2257, %v2317
      %v2334 = vlaneseq
      %v2335 = vshrl.u32 %v2334, 7
      %v2336 = vsub.s32 3, %v2335
      %v2337 = vrot.slane %v670, %v2336
      %v2338 = vmul.f32 %v648, %v2337
      %v2339 = vmul.f32 %v649, %v2337
      %v2340 = vmul.f32 %v650, %v2337
      %v2341 = vmul.f32 %v651, %v2337
      %v2342 = vmul.f32 %v652, %v2337
      %v2343 = vmul.f32 %v653, %v2337
      %v2344 = vmul.f32 %v654, %v2337
      %v2345 = vmul.f32 %v655, %v2337
      %v2346 = vmul.f32 %v656, %v2337
      %v2347 = vmul.f32 %v657, %v2337
      %v2348 = vmul.f32 %v658, %v2337
      %v2349 = vmul.f32 %v659, %v2337
      %v2350 = vmul.f32 %v660, %v2337
      %v2351 = vmul.f32 %v661, %v2337
      %v2352 = vmul.f32 %v662, %v2337
      %v2353 = vmul.f32 %v663, %v2337
      %v2370 = vrot.slane %v2338, 3
      %v2371 = vrot.slane %v2339, 3
      %v2372 = vsel %vm1913, %v2370, %v2371
      %v2373 = vrot.slane %v2340, 3
      %v2374 = vrot.slane %v2341, 3
      %v2375 = vsel %vm1913, %v2373, %v2374
      %v2376 = vrot.slane %v2342, 3
      %v2377 = vrot.slane %v2343, 3
      %v2378 = vsel %vm1913, %v2376, %v2377
      %v2379 = vrot.slane %v2344, 3
      %v2380 = vrot.slane %v2345, 3
      %v2381 = vsel %vm1913, %v2379, %v2380
      %v2382 = vrot.slane %v2346, 3
      %v2383 = vrot.slane %v2347, 3
      %v2384 = vsel %vm1913, %v2382, %v2383
      %v2385 = vrot.slane %v2348, 3
      %v2386 = vrot.slane %v2349, 3
      %v2387 = vsel %vm1913, %v2385, %v2386
      %v2388 = vrot.slane %v2350, 3
      %v2389 = vrot.slane %v2351, 3
      %v2390 = vsel %vm1913, %v2388, %v2389
      %v2391 = vrot.slane %v2352, 3
      %v2392 = vrot.slane %v2353, 3
      %v2393 = vsel %vm1913, %v2391, %v2392
      %v2402 = vadd.f32 %v2326, %v2372
      %v2403 = vadd.f32 %v2327, %v2375
      %v2404 = vadd.f32 %v2328, %v2378
      %v2405 = vadd.f32 %v2329, %v2381
      %v2406 = vadd.f32 %v2330, %v2384
      %v2407 = vadd.f32 %v2331, %v2387
      %v2408 = vadd.f32 %v2332, %v2390
      %v2409 = vadd.f32 %v2333, %v2393
      %v2410 = vlaneseq
      %v2411 = vshrl.u32 %v2410, 7
      %v2412 = vsub.s32 4, %v2411
      %v2413 = vrot.slane %v664, %v2412
      %v2414 = vmul.f32 %v636, %v2413
      %v2415 = vmul.f32 %v637, %v2413
      %v2416 = vmul.f32 %v638, %v2413
      %v2417 = vmul.f32 %v639, %v2413
      %v2418 = vmul.f32 %v640, %v2413
      %v2419 = vmul.f32 %v641, %v2413
      %v2420 = vmul.f32 %v642, %v2413
      %v2421 = vmul.f32 %v643, %v2413
      %v2422 = vmul.f32 %v644, %v2413
      %v2423 = vmul.f32 %v645, %v2413
      %v2424 = vmul.f32 %v646, %v2413
      %v2425 = vmul.f32 %v647, %v2413
      %v2426 = vmul.f32 %v648, %v2413
      %v2427 = vmul.f32 %v649, %v2413
      %v2428 = vmul.f32 %v650, %v2413
      %v2429 = vmul.f32 %v651, %v2413
      %vm2446 = vcmask 1043456
      %v2447 = vrot.slane %v2414, 4
      %v2448 = vrot.slane %v2415, 4
      %v2449 = vsel %vm2446, %v2447, %v2448
      %v2450 = vrot.slane %v2416, 4
      %v2451 = vrot.slane %v2417, 4
      %v2452 = vsel %vm2446, %v2450, %v2451
      %v2453 = vrot.slane %v2418, 4
      %v2454 = vrot.slane %v2419, 4
      %v2455 = vsel %vm2446, %v2453, %v2454
      %v2456 = vrot.slane %v2420, 4
      %v2457 = vrot.slane %v2421, 4
      %v2458 = vsel %vm2446, %v2456, %v2457
      %v2459 = vrot.slane %v2422, 4
      %v2460 = vrot.slane %v2423, 4
      %v2461 = vsel %vm2446, %v2459, %v2460
      %v2462 = vrot.slane %v2424, 4
      %v2463 = vrot.slane %v2425, 4
      %v2464 = vsel %vm2446, %v2462, %v2463
      %v2465 = vrot.slane %v2426, 4
      %v2466 = vrot.slane %v2427, 4
      %v2467 = vsel %vm2446, %v2465, %v2466
      %v2468 = vrot.slane %v2428, 4
      %v2469 = vrot.slane %v2429, 4
      %v2470 = vsel %vm2446, %v2468, %v2469
      %v2479 = vadd.f32 %v2402, %v2449
      %v2480 = vadd.f32 %v2403, %v2452
      %v2481 = vadd.f32 %v2404, %v2455
      %v2482 = vadd.f32 %v2405, %v2458
      %v2483 = vadd.f32 %v2406, %v2461
      %v2484 = vadd.f32 %v2407, %v2464
      %v2485 = vadd.f32 %v2408, %v2467
      %v2486 = vadd.f32 %v2409, %v2470
      %v2487 = vlaneseq
      %v2488 = vshrl.u32 %v2487, 7
      %v2489 = vsub.s32 4, %v2488
      %v2490 = vrot.slane %v665, %v2489
      %v2491 = vmul.f32 %v638, %v2490
      %v2492 = vmul.f32 %v639, %v2490
      %v2493 = vmul.f32 %v640, %v2490
      %v2494 = vmul.f32 %v641, %v2490
      %v2495 = vmul.f32 %v642, %v2490
      %v2496 = vmul.f32 %v643, %v2490
      %v2497 = vmul.f32 %v644, %v2490
      %v2498 = vmul.f32 %v645, %v2490
      %v2499 = vmul.f32 %v646, %v2490
      %v2500 = vmul.f32 %v647, %v2490
      %v2501 = vmul.f32 %v648, %v2490
      %v2502 = vmul.f32 %v649, %v2490
      %v2503 = vmul.f32 %v650, %v2490
      %v2504 = vmul.f32 %v651, %v2490
      %v2505 = vmul.f32 %v652, %v2490
      %v2506 = vmul.f32 %v653, %v2490
      %v2523 = vrot.slane %v2491, 4
      %v2524 = vrot.slane %v2492, 4
      %v2525 = vsel %vm2446, %v2523, %v2524
      %v2526 = vrot.slane %v2493, 4
      %v2527 = vrot.slane %v2494, 4
      %v2528 = vsel %vm2446, %v2526, %v2527
      %v2529 = vrot.slane %v2495, 4
      %v2530 = vrot.slane %v2496, 4
      %v2531 = vsel %vm2446, %v2529, %v2530
      %v2532 = vrot.slane %v2497, 4
      %v2533 = vrot.slane %v2498, 4
      %v2534 = vsel %vm2446, %v2532, %v2533
      %v2535 = vrot.slane %v2499, 4
      %v2536 = vrot.slane %v2500, 4
      %v2537 = vsel %vm2446, %v2535, %v2536
      %v2538 = vrot.slane %v2501, 4
      %v2539 = vrot.slane %v2502, 4
      %v2540 = vsel %vm2446, %v2538, %v2539
      %v2541 = vrot.slane %v2503, 4
      %v2542 = vrot.slane %v2504, 4
      %v2543 = vsel %vm2446, %v2541, %v2542
      %v2544 = vrot.slane %v2505, 4
      %v2545 = vrot.slane %v2506, 4
      %v2546 = vsel %vm2446, %v2544, %v2545
      %v2555 = vadd.f32 %v2479, %v2525
      %v2556 = vadd.f32 %v2480, %v2528
      %v2557 = vadd.f32 %v2481, %v2531
      %v2558 = vadd.f32 %v2482, %v2534
      %v2559 = vadd.f32 %v2483, %v2537
      %v2560 = vadd.f32 %v2484, %v2540
      %v2561 = vadd.f32 %v2485, %v2543
      %v2562 = vadd.f32 %v2486, %v2546
      %v2563 = vlaneseq
      %v2564 = vshrl.u32 %v2563, 7
      %v2565 = vsub.s32 4, %v2564
      %v2566 = vrot.slane %v666, %v2565
      %v2567 = vmul.f32 %v640, %v2566
      %v2568 = vmul.f32 %v641, %v2566
      %v2569 = vmul.f32 %v642, %v2566
      %v2570 = vmul.f32 %v643, %v2566
      %v2571 = vmul.f32 %v644, %v2566
      %v2572 = vmul.f32 %v645, %v2566
      %v2573 = vmul.f32 %v646, %v2566
      %v2574 = vmul.f32 %v647, %v2566
      %v2575 = vmul.f32 %v648, %v2566
      %v2576 = vmul.f32 %v649, %v2566
      %v2577 = vmul.f32 %v650, %v2566
      %v2578 = vmul.f32 %v651, %v2566
      %v2579 = vmul.f32 %v652, %v2566
      %v2580 = vmul.f32 %v653, %v2566
      %v2581 = vmul.f32 %v654, %v2566
      %v2582 = vmul.f32 %v655, %v2566
      %v2599 = vrot.slane %v2567, 4
      %v2600 = vrot.slane %v2568, 4
      %v2601 = vsel %vm2446, %v2599, %v2600
      %v2602 = vrot.slane %v2569, 4
      %v2603 = vrot.slane %v2570, 4
      %v2604 = vsel %vm2446, %v2602, %v2603
      %v2605 = vrot.slane %v2571, 4
      %v2606 = vrot.slane %v2572, 4
      %v2607 = vsel %vm2446, %v2605, %v2606
      %v2608 = vrot.slane %v2573, 4
      %v2609 = vrot.slane %v2574, 4
      %v2610 = vsel %vm2446, %v2608, %v2609
      %v2611 = vrot.slane %v2575, 4
      %v2612 = vrot.slane %v2576, 4
      %v2613 = vsel %vm2446, %v2611, %v2612
      %v2614 = vrot.slane %v2577, 4
      %v2615 = vrot.slane %v2578, 4
      %v2616 = vsel %vm2446, %v2614, %v2615
      %v2617 = vrot.slane %v2579, 4
      %v2618 = vrot.slane %v2580, 4
      %v2619 = vsel %vm2446, %v2617, %v2618
      %v2620 = vrot.slane %v2581, 4
      %v2621 = vrot.slane %v2582, 4
      %v2622 = vsel %vm2446, %v2620, %v2621
      %v2631 = vadd.f32 %v2555, %v2601
      %v2632 = vadd.f32 %v2556, %v2604
      %v2633 = vadd.f32 %v2557, %v2607
      %v2634 = vadd.f32 %v2558, %v2610
      %v2635 = vadd.f32 %v2559, %v2613
      %v2636 = vadd.f32 %v2560, %v2616
      %v2637 = vadd.f32 %v2561, %v2619
      %v2638 = vadd.f32 %v2562, %v2622
      %v2639 = vlaneseq
      %v2640 = vshrl.u32 %v2639, 7
      %v2641 = vsub.s32 4, %v2640
      %v2642 = vrot.slane %v667, %v2641
      %v2643 = vmul.f32 %v642, %v2642
      %v2644 = vmul.f32 %v643, %v2642
      %v2645 = vmul.f32 %v644, %v2642
      %v2646 = vmul.f32 %v645, %v2642
      %v2647 = vmul.f32 %v646, %v2642
      %v2648 = vmul.f32 %v647, %v2642
      %v2649 = vmul.f32 %v648, %v2642
      %v2650 = vmul.f32 %v649, %v2642
      %v2651 = vmul.f32 %v650, %v2642
      %v2652 = vmul.f32 %v651, %v2642
      %v2653 = vmul.f32 %v652, %v2642
      %v2654 = vmul.f32 %v653, %v2642
      %v2655 = vmul.f32 %v654, %v2642
      %v2656 = vmul.f32 %v655, %v2642
      %v2657 = vmul.f32 %v656, %v2642
      %v2658 = vmul.f32 %v657, %v2642
      %v2675 = vrot.slane %v2643, 4
      %v2676 = vrot.slane %v2644, 4
      %v2677 = vsel %vm2446, %v2675, %v2676
      %v2678 = vrot.slane %v2645, 4
      %v2679 = vrot.slane %v2646, 4
      %v2680 = vsel %vm2446, %v2678, %v2679
      %v2681 = vrot.slane %v2647, 4
      %v2682 = vrot.slane %v2648, 4
      %v2683 = vsel %vm2446, %v2681, %v2682
      %v2684 = vrot.slane %v2649, 4
      %v2685 = vrot.slane %v2650, 4
      %v2686 = vsel %vm2446, %v2684, %v2685
      %v2687 = vrot.slane %v2651, 4
      %v2688 = vrot.slane %v2652, 4
      %v2689 = vsel %vm2446, %v2687, %v2688
      %v2690 = vrot.slane %v2653, 4
      %v2691 = vrot.slane %v2654, 4
      %v2692 = vsel %vm2446, %v2690, %v2691
      %v2693 = vrot.slane %v2655, 4
      %v2694 = vrot.slane %v2656, 4
      %v2695 = vsel %vm2446, %v2693, %v2694
      %v2696 = vrot.slane %v2657, 4
      %v2697 = vrot.slane %v2658, 4
      %v2698 = vsel %vm2446, %v2696, %v2697
      %v2707 = vadd.f32 %v2631, %v2677
      %v2708 = vadd.f32 %v2632, %v2680
      %v2709 = vadd.f32 %v2633, %v2683
      %v2710 = vadd.f32 %v2634, %v2686
      %v2711 = vadd.f32 %v2635, %v2689
      %v2712 = vadd.f32 %v2636, %v2692
      %v2713 = vadd.f32 %v2637, %v2695
      %v2714 = vadd.f32 %v2638, %v2698
      %v2715 = vlaneseq
      %v2716 = vshrl.u32 %v2715, 7
      %v2717 = vsub.s32 4, %v2716
      %v2718 = vrot.slane %v668, %v2717
      %v2719 = vmul.f32 %v644, %v2718
      %v2720 = vmul.f32 %v645, %v2718
      %v2721 = vmul.f32 %v646, %v2718
      %v2722 = vmul.f32 %v647, %v2718
      %v2723 = vmul.f32 %v648, %v2718
      %v2724 = vmul.f32 %v649, %v2718
      %v2725 = vmul.f32 %v650, %v2718
      %v2726 = vmul.f32 %v651, %v2718
      %v2727 = vmul.f32 %v652, %v2718
      %v2728 = vmul.f32 %v653, %v2718
      %v2729 = vmul.f32 %v654, %v2718
      %v2730 = vmul.f32 %v655, %v2718
      %v2731 = vmul.f32 %v656, %v2718
      %v2732 = vmul.f32 %v657, %v2718
      %v2733 = vmul.f32 %v658, %v2718
      %v2734 = vmul.f32 %v659, %v2718
      %v2751 = vrot.slane %v2719, 4
      %v2752 = vrot.slane %v2720, 4
      %v2753 = vsel %vm2446, %v2751, %v2752
      %v2754 = vrot.slane %v2721, 4
      %v2755 = vrot.slane %v2722, 4
      %v2756 = vsel %vm2446, %v2754, %v2755
      %v2757 = vrot.slane %v2723, 4
      %v2758 = vrot.slane %v2724, 4
      %v2759 = vsel %vm2446, %v2757, %v2758
      %v2760 = vrot.slane %v2725, 4
      %v2761 = vrot.slane %v2726, 4
      %v2762 = vsel %vm2446, %v2760, %v2761
      %v2763 = vrot.slane %v2727, 4
      %v2764 = vrot.slane %v2728, 4
      %v2765 = vsel %vm2446, %v2763, %v2764
      %v2766 = vrot.slane %v2729, 4
      %v2767 = vrot.slane %v2730, 4
      %v2768 = vsel %vm2446, %v2766, %v2767
      %v2769 = vrot.slane %v2731, 4
      %v2770 = vrot.slane %v2732, 4
      %v2771 = vsel %vm2446, %v2769, %v2770
      %v2772 = vrot.slane %v2733, 4
      %v2773 = vrot.slane %v2734, 4
      %v2774 = vsel %vm2446, %v2772, %v2773
      %v2783 = vadd.f32 %v2707, %v2753
      %v2784 = vadd.f32 %v2708, %v2756
      %v2785 = vadd.f32 %v2709, %v2759
      %v2786 = vadd.f32 %v2710, %v2762
      %v2787 = vadd.f32 %v2711, %v2765
      %v2788 = vadd.f32 %v2712, %v2768
      %v2789 = vadd.f32 %v2713, %v2771
      %v2790 = vadd.f32 %v2714, %v2774
      %v2791 = vlaneseq
      %v2792 = vshrl.u32 %v2791, 7
      %v2793 = vsub.s32 4, %v2792
      %v2794 = vrot.slane %v669, %v2793
      %v2795 = vmul.f32 %v646, %v2794
      %v2796 = vmul.f32 %v647, %v2794
      %v2797 = vmul.f32 %v648, %v2794
      %v2798 = vmul.f32 %v649, %v2794
      %v2799 = vmul.f32 %v650, %v2794
      %v2800 = vmul.f32 %v651, %v2794
      %v2801 = vmul.f32 %v652, %v2794
      %v2802 = vmul.f32 %v653, %v2794
      %v2803 = vmul.f32 %v654, %v2794
      %v2804 = vmul.f32 %v655, %v2794
      %v2805 = vmul.f32 %v656, %v2794
      %v2806 = vmul.f32 %v657, %v2794
      %v2807 = vmul.f32 %v658, %v2794
      %v2808 = vmul.f32 %v659, %v2794
      %v2809 = vmul.f32 %v660, %v2794
      %v2810 = vmul.f32 %v661, %v2794
      %v2827 = vrot.slane %v2795, 4
      %v2828 = vrot.slane %v2796, 4
      %v2829 = vsel %vm2446, %v2827, %v2828
      %v2830 = vrot.slane %v2797, 4
      %v2831 = vrot.slane %v2798, 4
      %v2832 = vsel %vm2446, %v2830, %v2831
      %v2833 = vrot.slane %v2799, 4
      %v2834 = vrot.slane %v2800, 4
      %v2835 = vsel %vm2446, %v2833, %v2834
      %v2836 = vrot.slane %v2801, 4
      %v2837 = vrot.slane %v2802, 4
      %v2838 = vsel %vm2446, %v2836, %v2837
      %v2839 = vrot.slane %v2803, 4
      %v2840 = vrot.slane %v2804, 4
      %v2841 = vsel %vm2446, %v2839, %v2840
      %v2842 = vrot.slane %v2805, 4
      %v2843 = vrot.slane %v2806, 4
      %v2844 = vsel %vm2446, %v2842, %v2843
      %v2845 = vrot.slane %v2807, 4
      %v2846 = vrot.slane %v2808, 4
      %v2847 = vsel %vm2446, %v2845, %v2846
      %v2848 = vrot.slane %v2809, 4
      %v2849 = vrot.slane %v2810, 4
      %v2850 = vsel %vm2446, %v2848, %v2849
      %v2859 = vadd.f32 %v2783, %v2829
      %v2860 = vadd.f32 %v2784, %v2832
      %v2861 = vadd.f32 %v2785, %v2835
      %v2862 = vadd.f32 %v2786, %v2838
      %v2863 = vadd.f32 %v2787, %v2841
      %v2864 = vadd.f32 %v2788, %v2844
      %v2865 = vadd.f32 %v2789, %v2847
      %v2866 = vadd.f32 %v2790, %v2850
      %v2867 = vlaneseq
      %v2868 = vshrl.u32 %v2867, 7
      %v2869 = vsub.s32 4, %v2868
      %v2870 = vrot.slane %v670, %v2869
      %v2871 = vmul.f32 %v648, %v2870
      %v2872 = vmul.f32 %v649, %v2870
      %v2873 = vmul.f32 %v650, %v2870
      %v2874 = vmul.f32 %v651, %v2870
      %v2875 = vmul.f32 %v652, %v2870
      %v2876 = vmul.f32 %v653, %v2870
      %v2877 = vmul.f32 %v654, %v2870
      %v2878 = vmul.f32 %v655, %v2870
      %v2879 = vmul.f32 %v656, %v2870
      %v2880 = vmul.f32 %v657, %v2870
      %v2881 = vmul.f32 %v658, %v2870
      %v2882 = vmul.f32 %v659, %v2870
      %v2883 = vmul.f32 %v660, %v2870
      %v2884 = vmul.f32 %v661, %v2870
      %v2885 = vmul.f32 %v662, %v2870
      %v2886 = vmul.f32 %v663, %v2870
      %v2903 = vrot.slane %v2871, 4
      %v2904 = vrot.slane %v2872, 4
      %v2905 = vsel %vm2446, %v2903, %v2904
      %v2906 = vrot.slane %v2873, 4
      %v2907 = vrot.slane %v2874, 4
      %v2908 = vsel %vm2446, %v2906, %v2907
      %v2909 = vrot.slane %v2875, 4
      %v2910 = vrot.slane %v2876, 4
      %v2911 = vsel %vm2446, %v2909, %v2910
      %v2912 = vrot.slane %v2877, 4
      %v2913 = vrot.slane %v2878, 4
      %v2914 = vsel %vm2446, %v2912, %v2913
      %v2915 = vrot.slane %v2879, 4
      %v2916 = vrot.slane %v2880, 4
      %v2917 = vsel %vm2446, %v2915, %v2916
      %v2918 = vrot.slane %v2881, 4
      %v2919 = vrot.slane %v2882, 4
      %v2920 = vsel %vm2446, %v2918, %v2919
      %v2921 = vrot.slane %v2883, 4
      %v2922 = vrot.slane %v2884, 4
      %v2923 = vsel %vm2446, %v2921, %v2922
      %v2924 = vrot.slane %v2885, 4
      %v2925 = vrot.slane %v2886, 4
      %v2926 = vsel %vm2446, %v2924, %v2925
      %v2935 = vadd.f32 %v2859, %v2905
      %v2936 = vadd.f32 %v2860, %v2908
      %v2937 = vadd.f32 %v2861, %v2911
      %v2938 = vadd.f32 %v2862, %v2914
      %v2939 = vadd.f32 %v2863, %v2917
      %v2940 = vadd.f32 %v2864, %v2920
      %v2941 = vadd.f32 %v2865, %v2923
      %v2942 = vadd.f32 %v2866, %v2926
      %v2943 = vlaneseq
      %v2944 = vshrl.u32 %v2943, 7
      %v2945 = vsub.s32 5, %v2944
      %v2946 = vrot.slane %v664, %v2945
      %v2947 = vmul.f32 %v636, %v2946
      %v2948 = vmul.f32 %v637, %v2946
      %v2949 = vmul.f32 %v638, %v2946
      %v2950 = vmul.f32 %v639, %v2946
      %v2951 = vmul.f32 %v640, %v2946
      %v2952 = vmul.f32 %v641, %v2946
      %v2953 = vmul.f32 %v642, %v2946
      %v2954 = vmul.f32 %v643, %v2946
      %v2955 = vmul.f32 %v644, %v2946
      %v2956 = vmul.f32 %v645, %v2946
      %v2957 = vmul.f32 %v646, %v2946
      %v2958 = vmul.f32 %v647, %v2946
      %v2959 = vmul.f32 %v648, %v2946
      %v2960 = vmul.f32 %v649, %v2946
      %v2961 = vmul.f32 %v650, %v2946
      %v2962 = vmul.f32 %v651, %v2946
      %vm2979 = vcmask 1042432
      %v2980 = vrot.slane %v2947, 5
      %v2981 = vrot.slane %v2948, 5
      %v2982 = vsel %vm2979, %v2980, %v2981
      %v2983 = vrot.slane %v2949, 5
      %v2984 = vrot.slane %v2950, 5
      %v2985 = vsel %vm2979, %v2983, %v2984
      %v2986 = vrot.slane %v2951, 5
      %v2987 = vrot.slane %v2952, 5
      %v2988 = vsel %vm2979, %v2986, %v2987
      %v2989 = vrot.slane %v2953, 5
      %v2990 = vrot.slane %v2954, 5
      %v2991 = vsel %vm2979, %v2989, %v2990
      %v2992 = vrot.slane %v2955, 5
      %v2993 = vrot.slane %v2956, 5
      %v2994 = vsel %vm2979, %v2992, %v2993
      %v2995 = vrot.slane %v2957, 5
      %v2996 = vrot.slane %v2958, 5
      %v2997 = vsel %vm2979, %v2995, %v2996
      %v2998 = vrot.slane %v2959, 5
      %v2999 = vrot.slane %v2960, 5
      %v3000 = vsel %vm2979, %v2998, %v2999
      %v3001 = vrot.slane %v2961, 5
      %v3002 = vrot.slane %v2962, 5
      %v3003 = vsel %vm2979, %v3001, %v3002
      %v3012 = vadd.f32 %v2935, %v2982
      %v3013 = vadd.f32 %v2936, %v2985
      %v3014 = vadd.f32 %v2937, %v2988
      %v3015 = vadd.f32 %v2938, %v2991
      %v3016 = vadd.f32 %v2939, %v2994
      %v3017 = vadd.f32 %v2940, %v2997
      %v3018 = vadd.f32 %v2941, %v3000
      %v3019 = vadd.f32 %v2942, %v3003
      %v3020 = vlaneseq
      %v3021 = vshrl.u32 %v3020, 7
      %v3022 = vsub.s32 5, %v3021
      %v3023 = vrot.slane %v665, %v3022
      %v3024 = vmul.f32 %v638, %v3023
      %v3025 = vmul.f32 %v639, %v3023
      %v3026 = vmul.f32 %v640, %v3023
      %v3027 = vmul.f32 %v641, %v3023
      %v3028 = vmul.f32 %v642, %v3023
      %v3029 = vmul.f32 %v643, %v3023
      %v3030 = vmul.f32 %v644, %v3023
      %v3031 = vmul.f32 %v645, %v3023
      %v3032 = vmul.f32 %v646, %v3023
      %v3033 = vmul.f32 %v647, %v3023
      %v3034 = vmul.f32 %v648, %v3023
      %v3035 = vmul.f32 %v649, %v3023
      %v3036 = vmul.f32 %v650, %v3023
      %v3037 = vmul.f32 %v651, %v3023
      %v3038 = vmul.f32 %v652, %v3023
      %v3039 = vmul.f32 %v653, %v3023
      %v3056 = vrot.slane %v3024, 5
      %v3057 = vrot.slane %v3025, 5
      %v3058 = vsel %vm2979, %v3056, %v3057
      %v3059 = vrot.slane %v3026, 5
      %v3060 = vrot.slane %v3027, 5
      %v3061 = vsel %vm2979, %v3059, %v3060
      %v3062 = vrot.slane %v3028, 5
      %v3063 = vrot.slane %v3029, 5
      %v3064 = vsel %vm2979, %v3062, %v3063
      %v3065 = vrot.slane %v3030, 5
      %v3066 = vrot.slane %v3031, 5
      %v3067 = vsel %vm2979, %v3065, %v3066
      %v3068 = vrot.slane %v3032, 5
      %v3069 = vrot.slane %v3033, 5
      %v3070 = vsel %vm2979, %v3068, %v3069
      %v3071 = vrot.slane %v3034, 5
      %v3072 = vrot.slane %v3035, 5
      %v3073 = vsel %vm2979, %v3071, %v3072
      %v3074 = vrot.slane %v3036, 5
      %v3075 = vrot.slane %v3037, 5
      %v3076 = vsel %vm2979, %v3074, %v3075
      %v3077 = vrot.slane %v3038, 5
      %v3078 = vrot.slane %v3039, 5
      %v3079 = vsel %vm2979, %v3077, %v3078
      %v3088 = vadd.f32 %v3012, %v3058
      %v3089 = vadd.f32 %v3013, %v3061
      %v3090 = vadd.f32 %v3014, %v3064
      %v3091 = vadd.f32 %v3015, %v3067
      %v3092 = vadd.f32 %v3016, %v3070
      %v3093 = vadd.f32 %v3017, %v3073
      %v3094 = vadd.f32 %v3018, %v3076
      %v3095 = vadd.f32 %v3019, %v3079
      %v3096 = vlaneseq
      %v3097 = vshrl.u32 %v3096, 7
      %v3098 = vsub.s32 5, %v3097
      %v3099 = vrot.slane %v666, %v3098
      %v3100 = vmul.f32 %v640, %v3099
      %v3101 = vmul.f32 %v641, %v3099
      %v3102 = vmul.f32 %v642, %v3099
      %v3103 = vmul.f32 %v643, %v3099
      %v3104 = vmul.f32 %v644, %v3099
      %v3105 = vmul.f32 %v645, %v3099
      %v3106 = vmul.f32 %v646, %v3099
      %v3107 = vmul.f32 %v647, %v3099
      %v3108 = vmul.f32 %v648, %v3099
      %v3109 = vmul.f32 %v649, %v3099
      %v3110 = vmul.f32 %v650, %v3099
      %v3111 = vmul.f32 %v651, %v3099
      %v3112 = vmul.f32 %v652, %v3099
      %v3113 = vmul.f32 %v653, %v3099
      %v3114 = vmul.f32 %v654, %v3099
      %v3115 = vmul.f32 %v655, %v3099
      %v3132 = vrot.slane %v3100, 5
      %v3133 = vrot.slane %v3101, 5
      %v3134 = vsel %vm2979, %v3132, %v3133
      %v3135 = vrot.slane %v3102, 5
      %v3136 = vrot.slane %v3103, 5
      %v3137 = vsel %vm2979, %v3135, %v3136
      %v3138 = vrot.slane %v3104, 5
      %v3139 = vrot.slane %v3105, 5
      %v3140 = vsel %vm2979, %v3138, %v3139
      %v3141 = vrot.slane %v3106, 5
      %v3142 = vrot.slane %v3107, 5
      %v3143 = vsel %vm2979, %v3141, %v3142
      %v3144 = vrot.slane %v3108, 5
      %v3145 = vrot.slane %v3109, 5
      %v3146 = vsel %vm2979, %v3144, %v3145
      %v3147 = vrot.slane %v3110, 5
      %v3148 = vrot.slane %v3111, 5
      %v3149 = vsel %vm2979, %v3147, %v3148
      %v3150 = vrot.slane %v3112, 5
      %v3151 = vrot.slane %v3113, 5
      %v3152 = vsel %vm2979, %v3150, %v3151
      %v3153 = vrot.slane %v3114, 5
      %v3154 = vrot.slane %v3115, 5
      %v3155 = vsel %vm2979, %v3153, %v3154
      %v3164 = vadd.f32 %v3088, %v3134
      %v3165 = vadd.f32 %v3089, %v3137
      %v3166 = vadd.f32 %v3090, %v3140
      %v3167 = vadd.f32 %v3091, %v3143
      %v3168 = vadd.f32 %v3092, %v3146
      %v3169 = vadd.f32 %v3093, %v3149
      %v3170 = vadd.f32 %v3094, %v3152
      %v3171 = vadd.f32 %v3095, %v3155
      %v3172 = vlaneseq
      %v3173 = vshrl.u32 %v3172, 7
      %v3174 = vsub.s32 5, %v3173
      %v3175 = vrot.slane %v667, %v3174
      %v3176 = vmul.f32 %v642, %v3175
      %v3177 = vmul.f32 %v643, %v3175
      %v3178 = vmul.f32 %v644, %v3175
      %v3179 = vmul.f32 %v645, %v3175
      %v3180 = vmul.f32 %v646, %v3175
      %v3181 = vmul.f32 %v647, %v3175
      %v3182 = vmul.f32 %v648, %v3175
      %v3183 = vmul.f32 %v649, %v3175
      %v3184 = vmul.f32 %v650, %v3175
      %v3185 = vmul.f32 %v651, %v3175
      %v3186 = vmul.f32 %v652, %v3175
      %v3187 = vmul.f32 %v653, %v3175
      %v3188 = vmul.f32 %v654, %v3175
      %v3189 = vmul.f32 %v655, %v3175
      %v3190 = vmul.f32 %v656, %v3175
      %v3191 = vmul.f32 %v657, %v3175
      %v3208 = vrot.slane %v3176, 5
      %v3209 = vrot.slane %v3177, 5
      %v3210 = vsel %vm2979, %v3208, %v3209
      %v3211 = vrot.slane %v3178, 5
      %v3212 = vrot.slane %v3179, 5
      %v3213 = vsel %vm2979, %v3211, %v3212
      %v3214 = vrot.slane %v3180, 5
      %v3215 = vrot.slane %v3181, 5
      %v3216 = vsel %vm2979, %v3214, %v3215
      %v3217 = vrot.slane %v3182, 5
      %v3218 = vrot.slane %v3183, 5
      %v3219 = vsel %vm2979, %v3217, %v3218
      %v3220 = vrot.slane %v3184, 5
      %v3221 = vrot.slane %v3185, 5
      %v3222 = vsel %vm2979, %v3220, %v3221
      %v3223 = vrot.slane %v3186, 5
      %v3224 = vrot.slane %v3187, 5
      %v3225 = vsel %vm2979, %v3223, %v3224
      %v3226 = vrot.slane %v3188, 5
      %v3227 = vrot.slane %v3189, 5
      %v3228 = vsel %vm2979, %v3226, %v3227
      %v3229 = vrot.slane %v3190, 5
      %v3230 = vrot.slane %v3191, 5
      %v3231 = vsel %vm2979, %v3229, %v3230
      %v3240 = vadd.f32 %v3164, %v3210
      %v3241 = vadd.f32 %v3165, %v3213
      %v3242 = vadd.f32 %v3166, %v3216
      %v3243 = vadd.f32 %v3167, %v3219
      %v3244 = vadd.f32 %v3168, %v3222
      %v3245 = vadd.f32 %v3169, %v3225
      %v3246 = vadd.f32 %v3170, %v3228
      %v3247 = vadd.f32 %v3171, %v3231
      %v3248 = vlaneseq
      %v3249 = vshrl.u32 %v3248, 7
      %v3250 = vsub.s32 5, %v3249
      %v3251 = vrot.slane %v668, %v3250
      %v3252 = vmul.f32 %v644, %v3251
      %v3253 = vmul.f32 %v645, %v3251
      %v3254 = vmul.f32 %v646, %v3251
      %v3255 = vmul.f32 %v647, %v3251
      %v3256 = vmul.f32 %v648, %v3251
      %v3257 = vmul.f32 %v649, %v3251
      %v3258 = vmul.f32 %v650, %v3251
      %v3259 = vmul.f32 %v651, %v3251
      %v3260 = vmul.f32 %v652, %v3251
      %v3261 = vmul.f32 %v653, %v3251
      %v3262 = vmul.f32 %v654, %v3251
      %v3263 = vmul.f32 %v655, %v3251
      %v3264 = vmul.f32 %v656, %v3251
      %v3265 = vmul.f32 %v657, %v3251
      %v3266 = vmul.f32 %v658, %v3251
      %v3267 = vmul.f32 %v659, %v3251
      %v3284 = vrot.slane %v3252, 5
      %v3285 = vrot.slane %v3253, 5
      %v3286 = vsel %vm2979, %v3284, %v3285
      %v3287 = vrot.slane %v3254, 5
      %v3288 = vrot.slane %v3255, 5
      %v3289 = vsel %vm2979, %v3287, %v3288
      %v3290 = vrot.slane %v3256, 5
      %v3291 = vrot.slane %v3257, 5
      %v3292 = vsel %vm2979, %v3290, %v3291
      %v3293 = vrot.slane %v3258, 5
      %v3294 = vrot.slane %v3259, 5
      %v3295 = vsel %vm2979, %v3293, %v3294
      %v3296 = vrot.slane %v3260, 5
      %v3297 = vrot.slane %v3261, 5
      %v3298 = vsel %vm2979, %v3296, %v3297
      %v3299 = vrot.slane %v3262, 5
      %v3300 = vrot.slane %v3263, 5
      %v3301 = vsel %vm2979, %v3299, %v3300
      %v3302 = vrot.slane %v3264, 5
      %v3303 = vrot.slane %v3265, 5
      %v3304 = vsel %vm2979, %v3302, %v3303
      %v3305 = vrot.slane %v3266, 5
      %v3306 = vrot.slane %v3267, 5
      %v3307 = vsel %vm2979, %v3305, %v3306
      %v3316 = vadd.f32 %v3240, %v3286
      %v3317 = vadd.f32 %v3241, %v3289
      %v3318 = vadd.f32 %v3242, %v3292
      %v3319 = vadd.f32 %v3243, %v3295
      %v3320 = vadd.f32 %v3244, %v3298
      %v3321 = vadd.f32 %v3245, %v3301
      %v3322 = vadd.f32 %v3246, %v3304
      %v3323 = vadd.f32 %v3247, %v3307
      %v3324 = vlaneseq
      %v3325 = vshrl.u32 %v3324, 7
      %v3326 = vsub.s32 5, %v3325
      %v3327 = vrot.slane %v669, %v3326
      %v3328 = vmul.f32 %v646, %v3327
      %v3329 = vmul.f32 %v647, %v3327
      %v3330 = vmul.f32 %v648, %v3327
      %v3331 = vmul.f32 %v649, %v3327
      %v3332 = vmul.f32 %v650, %v3327
      %v3333 = vmul.f32 %v651, %v3327
      %v3334 = vmul.f32 %v652, %v3327
      %v3335 = vmul.f32 %v653, %v3327
      %v3336 = vmul.f32 %v654, %v3327
      %v3337 = vmul.f32 %v655, %v3327
      %v3338 = vmul.f32 %v656, %v3327
      %v3339 = vmul.f32 %v657, %v3327
      %v3340 = vmul.f32 %v658, %v3327
      %v3341 = vmul.f32 %v659, %v3327
      %v3342 = vmul.f32 %v660, %v3327
      %v3343 = vmul.f32 %v661, %v3327
      %v3360 = vrot.slane %v3328, 5
      %v3361 = vrot.slane %v3329, 5
      %v3362 = vsel %vm2979, %v3360, %v3361
      %v3363 = vrot.slane %v3330, 5
      %v3364 = vrot.slane %v3331, 5
      %v3365 = vsel %vm2979, %v3363, %v3364
      %v3366 = vrot.slane %v3332, 5
      %v3367 = vrot.slane %v3333, 5
      %v3368 = vsel %vm2979, %v3366, %v3367
      %v3369 = vrot.slane %v3334, 5
      %v3370 = vrot.slane %v3335, 5
      %v3371 = vsel %vm2979, %v3369, %v3370
      %v3372 = vrot.slane %v3336, 5
      %v3373 = vrot.slane %v3337, 5
      %v3374 = vsel %vm2979, %v3372, %v3373
      %v3375 = vrot.slane %v3338, 5
      %v3376 = vrot.slane %v3339, 5
      %v3377 = vsel %vm2979, %v3375, %v3376
      %v3378 = vrot.slane %v3340, 5
      %v3379 = vrot.slane %v3341, 5
      %v3380 = vsel %vm2979, %v3378, %v3379
      %v3381 = vrot.slane %v3342, 5
      %v3382 = vrot.slane %v3343, 5
      %v3383 = vsel %vm2979, %v3381, %v3382
      %v3392 = vadd.f32 %v3316, %v3362
      %v3393 = vadd.f32 %v3317, %v3365
      %v3394 = vadd.f32 %v3318, %v3368
      %v3395 = vadd.f32 %v3319, %v3371
      %v3396 = vadd.f32 %v3320, %v3374
      %v3397 = vadd.f32 %v3321, %v3377
      %v3398 = vadd.f32 %v3322, %v3380
      %v3399 = vadd.f32 %v3323, %v3383
      %v3400 = vlaneseq
      %v3401 = vshrl.u32 %v3400, 7
      %v3402 = vsub.s32 5, %v3401
      %v3403 = vrot.slane %v670, %v3402
      %v3404 = vmul.f32 %v648, %v3403
      %v3405 = vmul.f32 %v649, %v3403
      %v3406 = vmul.f32 %v650, %v3403
      %v3407 = vmul.f32 %v651, %v3403
      %v3408 = vmul.f32 %v652, %v3403
      %v3409 = vmul.f32 %v653, %v3403
      %v3410 = vmul.f32 %v654, %v3403
      %v3411 = vmul.f32 %v655, %v3403
      %v3412 = vmul.f32 %v656, %v3403
      %v3413 = vmul.f32 %v657, %v3403
      %v3414 = vmul.f32 %v658, %v3403
      %v3415 = vmul.f32 %v659, %v3403
      %v3416 = vmul.f32 %v660, %v3403
      %v3417 = vmul.f32 %v661, %v3403
      %v3418 = vmul.f32 %v662, %v3403
      %v3419 = vmul.f32 %v663, %v3403
      %v3436 = vrot.slane %v3404, 5
      %v3437 = vrot.slane %v3405, 5
      %v3438 = vsel %vm2979, %v3436, %v3437
      %v3439 = vrot.slane %v3406, 5
      %v3440 = vrot.slane %v3407, 5
      %v3441 = vsel %vm2979, %v3439, %v3440
      %v3442 = vrot.slane %v3408, 5
      %v3443 = vrot.slane %v3409, 5
      %v3444 = vsel %vm2979, %v3442, %v3443
      %v3445 = vrot.slane %v3410, 5
      %v3446 = vrot.slane %v3411, 5
      %v3447 = vsel %vm2979, %v3445, %v3446
      %v3448 = vrot.slane %v3412, 5
      %v3449 = vrot.slane %v3413, 5
      %v3450 = vsel %vm2979, %v3448, %v3449
      %v3451 = vrot.slane %v3414, 5
      %v3452 = vrot.slane %v3415, 5
      %v3453 = vsel %vm2979, %v3451, %v3452
      %v3454 = vrot.slane %v3416, 5
      %v3455 = vrot.slane %v3417, 5
      %v3456 = vsel %vm2979, %v3454, %v3455
      %v3457 = vrot.slane %v3418, 5
      %v3458 = vrot.slane %v3419, 5
      %v3459 = vsel %vm2979, %v3457, %v3458
      %v3468 = vadd.f32 %v3392, %v3438
      %v3469 = vadd.f32 %v3393, %v3441
      %v3470 = vadd.f32 %v3394, %v3444
      %v3471 = vadd.f32 %v3395, %v3447
      %v3472 = vadd.f32 %v3396, %v3450
      %v3473 = vadd.f32 %v3397, %v3453
      %v3474 = vadd.f32 %v3398, %v3456
      %v3475 = vadd.f32 %v3399, %v3459
      %v3476 = vlaneseq
      %v3477 = vshrl.u32 %v3476, 7
      %v3478 = vsub.s32 6, %v3477
      %v3479 = vrot.slane %v664, %v3478
      %v3480 = vmul.f32 %v636, %v3479
      %v3481 = vmul.f32 %v637, %v3479
      %v3482 = vmul.f32 %v638, %v3479
      %v3483 = vmul.f32 %v639, %v3479
      %v3484 = vmul.f32 %v640, %v3479
      %v3485 = vmul.f32 %v641, %v3479
      %v3486 = vmul.f32 %v642, %v3479
      %v3487 = vmul.f32 %v643, %v3479
      %v3488 = vmul.f32 %v644, %v3479
      %v3489 = vmul.f32 %v645, %v3479
      %v3490 = vmul.f32 %v646, %v3479
      %v3491 = vmul.f32 %v647, %v3479
      %v3492 = vmul.f32 %v648, %v3479
      %v3493 = vmul.f32 %v649, %v3479
      %v3494 = vmul.f32 %v650, %v3479
      %v3495 = vmul.f32 %v651, %v3479
      %vm3512 = vcmask 1041408
      %v3513 = vrot.slane %v3480, 6
      %v3514 = vrot.slane %v3481, 6
      %v3515 = vsel %vm3512, %v3513, %v3514
      %v3516 = vrot.slane %v3482, 6
      %v3517 = vrot.slane %v3483, 6
      %v3518 = vsel %vm3512, %v3516, %v3517
      %v3519 = vrot.slane %v3484, 6
      %v3520 = vrot.slane %v3485, 6
      %v3521 = vsel %vm3512, %v3519, %v3520
      %v3522 = vrot.slane %v3486, 6
      %v3523 = vrot.slane %v3487, 6
      %v3524 = vsel %vm3512, %v3522, %v3523
      %v3525 = vrot.slane %v3488, 6
      %v3526 = vrot.slane %v3489, 6
      %v3527 = vsel %vm3512, %v3525, %v3526
      %v3528 = vrot.slane %v3490, 6
      %v3529 = vrot.slane %v3491, 6
      %v3530 = vsel %vm3512, %v3528, %v3529
      %v3531 = vrot.slane %v3492, 6
      %v3532 = vrot.slane %v3493, 6
      %v3533 = vsel %vm3512, %v3531, %v3532
      %v3534 = vrot.slane %v3494, 6
      %v3535 = vrot.slane %v3495, 6
      %v3536 = vsel %vm3512, %v3534, %v3535
      %v3545 = vadd.f32 %v3468, %v3515
      %v3546 = vadd.f32 %v3469, %v3518
      %v3547 = vadd.f32 %v3470, %v3521
      %v3548 = vadd.f32 %v3471, %v3524
      %v3549 = vadd.f32 %v3472, %v3527
      %v3550 = vadd.f32 %v3473, %v3530
      %v3551 = vadd.f32 %v3474, %v3533
      %v3552 = vadd.f32 %v3475, %v3536
      %v3553 = vlaneseq
      %v3554 = vshrl.u32 %v3553, 7
      %v3555 = vsub.s32 6, %v3554
      %v3556 = vrot.slane %v665, %v3555
      %v3557 = vmul.f32 %v638, %v3556
      %v3558 = vmul.f32 %v639, %v3556
      %v3559 = vmul.f32 %v640, %v3556
      %v3560 = vmul.f32 %v641, %v3556
      %v3561 = vmul.f32 %v642, %v3556
      %v3562 = vmul.f32 %v643, %v3556
      %v3563 = vmul.f32 %v644, %v3556
      %v3564 = vmul.f32 %v645, %v3556
      %v3565 = vmul.f32 %v646, %v3556
      %v3566 = vmul.f32 %v647, %v3556
      %v3567 = vmul.f32 %v648, %v3556
      %v3568 = vmul.f32 %v649, %v3556
      %v3569 = vmul.f32 %v650, %v3556
      %v3570 = vmul.f32 %v651, %v3556
      %v3571 = vmul.f32 %v652, %v3556
      %v3572 = vmul.f32 %v653, %v3556
      %v3589 = vrot.slane %v3557, 6
      %v3590 = vrot.slane %v3558, 6
      %v3591 = vsel %vm3512, %v3589, %v3590
      %v3592 = vrot.slane %v3559, 6
      %v3593 = vrot.slane %v3560, 6
      %v3594 = vsel %vm3512, %v3592, %v3593
      %v3595 = vrot.slane %v3561, 6
      %v3596 = vrot.slane %v3562, 6
      %v3597 = vsel %vm3512, %v3595, %v3596
      %v3598 = vrot.slane %v3563, 6
      %v3599 = vrot.slane %v3564, 6
      %v3600 = vsel %vm3512, %v3598, %v3599
      %v3601 = vrot.slane %v3565, 6
      %v3602 = vrot.slane %v3566, 6
      %v3603 = vsel %vm3512, %v3601, %v3602
      %v3604 = vrot.slane %v3567, 6
      %v3605 = vrot.slane %v3568, 6
      %v3606 = vsel %vm3512, %v3604, %v3605
      %v3607 = vrot.slane %v3569, 6
      %v3608 = vrot.slane %v3570, 6
      %v3609 = vsel %vm3512, %v3607, %v3608
      %v3610 = vrot.slane %v3571, 6
      %v3611 = vrot.slane %v3572, 6
      %v3612 = vsel %vm3512, %v3610, %v3611
      %v3621 = vadd.f32 %v3545, %v3591
      %v3622 = vadd.f32 %v3546, %v3594
      %v3623 = vadd.f32 %v3547, %v3597
      %v3624 = vadd.f32 %v3548, %v3600
      %v3625 = vadd.f32 %v3549, %v3603
      %v3626 = vadd.f32 %v3550, %v3606
      %v3627 = vadd.f32 %v3551, %v3609
      %v3628 = vadd.f32 %v3552, %v3612
      %v3629 = vlaneseq
      %v3630 = vshrl.u32 %v3629, 7
      %v3631 = vsub.s32 6, %v3630
      %v3632 = vrot.slane %v666, %v3631
      %v3633 = vmul.f32 %v640, %v3632
      %v3634 = vmul.f32 %v641, %v3632
      %v3635 = vmul.f32 %v642, %v3632
      %v3636 = vmul.f32 %v643, %v3632
      %v3637 = vmul.f32 %v644, %v3632
      %v3638 = vmul.f32 %v645, %v3632
      %v3639 = vmul.f32 %v646, %v3632
      %v3640 = vmul.f32 %v647, %v3632
      %v3641 = vmul.f32 %v648, %v3632
      %v3642 = vmul.f32 %v649, %v3632
      %v3643 = vmul.f32 %v650, %v3632
      %v3644 = vmul.f32 %v651, %v3632
      %v3645 = vmul.f32 %v652, %v3632
      %v3646 = vmul.f32 %v653, %v3632
      %v3647 = vmul.f32 %v654, %v3632
      %v3648 = vmul.f32 %v655, %v3632
      %v3665 = vrot.slane %v3633, 6
      %v3666 = vrot.slane %v3634, 6
      %v3667 = vsel %vm3512, %v3665, %v3666
      %v3668 = vrot.slane %v3635, 6
      %v3669 = vrot.slane %v3636, 6
      %v3670 = vsel %vm3512, %v3668, %v3669
      %v3671 = vrot.slane %v3637, 6
      %v3672 = vrot.slane %v3638, 6
      %v3673 = vsel %vm3512, %v3671, %v3672
      %v3674 = vrot.slane %v3639, 6
      %v3675 = vrot.slane %v3640, 6
      %v3676 = vsel %vm3512, %v3674, %v3675
      %v3677 = vrot.slane %v3641, 6
      %v3678 = vrot.slane %v3642, 6
      %v3679 = vsel %vm3512, %v3677, %v3678
      %v3680 = vrot.slane %v3643, 6
      %v3681 = vrot.slane %v3644, 6
      %v3682 = vsel %vm3512, %v3680, %v3681
      %v3683 = vrot.slane %v3645, 6
      %v3684 = vrot.slane %v3646, 6
      %v3685 = vsel %vm3512, %v3683, %v3684
      %v3686 = vrot.slane %v3647, 6
      %v3687 = vrot.slane %v3648, 6
      %v3688 = vsel %vm3512, %v3686, %v3687
      %v3697 = vadd.f32 %v3621, %v3667
      %v3698 = vadd.f32 %v3622, %v3670
      %v3699 = vadd.f32 %v3623, %v3673
      %v3700 = vadd.f32 %v3624, %v3676
      %v3701 = vadd.f32 %v3625, %v3679
      %v3702 = vadd.f32 %v3626, %v3682
      %v3703 = vadd.f32 %v3627, %v3685
      %v3704 = vadd.f32 %v3628, %v3688
      %v3705 = vlaneseq
      %v3706 = vshrl.u32 %v3705, 7
      %v3707 = vsub.s32 6, %v3706
      %v3708 = vrot.slane %v667, %v3707
      %v3709 = vmul.f32 %v642, %v3708
      %v3710 = vmul.f32 %v643, %v3708
      %v3711 = vmul.f32 %v644, %v3708
      %v3712 = vmul.f32 %v645, %v3708
      %v3713 = vmul.f32 %v646, %v3708
      %v3714 = vmul.f32 %v647, %v3708
      %v3715 = vmul.f32 %v648, %v3708
      %v3716 = vmul.f32 %v649, %v3708
      %v3717 = vmul.f32 %v650, %v3708
      %v3718 = vmul.f32 %v651, %v3708
      %v3719 = vmul.f32 %v652, %v3708
      %v3720 = vmul.f32 %v653, %v3708
      %v3721 = vmul.f32 %v654, %v3708
      %v3722 = vmul.f32 %v655, %v3708
      %v3723 = vmul.f32 %v656, %v3708
      %v3724 = vmul.f32 %v657, %v3708
      %v3741 = vrot.slane %v3709, 6
      %v3742 = vrot.slane %v3710, 6
      %v3743 = vsel %vm3512, %v3741, %v3742
      %v3744 = vrot.slane %v3711, 6
      %v3745 = vrot.slane %v3712, 6
      %v3746 = vsel %vm3512, %v3744, %v3745
      %v3747 = vrot.slane %v3713, 6
      %v3748 = vrot.slane %v3714, 6
      %v3749 = vsel %vm3512, %v3747, %v3748
      %v3750 = vrot.slane %v3715, 6
      %v3751 = vrot.slane %v3716, 6
      %v3752 = vsel %vm3512, %v3750, %v3751
      %v3753 = vrot.slane %v3717, 6
      %v3754 = vrot.slane %v3718, 6
      %v3755 = vsel %vm3512, %v3753, %v3754
      %v3756 = vrot.slane %v3719, 6
      %v3757 = vrot.slane %v3720, 6
      %v3758 = vsel %vm3512, %v3756, %v3757
      %v3759 = vrot.slane %v3721, 6
      %v3760 = vrot.slane %v3722, 6
      %v3761 = vsel %vm3512, %v3759, %v3760
      %v3762 = vrot.slane %v3723, 6
      %v3763 = vrot.slane %v3724, 6
      %v3764 = vsel %vm3512, %v3762, %v3763
      %v3773 = vadd.f32 %v3697, %v3743
      %v3774 = vadd.f32 %v3698, %v3746
      %v3775 = vadd.f32 %v3699, %v3749
      %v3776 = vadd.f32 %v3700, %v3752
      %v3777 = vadd.f32 %v3701, %v3755
      %v3778 = vadd.f32 %v3702, %v3758
      %v3779 = vadd.f32 %v3703, %v3761
      %v3780 = vadd.f32 %v3704, %v3764
      %v3781 = vlaneseq
      %v3782 = vshrl.u32 %v3781, 7
      %v3783 = vsub.s32 6, %v3782
      %v3784 = vrot.slane %v668, %v3783
      %v3785 = vmul.f32 %v644, %v3784
      %v3786 = vmul.f32 %v645, %v3784
      %v3787 = vmul.f32 %v646, %v3784
      %v3788 = vmul.f32 %v647, %v3784
      %v3789 = vmul.f32 %v648, %v3784
      %v3790 = vmul.f32 %v649, %v3784
      %v3791 = vmul.f32 %v650, %v3784
      %v3792 = vmul.f32 %v651, %v3784
      %v3793 = vmul.f32 %v652, %v3784
      %v3794 = vmul.f32 %v653, %v3784
      %v3795 = vmul.f32 %v654, %v3784
      %v3796 = vmul.f32 %v655, %v3784
      %v3797 = vmul.f32 %v656, %v3784
      %v3798 = vmul.f32 %v657, %v3784
      %v3799 = vmul.f32 %v658, %v3784
      %v3800 = vmul.f32 %v659, %v3784
      %v3817 = vrot.slane %v3785, 6
      %v3818 = vrot.slane %v3786, 6
      %v3819 = vsel %vm3512, %v3817, %v3818
      %v3820 = vrot.slane %v3787, 6
      %v3821 = vrot.slane %v3788, 6
      %v3822 = vsel %vm3512, %v3820, %v3821
      %v3823 = vrot.slane %v3789, 6
      %v3824 = vrot.slane %v3790, 6
      %v3825 = vsel %vm3512, %v3823, %v3824
      %v3826 = vrot.slane %v3791, 6
      %v3827 = vrot.slane %v3792, 6
      %v3828 = vsel %vm3512, %v3826, %v3827
      %v3829 = vrot.slane %v3793, 6
      %v3830 = vrot.slane %v3794, 6
      %v3831 = vsel %vm3512, %v3829, %v3830
      %v3832 = vrot.slane %v3795, 6
      %v3833 = vrot.slane %v3796, 6
      %v3834 = vsel %vm3512, %v3832, %v3833
      %v3835 = vrot.slane %v3797, 6
      %v3836 = vrot.slane %v3798, 6
      %v3837 = vsel %vm3512, %v3835, %v3836
      %v3838 = vrot.slane %v3799, 6
      %v3839 = vrot.slane %v3800, 6
      %v3840 = vsel %vm3512, %v3838, %v3839
      %v3849 = vadd.f32 %v3773, %v3819
      %v3850 = vadd.f32 %v3774, %v3822
      %v3851 = vadd.f32 %v3775, %v3825
      %v3852 = vadd.f32 %v3776, %v3828
      %v3853 = vadd.f32 %v3777, %v3831
      %v3854 = vadd.f32 %v3778, %v3834
      %v3855 = vadd.f32 %v3779, %v3837
      %v3856 = vadd.f32 %v3780, %v3840
      %v3857 = vlaneseq
      %v3858 = vshrl.u32 %v3857, 7
      %v3859 = vsub.s32 6, %v3858
      %v3860 = vrot.slane %v669, %v3859
      %v3861 = vmul.f32 %v646, %v3860
      %v3862 = vmul.f32 %v647, %v3860
      %v3863 = vmul.f32 %v648, %v3860
      %v3864 = vmul.f32 %v649, %v3860
      %v3865 = vmul.f32 %v650, %v3860
      %v3866 = vmul.f32 %v651, %v3860
      %v3867 = vmul.f32 %v652, %v3860
      %v3868 = vmul.f32 %v653, %v3860
      %v3869 = vmul.f32 %v654, %v3860
      %v3870 = vmul.f32 %v655, %v3860
      %v3871 = vmul.f32 %v656, %v3860
      %v3872 = vmul.f32 %v657, %v3860
      %v3873 = vmul.f32 %v658, %v3860
      %v3874 = vmul.f32 %v659, %v3860
      %v3875 = vmul.f32 %v660, %v3860
      %v3876 = vmul.f32 %v661, %v3860
      %v3893 = vrot.slane %v3861, 6
      %v3894 = vrot.slane %v3862, 6
      %v3895 = vsel %vm3512, %v3893, %v3894
      %v3896 = vrot.slane %v3863, 6
      %v3897 = vrot.slane %v3864, 6
      %v3898 = vsel %vm3512, %v3896, %v3897
      %v3899 = vrot.slane %v3865, 6
      %v3900 = vrot.slane %v3866, 6
      %v3901 = vsel %vm3512, %v3899, %v3900
      %v3902 = vrot.slane %v3867, 6
      %v3903 = vrot.slane %v3868, 6
      %v3904 = vsel %vm3512, %v3902, %v3903
      %v3905 = vrot.slane %v3869, 6
      %v3906 = vrot.slane %v3870, 6
      %v3907 = vsel %vm3512, %v3905, %v3906
      %v3908 = vrot.slane %v3871, 6
      %v3909 = vrot.slane %v3872, 6
      %v3910 = vsel %vm3512, %v3908, %v3909
      %v3911 = vrot.slane %v3873, 6
      %v3912 = vrot.slane %v3874, 6
      %v3913 = vsel %vm3512, %v3911, %v3912
      %v3914 = vrot.slane %v3875, 6
      %v3915 = vrot.slane %v3876, 6
      %v3916 = vsel %vm3512, %v3914, %v3915
      %v3925 = vadd.f32 %v3849, %v3895
      %v3926 = vadd.f32 %v3850, %v3898
      %v3927 = vadd.f32 %v3851, %v3901
      %v3928 = vadd.f32 %v3852, %v3904
      %v3929 = vadd.f32 %v3853, %v3907
      %v3930 = vadd.f32 %v3854, %v3910
      %v3931 = vadd.f32 %v3855, %v3913
      %v3932 = vadd.f32 %v3856, %v3916
      %v3933 = vlaneseq
      %v3934 = vshrl.u32 %v3933, 7
      %v3935 = vsub.s32 6, %v3934
      %v3936 = vrot.slane %v670, %v3935
      %v3937 = vmul.f32 %v648, %v3936
      %v3938 = vmul.f32 %v649, %v3936
      %v3939 = vmul.f32 %v650, %v3936
      %v3940 = vmul.f32 %v651, %v3936
      %v3941 = vmul.f32 %v652, %v3936
      %v3942 = vmul.f32 %v653, %v3936
      %v3943 = vmul.f32 %v654, %v3936
      %v3944 = vmul.f32 %v655, %v3936
      %v3945 = vmul.f32 %v656, %v3936
      %v3946 = vmul.f32 %v657, %v3936
      %v3947 = vmul.f32 %v658, %v3936
      %v3948 = vmul.f32 %v659, %v3936
      %v3949 = vmul.f32 %v660, %v3936
      %v3950 = vmul.f32 %v661, %v3936
      %v3951 = vmul.f32 %v662, %v3936
      %v3952 = vmul.f32 %v663, %v3936
      %v3969 = vrot.slane %v3937, 6
      %v3970 = vrot.slane %v3938, 6
      %v3971 = vsel %vm3512, %v3969, %v3970
      %v3972 = vrot.slane %v3939, 6
      %v3973 = vrot.slane %v3940, 6
      %v3974 = vsel %vm3512, %v3972, %v3973
      %v3975 = vrot.slane %v3941, 6
      %v3976 = vrot.slane %v3942, 6
      %v3977 = vsel %vm3512, %v3975, %v3976
      %v3978 = vrot.slane %v3943, 6
      %v3979 = vrot.slane %v3944, 6
      %v3980 = vsel %vm3512, %v3978, %v3979
      %v3981 = vrot.slane %v3945, 6
      %v3982 = vrot.slane %v3946, 6
      %v3983 = vsel %vm3512, %v3981, %v3982
      %v3984 = vrot.slane %v3947, 6
      %v3985 = vrot.slane %v3948, 6
      %v3986 = vsel %vm3512, %v3984, %v3985
      %v3987 = vrot.slane %v3949, 6
      %v3988 = vrot.slane %v3950, 6
      %v3989 = vsel %vm3512, %v3987, %v3988
      %v3990 = vrot.slane %v3951, 6
      %v3991 = vrot.slane %v3952, 6
      %v3992 = vsel %vm3512, %v3990, %v3991
      %v4001 = vadd.f32 %v3925, %v3971
      %v4002 = vadd.f32 %v3926, %v3974
      %v4003 = vadd.f32 %v3927, %v3977
      %v4004 = vadd.f32 %v3928, %v3980
      %v4005 = vadd.f32 %v3929, %v3983
      %v4006 = vadd.f32 %v3930, %v3986
      %v4007 = vadd.f32 %v3931, %v3989
      %v4008 = vadd.f32 %v3932, %v3992
      %v4009 = vld [vmem:[%s4] sm:$0x1]
      %v4011 = vlaneseq
      %v4012 = vshrl.u32 %v4011, 7
      %v4013 = vsub.s32 0, %v4012
      %v4014 = vrot.slane %v4009, %v4013
      %v4016 = vadd.f32 %v4001, %v4014
      %v4017 = vadd.f32 %v4002, %v4014
      %v4018 = vadd.f32 %v4003, %v4014
      %v4019 = vadd.f32 %v4004, %v4014
      %v4020 = vadd.f32 %v4005, %v4014
      %v4021 = vadd.f32 %v4006, %v4014
      %v4022 = vadd.f32 %v4007, %v4014
      %v4023 = vadd.f32 %v4008, %v4014
      %v4024 = vld [vmem:[%s5] sm:$0x1]
      %v4025 = vld [vmem:[%s6] sm:$0x1]
      %v4026 = vsel %vm567, %v4016, 0.0
      %4027 = vadd.xlane.f32.xlu0 %v4026
      %v4028 = vpop.xlane.xlu0 %4027
      %v4029 = vsel %vm567, %v4017, 0.0
      %4030 = vadd.xlane.f32.xlu0 %v4029
      %v4031 = vpop.xlane.xlu0 %4030
      %v4032 = vsel %vm567, %v4018, 0.0
      %4033 = vadd.xlane.f32.xlu0 %v4032
      %v4034 = vpop.xlane.xlu0 %4033
      %v4035 = vsel %vm567, %v4019, 0.0
      %4036 = vadd.xlane.f32.xlu0 %v4035
      %v4037 = vpop.xlane.xlu0 %4036
      %v4038 = vsel %vm567, %v4020, 0.0
      %4039 = vadd.xlane.f32.xlu0 %v4038
      %v4040 = vpop.xlane.xlu0 %4039
      %v4041 = vsel %vm567, %v4021, 0.0
      %4042 = vadd.xlane.f32.xlu0 %v4041
      %v4043 = vpop.xlane.xlu0 %4042
      %v4044 = vsel %vm567, %v4022, 0.0
      %4045 = vadd.xlane.f32.xlu0 %v4044
      %v4046 = vpop.xlane.xlu0 %4045
      %v4047 = vsel %vm567, %v4023, 0.0
      %4048 = vadd.xlane.f32.xlu0 %v4047
      %v4049 = vpop.xlane.xlu0 %4048
      %v4050 = vrcp.pop 8.0
      %v4051 = vmul.f32 %v4028, %v4050
      %v4052 = vmul.f32 %v4031, %v4050
      %v4053 = vmul.f32 %v4034, %v4050
      %v4054 = vmul.f32 %v4037, %v4050
      %v4055 = vmul.f32 %v4040, %v4050
      %v4056 = vmul.f32 %v4043, %v4050
      %v4057 = vmul.f32 %v4046, %v4050
      %v4058 = vmul.f32 %v4049, %v4050
      %v4059 = vsub.f32 %v4016, %v4051
      %v4060 = vsub.f32 %v4017, %v4052
      %v4061 = vsub.f32 %v4018, %v4053
      %v4062 = vsub.f32 %v4019, %v4054
      %v4063 = vsub.f32 %v4020, %v4055
      %v4064 = vsub.f32 %v4021, %v4056
      %v4065 = vsub.f32 %v4022, %v4057
      %v4066 = vsub.f32 %v4023, %v4058
      %v4067 = vmul.f32 %v4059, %v4059
      %v4068 = vmul.f32 %v4060, %v4060
      %v4069 = vmul.f32 %v4061, %v4061
      %v4070 = vmul.f32 %v4062, %v4062
      %v4071 = vmul.f32 %v4063, %v4063
      %v4072 = vmul.f32 %v4064, %v4064
      %v4073 = vmul.f32 %v4065, %v4065
      %v4074 = vmul.f32 %v4066, %v4066
      %v4075 = vsel %vm567, %v4067, 0.0
      %4076 = vadd.xlane.f32.xlu0 %v4075
      %v4077 = vpop.xlane.xlu0 %4076
      %v4078 = vsel %vm567, %v4068, 0.0
      %4079 = vadd.xlane.f32.xlu0 %v4078
      %v4080 = vpop.xlane.xlu0 %4079
      %v4081 = vsel %vm567, %v4069, 0.0
      %4082 = vadd.xlane.f32.xlu0 %v4081
      %v4083 = vpop.xlane.xlu0 %4082
      %v4084 = vsel %vm567, %v4070, 0.0
      %4085 = vadd.xlane.f32.xlu0 %v4084
      %v4086 = vpop.xlane.xlu0 %4085
      %v4087 = vsel %vm567, %v4071, 0.0
      %4088 = vadd.xlane.f32.xlu0 %v4087
      %v4089 = vpop.xlane.xlu0 %4088
      %v4090 = vsel %vm567, %v4072, 0.0
      %4091 = vadd.xlane.f32.xlu0 %v4090
      %v4092 = vpop.xlane.xlu0 %4091
      %v4093 = vsel %vm567, %v4073, 0.0
      %4094 = vadd.xlane.f32.xlu0 %v4093
      %v4095 = vpop.xlane.xlu0 %4094
      %v4096 = vsel %vm567, %v4074, 0.0
      %4097 = vadd.xlane.f32.xlu0 %v4096
      %v4098 = vpop.xlane.xlu0 %4097
      %v4099 = vmul.f32 %v4077, %v4050
      %v4100 = vmul.f32 %v4080, %v4050
      %v4101 = vmul.f32 %v4083, %v4050
      %v4102 = vmul.f32 %v4086, %v4050
      %v4103 = vmul.f32 %v4089, %v4050
      %v4104 = vmul.f32 %v4092, %v4050
      %v4105 = vmul.f32 %v4095, %v4050
      %v4106 = vmul.f32 %v4098, %v4050
      %v4107 = vadd.f32 %v4099, 1e-05
      %v4108 = vadd.f32 %v4100, 1e-05
      %v4109 = vadd.f32 %v4101, 1e-05
      %v4110 = vadd.f32 %v4102, 1e-05
      %v4111 = vadd.f32 %v4103, 1e-05
      %v4112 = vadd.f32 %v4104, 1e-05
      %v4113 = vadd.f32 %v4105, 1e-05
      %v4114 = vadd.f32 %v4106, 1e-05
      %v4115 = vrsqrt.pop %v4107
      %v4116 = vrsqrt.pop %v4108
      %v4117 = vrsqrt.pop %v4109
      %v4118 = vrsqrt.pop %v4110
      %v4119 = vrsqrt.pop %v4111
      %v4120 = vrsqrt.pop %v4112
      %v4121 = vrsqrt.pop %v4113
      %v4122 = vrsqrt.pop %v4114
      %v4123 = vmul.f32 %v4059, %v4115
      %v4124 = vmul.f32 %v4060, %v4116
      %v4125 = vmul.f32 %v4061, %v4117
      %v4126 = vmul.f32 %v4062, %v4118
      %v4127 = vmul.f32 %v4063, %v4119
      %v4128 = vmul.f32 %v4064, %v4120
      %v4129 = vmul.f32 %v4065, %v4121
      %v4130 = vmul.f32 %v4066, %v4122
      %v4132 = vlaneseq
      %v4133 = vshrl.u32 %v4132, 7
      %v4134 = vsub.s32 0, %v4133
      %v4135 = vrot.slane %v4024, %v4134
      %v4137 = vmul.f32 %v4123, %v4135
      %v4138 = vmul.f32 %v4124, %v4135
      %v4139 = vmul.f32 %v4125, %v4135
      %v4140 = vmul.f32 %v4126, %v4135
      %v4141 = vmul.f32 %v4127, %v4135
      %v4142 = vmul.f32 %v4128, %v4135
      %v4143 = vmul.f32 %v4129, %v4135
      %v4144 = vmul.f32 %v4130, %v4135
      %v4146 = vlaneseq
      %v4147 = vshrl.u32 %v4146, 7
      %v4148 = vsub.s32 0, %v4147
      %v4149 = vrot.slane %v4025, %v4148
      %v4151 = vadd.f32 %v4137, %v4149
      %v4152 = vadd.f32 %v4138, %v4149
      %v4153 = vadd.f32 %v4139, %v4149
      %v4154 = vadd.f32 %v4140, %v4149
      %v4155 = vadd.f32 %v4141, %v4149
      %v4156 = vadd.f32 %v4142, %v4149
      %v4157 = vadd.f32 %v4143, %v4149
      %v4158 = vadd.f32 %v4144, %v4149
      %v4159 = vld [vmem:[%s7] sm:$0xff]
      %v4160 = vld [vmem:[%s8] sm:$0x1]
      %v4162 = vlaneseq
      %v4163 = vshrl.u32 %v4162, 7
      %v4164 = vsub.s32 0, %v4163
      %v4165 = vrot.slane %v4160, %v4164
      %v4168 = vsel %vm567, %v4151, 0
      %v4171 = vsel %vm567, %v4152, 0
      %v4174 = vsel %vm567, %v4153, 0
      %v4177 = vsel %vm567, %v4154, 0
      %v4180 = vsel %vm567, %v4155, 0
      %v4183 = vsel %vm567, %v4156, 0
      %v4186 = vsel %vm567, %v4157, 0
      %v4189 = vsel %vm567, %v4158, 0
      %4191 = vmatprep.subr.mxu0 0.0
      %4192 = vmatpush1.msra.mxu0 0.0
      %4193 = vmatprep.subr.mxu0 0.0
      %4194 = vmatpush1.msra.mxu0 0.0
      %4195 = vmatprep.subr.mxu0 0.0
      %4196 = vmatpush1.msra.mxu0 0.0
      %4197 = vmatprep.subr.mxu0 0.0
      %4198 = vmatpush1.msra.mxu0 0.0
      %4199 = vmatprep.subr.mxu0 0.0
      %4200 = vmatpush1.msra.mxu0 0.0
      %4201 = vmatprep.subr.mxu0 0.0
      %4202 = vmatpush1.msra.mxu0 0.0
      %4203 = vmatprep.subr.mxu0 0.0
      %4204 = vmatpush1.msra.mxu0 0.0
      %4205 = vmatprep.subr.mxu0 0.0
      %4206 = vmatpush1.msra.mxu0 0.0
      %4207 = vmatprep.subr.mxu0 0.0
      %4208 = vmatpush1.msra.mxu0 0.0
      %4209 = vmatprep.subr.mxu0 0.0
      %4210 = vmatpush1.msra.mxu0 0.0
      %4211 = vmatprep.subr.mxu0 0.0
      %4212 = vmatpush1.msra.mxu0 0.0
      %4213 = vmatprep.subr.mxu0 0.0
      %4214 = vmatpush1.msra.mxu0 0.0
      %4215 = vmatprep.subr.mxu0 0.0
      %4216 = vmatpush1.msra.mxu0 0.0
      %4217 = vmatprep.subr.mxu0 0.0
      %4218 = vmatpush1.msra.mxu0 0.0
      %4219 = vmatprep.subr.mxu0 0.0
      %4220 = vmatpush1.msra.mxu0 0.0
      %4221 = vmatprep.subr.mxu0 0.0
      %4222 = vmatpush1.msra.mxu0 %v4159
      %4223 = vmatprep.subr.mxu0 0.0
      %4224 = vmatpush2.msra.mxu0 0.0
      %4225 = vmatprep.subr.mxu0 0.0
      %4226 = vmatpush2.msra.mxu0 0.0
      %4227 = vmatprep.subr.mxu0 0.0
      %4228 = vmatpush2.msra.mxu0 0.0
      %4229 = vmatprep.subr.mxu0 0.0
      %4230 = vmatpush2.msra.mxu0 0.0
      %4231 = vmatprep.subr.mxu0 0.0
      %4232 = vmatpush2.msra.mxu0 0.0
      %4233 = vmatprep.subr.mxu0 0.0
      %4234 = vmatpush2.msra.mxu0 0.0
      %4235 = vmatprep.subr.mxu0 0.0
      %4236 = vmatpush2.msra.mxu0 0.0
      %4237 = vmatprep.subr.mxu0 0.0
      %4238 = vmatpush2.msra.mxu0 0.0
      %4239 = vmatprep.subr.mxu0 0.0
      %4240 = vmatpush2.msra.mxu0 0.0
      %4241 = vmatprep.subr.mxu0 0.0
      %4242 = vmatpush2.msra.mxu0 0.0
      %4243 = vmatprep.subr.mxu0 0.0
      %4244 = vmatpush2.msra.mxu0 0.0
      %4245 = vmatprep.subr.mxu0 0.0
      %4246 = vmatpush2.msra.mxu0 0.0
      %4247 = vmatprep.subr.mxu0 0.0
      %4248 = vmatpush2.msra.mxu0 0.0
      %4249 = vmatprep.subr.mxu0 0.0
      %4250 = vmatpush2.msra.mxu0 0.0
      %4251 = vmatprep.subr.mxu0 0.0
      %4252 = vmatpush2.msra.mxu0 0.0
      %4253 = vmatprep.subr.mxu0 0.0
      %4254 = vmatpush2.msra.mxu0 0.0
      %4255 = vmatprep.mubr.f32.mxu0 0.0
      %4256 = vmatmul.mubr.f32.gmra.mxu0 %v4168
      %v4257 = vpop.f32.mrf.mxu0
      %v4258 = vadd.f32 %v4165, %v4257
      %v4259 = vpop.f32.mrf.mxu0
      %4260 = vmatprep.mubr.f32.mxu0 0.0
      %4261 = vmatmul.mubr.f32.gmra.mxu0 %v4171
      %v4262 = vpop.f32.mrf.mxu0
      %v4263 = vadd.f32 %v4165, %v4262
      %v4264 = vpop.f32.mrf.mxu0
      %4265 = vmatprep.mubr.f32.mxu0 0.0
      %4266 = vmatmul.mubr.f32.gmra.mxu0 %v4174
      %v4267 = vpop.f32.mrf.mxu0
      %v4268 = vadd.f32 %v4165, %v4267
      %v4269 = vpop.f32.mrf.mxu0
      %4270 = vmatprep.mubr.f32.mxu0 0.0
      %4271 = vmatmul.mubr.f32.gmra.mxu0 %v4177
      %v4272 = vpop.f32.mrf.mxu0
      %v4273 = vadd.f32 %v4165, %v4272
      %v4274 = vpop.f32.mrf.mxu0
      %4275 = vmatprep.mubr.f32.mxu0 0.0
      %4276 = vmatmul.mubr.f32.gmra.mxu0 %v4180
      %v4277 = vpop.f32.mrf.mxu0
      %v4278 = vadd.f32 %v4165, %v4277
      %v4279 = vpop.f32.mrf.mxu0
      %4280 = vmatprep.mubr.f32.mxu0 0.0
      %4281 = vmatmul.mubr.f32.gmra.mxu0 %v4183
      %v4282 = vpop.f32.mrf.mxu0
      %v4283 = vadd.f32 %v4165, %v4282
      %v4284 = vpop.f32.mrf.mxu0
      %4285 = vmatprep.mubr.f32.mxu0 0.0
      %4286 = vmatmul.mubr.f32.gmra.mxu0 %v4186
      %v4287 = vpop.f32.mrf.mxu0
      %v4288 = vadd.f32 %v4165, %v4287
      %v4289 = vpop.f32.mrf.mxu0
      %4290 = vmatprep.mubr.f32.mxu0 0.0
      %4291 = vmatmul.mubr.f32.gmra.mxu0 %v4189
      %v4292 = vpop.f32.mrf.mxu0
      %v4293 = vadd.f32 %v4165, %v4292
      %v4294 = vpop.f32.mrf.mxu0
      %4295 = vdwg.mxu0
      %v4296 = vmul.f32 %v4258, 0.5
      %v4297 = vmul.f32 %v4263, 0.5
      %v4298 = vmul.f32 %v4268, 0.5
      %v4299 = vmul.f32 %v4273, 0.5
      %v4300 = vmul.f32 %v4278, 0.5
      %v4301 = vmul.f32 %v4283, 0.5
      %v4302 = vmul.f32 %v4288, 0.5
      %v4303 = vmul.f32 %v4293, 0.5
      %v4304 = vmul.f32 %v4258, 0.70710677
      %v4305 = vmul.f32 %v4263, 0.70710677
      %v4306 = vmul.f32 %v4268, 0.70710677
      %v4307 = vmul.f32 %v4273, 0.70710677
      %v4308 = vmul.f32 %v4278, 0.70710677
      %v4309 = vmul.f32 %v4283, 0.70710677
      %v4310 = vmul.f32 %v4288, 0.70710677
      %v4311 = vmul.f32 %v4293, 0.70710677
      %v4312 = vand.u32 2147483647, %v4304
      %v4313 = vand.u32 2147483647, %v4305
      %v4314 = vand.u32 2147483647, %v4306
      %v4315 = vand.u32 2147483647, %v4307
      %v4316 = vand.u32 2147483647, %v4308
      %v4317 = vand.u32 2147483647, %v4309
      %v4318 = vand.u32 2147483647, %v4310
      %v4319 = vand.u32 2147483647, %v4311
      %v4320 = vmul.f32 %v4312, 0.3275911
      %v4321 = vmul.f32 %v4313, 0.3275911
      %v4322 = vmul.f32 %v4314, 0.3275911
      %v4323 = vmul.f32 %v4315, 0.3275911
      %v4324 = vmul.f32 %v4316, 0.3275911
      %v4325 = vmul.f32 %v4317, 0.3275911
      %v4326 = vmul.f32 %v4318, 0.3275911
      %v4327 = vmul.f32 %v4319, 0.3275911
      %v4328 = vadd.f32 %v4320, 1.0
      %v4329 = vadd.f32 %v4321, 1.0
      %v4330 = vadd.f32 %v4322, 1.0
      %v4331 = vadd.f32 %v4323, 1.0
      %v4332 = vadd.f32 %v4324, 1.0
      %v4333 = vadd.f32 %v4325, 1.0
      %v4334 = vadd.f32 %v4326, 1.0
      %v4335 = vadd.f32 %v4327, 1.0
      %v4336 = vrcp.pop %v4328
      %v4337 = vmul.f32 1.0, %v4336
      %v4338 = vrcp.pop %v4329
      %v4339 = vmul.f32 1.0, %v4338
      %v4340 = vrcp.pop %v4330
      %v4341 = vmul.f32 1.0, %v4340
      %v4342 = vrcp.pop %v4331
      %v4343 = vmul.f32 1.0, %v4342
      %v4344 = vrcp.pop %v4332
      %v4345 = vmul.f32 1.0, %v4344
      %v4346 = vrcp.pop %v4333
      %v4347 = vmul.f32 1.0, %v4346
      %v4348 = vrcp.pop %v4334
      %v4349 = vmul.f32 1.0, %v4348
      %v4350 = vrcp.pop %v4335
      %v4351 = vmul.f32 1.0, %v4350
      %v4352 = vmul.f32 %v4337, 1.0614054
      %v4353 = vmul.f32 %v4339, 1.0614054
      %v4354 = vmul.f32 %v4341, 1.0614054
      %v4355 = vmul.f32 %v4343, 1.0614054
      %v4356 = vmul.f32 %v4345, 1.0614054
      %v4357 = vmul.f32 %v4347, 1.0614054
      %v4358 = vmul.f32 %v4349, 1.0614054
      %v4359 = vmul.f32 %v4351, 1.0614054
      %v4360 = vadd.f32 %v4352, -1.4531521
      %v4361 = vadd.f32 %v4353, -1.4531521
      %v4362 = vadd.f32 %v4354, -1.4531521
      %v4363 = vadd.f32 %v4355, -1.4531521
      %v4364 = vadd.f32 %v4356, -1.4531521
      %v4365 = vadd.f32 %v4357, -1.4531521
      %v4366 = vadd.f32 %v4358, -1.4531521
      %v4367 = vadd.f32 %v4359, -1.4531521
      %v4368 = vmul.f32 %v4360, %v4337
      %v4369 = vmul.f32 %v4361, %v4339
      %v4370 = vmul.f32 %v4362, %v4341
      %v4371 = vmul.f32 %v4363, %v4343
      %v4372 = vmul.f32 %v4364, %v4345
      %v4373 = vmul.f32 %v4365, %v4347
      %v4374 = vmul.f32 %v4366, %v4349
      %v4375 = vmul.f32 %v4367, %v4351
      %v4376 = vadd.f32 %v4368, 1.4214138
      %v4377 = vadd.f32 %v4369, 1.4214138
      %v4378 = vadd.f32 %v4370, 1.4214138
      %v4379 = vadd.f32 %v4371, 1.4214138
      %v4380 = vadd.f32 %v4372, 1.4214138
      %v4381 = vadd.f32 %v4373, 1.4214138
      %v4382 = vadd.f32 %v4374, 1.4214138
      %v4383 = vadd.f32 %v4375, 1.4214138
      %v4384 = vmul.f32 %v4376, %v4337
      %v4385 = vmul.f32 %v4377, %v4339
      %v4386 = vmul.f32 %v4378, %v4341
      %v4387 = vmul.f32 %v4379, %v4343
      %v4388 = vmul.f32 %v4380, %v4345
      %v4389 = vmul.f32 %v4381, %v4347
      %v4390 = vmul.f32 %v4382, %v4349
      %v4391 = vmul.f32 %v4383, %v4351
      %v4392 = vadd.f32 %v4384, -0.28449672
      %v4393 = vadd.f32 %v4385, -0.28449672
      %v4394 = vadd.f32 %v4386, -0.28449672
      %v4395 = vadd.f32 %v4387, -0.28449672
      %v4396 = vadd.f32 %v4388, -0.28449672
      %v4397 = vadd.f32 %v4389, -0.28449672
      %v4398 = vadd.f32 %v4390, -0.28449672
      %v4399 = vadd.f32 %v4391, -0.28449672
      %v4400 = vmul.f32 %v4392, %v4337
      %v4401 = vmul.f32 %v4393, %v4339
      %v4402 = vmul.f32 %v4394, %v4341
      %v4403 = vmul.f32 %v4395, %v4343
      %v4404 = vmul.f32 %v4396, %v4345
      %v4405 = vmul.f32 %v4397, %v4347
      %v4406 = vmul.f32 %v4398, %v4349
      %v4407 = vmul.f32 %v4399, %v4351
      %v4408 = vadd.f32 %v4400, 0.2548296
      %v4409 = vadd.f32 %v4401, 0.2548296
      %v4410 = vadd.f32 %v4402, 0.2548296
      %v4411 = vadd.f32 %v4403, 0.2548296
      %v4412 = vadd.f32 %v4404, 0.2548296
      %v4413 = vadd.f32 %v4405, 0.2548296
      %v4414 = vadd.f32 %v4406, 0.2548296
      %v4415 = vadd.f32 %v4407, 0.2548296
      %v4416 = vmul.f32 %v4408, %v4337
      %v4417 = vmul.f32 %v4409, %v4339
      %v4418 = vmul.f32 %v4410, %v4341
      %v4419 = vmul.f32 %v4411, %v4343
      %v4420 = vmul.f32 %v4412, %v4345
      %v4421 = vmul.f32 %v4413, %v4347
      %v4422 = vmul.f32 %v4414, %v4349
      %v4423 = vmul.f32 %v4415, %v4351
      %v4424 = vsub.f32 0.0, %v4312
      %v4425 = vsub.f32 0.0, %v4313
      %v4426 = vsub.f32 0.0, %v4314
      %v4427 = vsub.f32 0.0, %v4315
      %v4428 = vsub.f32 0.0, %v4316
      %v4429 = vsub.f32 0.0, %v4317
      %v4430 = vsub.f32 0.0, %v4318
      %v4431 = vsub.f32 0.0, %v4319
      %v4432 = vmul.f32 %v4424, %v4312
      %v4433 = vmul.f32 %v4425, %v4313
      %v4434 = vmul.f32 %v4426, %v4314
      %v4435 = vmul.f32 %v4427, %v4315
      %v4436 = vmul.f32 %v4428, %v4316
      %v4437 = vmul.f32 %v4429, %v4317
      %v4438 = vmul.f32 %v4430, %v4318
      %v4439 = vmul.f32 %v4431, %v4319
      %v4440 = vmul.f32 %v4432, 1.442695
      %v4441 = vpow.pop %v4440
      %v4442 = vmul.f32 %v4433, 1.442695
      %v4443 = vpow.pop %v4442
      %v4444 = vmul.f32 %v4434, 1.442695
      %v4445 = vpow.pop %v4444
      %v4446 = vmul.f32 %v4435, 1.442695
      %v4447 = vpow.pop %v4446
      %v4448 = vmul.f32 %v4436, 1.442695
      %v4449 = vpow.pop %v4448
      %v4450 = vmul.f32 %v4437, 1.442695
      %v4451 = vpow.pop %v4450
      %v4452 = vmul.f32 %v4438, 1.442695
      %v4453 = vpow.pop %v4452
      %v4454 = vmul.f32 %v4439, 1.442695
      %v4455 = vpow.pop %v4454
      %v4456 = vmul.f32 %v4416, %v4441
      %v4457 = vmul.f32 %v4417, %v4443
      %v4458 = vmul.f32 %v4418, %v4445
      %v4459 = vmul.f32 %v4419, %v4447
      %v4460 = vmul.f32 %v4420, %v4449
      %v4461 = vmul.f32 %v4421, %v4451
      %v4462 = vmul.f32 %v4422, %v4453
      %v4463 = vmul.f32 %v4423, %v4455
      %v4464 = vsub.f32 1.0, %v4456
      %v4465 = vsub.f32 1.0, %v4457
      %v4466 = vsub.f32 1.0, %v4458
      %v4467 = vsub.f32 1.0, %v4459
      %v4468 = vsub.f32 1.0, %v4460
      %v4469 = vsub.f32 1.0, %v4461
      %v4470 = vsub.f32 1.0, %v4462
      %v4471 = vsub.f32 1.0, %v4463
      %vm4472 = vcmp.lt.f32.partialorder %v4304, 0.0
      %vm4473 = vcmp.lt.f32.partialorder %v4305, 0.0
      %vm4474 = vcmp.lt.f32.partialorder %v4306, 0.0
      %vm4475 = vcmp.lt.f32.partialorder %v4307, 0.0
      %vm4476 = vcmp.lt.f32.partialorder %v4308, 0.0
      %vm4477 = vcmp.lt.f32.partialorder %v4309, 0.0
      %vm4478 = vcmp.lt.f32.partialorder %v4310, 0.0
      %vm4479 = vcmp.lt.f32.partialorder %v4311, 0.0
      %v4480 = vsub.f32 0.0, %v4464
      %v4481 = vsub.f32 0.0, %v4465
      %v4482 = vsub.f32 0.0, %v4466
      %v4483 = vsub.f32 0.0, %v4467
      %v4484 = vsub.f32 0.0, %v4468
      %v4485 = vsub.f32 0.0, %v4469
      %v4486 = vsub.f32 0.0, %v4470
      %v4487 = vsub.f32 0.0, %v4471
      %v4488 = vsel %vm4472, %v4480, %v4464
      %v4489 = vsel %vm4473, %v4481, %v4465
      %v4490 = vsel %vm4474, %v4482, %v4466
      %v4491 = vsel %vm4475, %v4483, %v4467
      %v4492 = vsel %vm4476, %v4484, %v4468
      %v4493 = vsel %vm4477, %v4485, %v4469
      %v4494 = vsel %vm4478, %v4486, %v4470
      %v4495 = vsel %vm4479, %v4487, %v4471
      %v4496 = vadd.f32 %v4488, 1.0
      %v4497 = vadd.f32 %v4489, 1.0
      %v4498 = vadd.f32 %v4490, 1.0
      %v4499 = vadd.f32 %v4491, 1.0
      %v4500 = vadd.f32 %v4492, 1.0
      %v4501 = vadd.f32 %v4493, 1.0
      %v4502 = vadd.f32 %v4494, 1.0
      %v4503 = vadd.f32 %v4495, 1.0
      %v4504 = vmul.f32 %v4296, %v4496
      %v4505 = vmul.f32 %v4297, %v4497
      %v4506 = vmul.f32 %v4298, %v4498
      %v4507 = vmul.f32 %v4299, %v4499
      %v4508 = vmul.f32 %v4300, %v4500
      %v4509 = vmul.f32 %v4301, %v4501
      %v4510 = vmul.f32 %v4302, %v4502
      %v4511 = vmul.f32 %v4303, %v4503
      %v4512 = vld [vmem:[%s9] sm:$0xff]
      %v4513 = vld [vmem:[%s9 + $0x8] sm:$0xff]
      %v4514 = vld [vmem:[%s9 + $0x10] sm:$0xff]
      %v4515 = vld [vmem:[%s9 + $0x18] sm:$0xff]
      %v4516 = vld [vmem:[%s10] sm:$0x1]
      %v4518 = vlaneseq
      %v4519 = vshrl.u32 %v4518, 7
      %v4520 = vsub.s32 0, %v4519
      %v4521 = vrot.slane %v4516, %v4520
      %vm4523 = vcmask 261120
      %v4525 = vsel %vm4523, %v4504, 0
      %v4528 = vsel %vm4523, %v4505, 0
      %v4531 = vsel %vm4523, %v4506, 0
      %v4534 = vsel %vm4523, %v4507, 0
      %v4537 = vsel %vm4523, %v4508, 0
      %v4540 = vsel %vm4523, %v4509, 0
      %v4543 = vsel %vm4523, %v4510, 0
      %v4546 = vsel %vm4523, %v4511, 0
      %4548 = vmatprep.subr.mxu0 0.0
      %4549 = vmatpush1.msra.mxu0 0.0
      %4550 = vmatprep.subr.mxu0 0.0
      %4551 = vmatpush1.msra.mxu0 0.0
      %4552 = vmatprep.subr.mxu0 0.0
      %4553 = vmatpush1.msra.mxu0 0.0
      %4554 = vmatprep.subr.mxu0 0.0
      %4555 = vmatpush1.msra.mxu0 0.0
      %4556 = vmatprep.subr.mxu0 0.0
      %4557 = vmatpush1.msra.mxu0 0.0
      %4558 = vmatprep.subr.mxu0 0.0
      %4559 = vmatpush1.msra.mxu0 0.0
      %4560 = vmatprep.subr.mxu0 0.0
      %4561 = vmatpush1.msra.mxu0 0.0
      %4562 = vmatprep.subr.mxu0 0.0
      %4563 = vmatpush1.msra.mxu0 0.0
      %4564 = vmatprep.subr.mxu0 0.0
      %4565 = vmatpush1.msra.mxu0 0.0
      %4566 = vmatprep.subr.mxu0 0.0
      %4567 = vmatpush1.msra.mxu0 0.0
      %4568 = vmatprep.subr.mxu0 0.0
      %4569 = vmatpush1.msra.mxu0 0.0
      %4570 = vmatprep.subr.mxu0 0.0
      %4571 = vmatpush1.msra.mxu0 0.0
      %4572 = vmatprep.subr.mxu0 0.0
      %4573 = vmatpush1.msra.mxu0 %v4515
      %4574 = vmatprep.subr.mxu0 0.0
      %4575 = vmatpush1.msra.mxu0 %v4514
      %4576 = vmatprep.subr.mxu0 0.0
      %4577 = vmatpush1.msra.mxu0 %v4513
      %4578 = vmatprep.subr.mxu0 0.0
      %4579 = vmatpush1.msra.mxu0 %v4512
      %4580 = vmatprep.subr.mxu0 0.0
      %4581 = vmatpush2.msra.mxu0 0.0
      %4582 = vmatprep.subr.mxu0 0.0
      %4583 = vmatpush2.msra.mxu0 0.0
      %4584 = vmatprep.subr.mxu0 0.0
      %4585 = vmatpush2.msra.mxu0 0.0
      %4586 = vmatprep.subr.mxu0 0.0
      %4587 = vmatpush2.msra.mxu0 0.0
      %4588 = vmatprep.subr.mxu0 0.0
      %4589 = vmatpush2.msra.mxu0 0.0
      %4590 = vmatprep.subr.mxu0 0.0
      %4591 = vmatpush2.msra.mxu0 0.0
      %4592 = vmatprep.subr.mxu0 0.0
      %4593 = vmatpush2.msra.mxu0 0.0
      %4594 = vmatprep.subr.mxu0 0.0
      %4595 = vmatpush2.msra.mxu0 0.0
      %4596 = vmatprep.subr.mxu0 0.0
      %4597 = vmatpush2.msra.mxu0 0.0
      %4598 = vmatprep.subr.mxu0 0.0
      %4599 = vmatpush2.msra.mxu0 0.0
      %4600 = vmatprep.subr.mxu0 0.0
      %4601 = vmatpush2.msra.mxu0 0.0
      %4602 = vmatprep.subr.mxu0 0.0
      %4603 = vmatpush2.msra.mxu0 0.0
      %4604 = vmatprep.subr.mxu0 0.0
      %4605 = vmatpush2.msra.mxu0 0.0
      %4606 = vmatprep.subr.mxu0 0.0
      %4607 = vmatpush2.msra.mxu0 0.0
      %4608 = vmatprep.subr.mxu0 0.0
      %4609 = vmatpush2.msra.mxu0 0.0
      %4610 = vmatprep.subr.mxu0 0.0
      %4611 = vmatpush2.msra.mxu0 0.0
      %4612 = vmatprep.mubr.f32.mxu0 0.0
      %4613 = vmatmul.mubr.f32.gmra.mxu0 %v4525
      %v4614 = vpop.f32.mrf.mxu0
      %v4615 = vadd.f32 %v4521, %v4614
      %v4616 = vpop.f32.mrf.mxu0
      %4617 = vmatprep.mubr.f32.mxu0 0.0
      %4618 = vmatmul.mubr.f32.gmra.mxu0 %v4528
      %v4619 = vpop.f32.mrf.mxu0
      %v4620 = vadd.f32 %v4521, %v4619
      %v4621 = vpop.f32.mrf.mxu0
      %4622 = vmatprep.mubr.f32.mxu0 0.0
      %4623 = vmatmul.mubr.f32.gmra.mxu0 %v4531
      %v4624 = vpop.f32.mrf.mxu0
      %v4625 = vadd.f32 %v4521, %v4624
      %v4626 = vpop.f32.mrf.mxu0
      %4627 = vmatprep.mubr.f32.mxu0 0.0
      %4628 = vmatmul.mubr.f32.gmra.mxu0 %v4534
      %v4629 = vpop.f32.mrf.mxu0
      %v4630 = vadd.f32 %v4521, %v4629
      %v4631 = vpop.f32.mrf.mxu0
      %4632 = vmatprep.mubr.f32.mxu0 0.0
      %4633 = vmatmul.mubr.f32.gmra.mxu0 %v4537
      %v4634 = vpop.f32.mrf.mxu0
      %v4635 = vadd.f32 %v4521, %v4634
      %v4636 = vpop.f32.mrf.mxu0
      %4637 = vmatprep.mubr.f32.mxu0 0.0
      %4638 = vmatmul.mubr.f32.gmra.mxu0 %v4540
      %v4639 = vpop.f32.mrf.mxu0
      %v4640 = vadd.f32 %v4521, %v4639
      %v4641 = vpop.f32.mrf.mxu0
      %4642 = vmatprep.mubr.f32.mxu0 0.0
      %4643 = vmatmul.mubr.f32.gmra.mxu0 %v4543
      %v4644 = vpop.f32.mrf.mxu0
      %v4645 = vadd.f32 %v4521, %v4644
      %v4646 = vpop.f32.mrf.mxu0
      %4647 = vmatprep.mubr.f32.mxu0 0.0
      %4648 = vmatmul.mubr.f32.gmra.mxu0 %v4546
      %v4649 = vpop.f32.mrf.mxu0
      %v4650 = vadd.f32 %v4521, %v4649
      %v4651 = vpop.f32.mrf.mxu0
      %4652 = vdwg.mxu0
      %v4653 = vld [vmem:[%s11] sm:$0x1]
      %v4655 = vlaneseq
      %v4656 = vshrl.u32 %v4655, 7
      %v4657 = vsub.s32 0, %v4656
      %v4658 = vrot.slane %v4653, %v4657
      %v4660 = vmul.f32 %v4615, %v4658
      %v4661 = vmul.f32 %v4620, %v4658
      %v4662 = vmul.f32 %v4625, %v4658
      %v4663 = vmul.f32 %v4630, %v4658
      %v4664 = vmul.f32 %v4635, %v4658
      %v4665 = vmul.f32 %v4640, %v4658
      %v4666 = vmul.f32 %v4645, %v4658
      %v4667 = vmul.f32 %v4650, %v4658
      %v4668 = vadd.f32 %v4660, %v597
      %v4669 = vadd.f32 %v4661, %v598
      %v4670 = vadd.f32 %v4662, %v599
      %v4671 = vadd.f32 %v4663, %v600
      %v4672 = vadd.f32 %v4664, %v601
      %v4673 = vadd.f32 %v4665, %v602
      %v4674 = vadd.f32 %v4666, %v603
      %v4675 = vadd.f32 %v4667, %v604
      %4676 = vst.msk [vmem:[%s565] sm:$0xff] %vm567, %v4668
      %4677 = vst.msk [vmem:[%s565 + $0x8] sm:$0xff] %vm567, %v4669
      %4678 = vst.msk [vmem:[%s565 + $0x10] sm:$0xff] %vm567, %v4670
      %4679 = vst.msk [vmem:[%s565 + $0x18] sm:$0xff] %vm567, %v4671
      %4680 = vst.msk [vmem:[%s565 + $0x20] sm:$0xff] %vm567, %v4672
      %4681 = vst.msk [vmem:[%s565 + $0x28] sm:$0xff] %vm567, %v4673
      %4682 = vst.msk [vmem:[%s565 + $0x30] sm:$0xff] %vm567, %v4674
      %4683 = vst.msk [vmem:[%s565 + $0x38] sm:$0xff] %vm567, %v4675
      %s4684 = smul.u32 8, %s28
      %p4685 = scmp.lt.s32.totalorder %s27, 1
      %s4686 = scalar_select %p4685, %s27, 1
      %p4687 = scmp.lt.s32.totalorder %s4684, 7
      %s4688 = scalar_select %p4687, %s4684, 7
      %s4689 = smul.addr %s4686, 8
      %s4690 = sadd.s32 %s4688, %s4689
      %s4691 = smul.addr %s4690, 8
      %s4692 = scalar_lea.vmem %s12, %s4691
      // Predicated region
      $region77: #{convnext_stage_forward.4} parent=67 // pred_check
        %p4693 = pneg %p340
      $region78: #{convnext_stage_forward.4} parent=67 // pred_check_branch
        %4695 = sbr.rel (%p4693) target = $region80
      $region79: #{convnext_stage_forward.4} parent=67 // pred_region
        %s4696 = smul.u32 8, %s28
      $region80: #{convnext_stage_forward.4} parent=67 // pred_fallthru
        _
    $region68: #{convnext_stage_forward.4} parent=5 // pred_fallthru
      _
    %p4697 = scmp.le.s32.totalorder 2, %s18
    // Predicated region
    $region81: #{convnext_stage_forward.4} parent=5 // pred_check
      %p4698 = pneg %p4697
    $region82: #{convnext_stage_forward.4} parent=5 // pred_check_branch
      %4700 = sbr.rel (%p4698) target = $region84
    $region83: #{convnext_stage_forward.4} parent=5 // pred_region
      %s4701 = ssub.s32 %s18, 2
      // Predicated region
      $region85: #{convnext_stage_forward.4} parent=83 // pred_check
        %p4702 = pneg %p346
      $region86: #{convnext_stage_forward.4} parent=83 // pred_check_branch
        %4704 = sbr.rel (%p4702) target = $region88
      $region87: #{convnext_stage_forward.4} parent=83 // pred_region
        %s4705 = smul.u32 8, %s30
        %p4706 = scmp.lt.s32.totalorder %s29, 1
        %s4707 = scalar_select %p4706, %s29, 1
        %p4708 = scmp.lt.s32.totalorder %s4705, 7
        %s4709 = scalar_select %p4708, %s4705, 7
        %s4710 = smul.addr %s4707, 8
        %s4711 = sadd.s32 %s4709, %s4710
        %s4712 = smul.addr %s4711, 8
        %s4713 = scalar_lea.vmem %s12, %s4712
      $region88: #{convnext_stage_forward.4} parent=83 // pred_fallthru
        _
    $region84: #{convnext_stage_forward.4} parent=5 // pred_fallthru
      _
  $region6: #{convnext_stage_forward.4} parent=0 // loop_footer
    %s22 = sadd.s32 1, %s18
  $region7: #{convnext_stage_forward.4} parent=0 // loop_footer_branch
    %17 = sbr.rel target = $region3
  $region8: #{convnext_stage_forward.4} parent=0 // loop_exit
    _

</llo_original>
